<compile_context>
chip_gen: v5e
topology: v5e:2x2
jax: 0.10.0
libtpu: 0.0.40
codegen_flags: <defaults>
</compile_context>

<pallas_src>
import jax
import jax.numpy as jnp
from jax import lax
from jax.experimental import pallas as pl
from jax.experimental.pallas import tpu as pltpu

# ----------------------------- problem sizes ------------------------------
B = 2          # batch
T_ART = 10     # article length
T_SUM = 8      # summary length == output_len
E = 16         # embedding dim
H = 32         # decoder_hidden_dim == encoder hidden dim
V_IN = 50      # token vocab (embedding tables, glue only)
V = 32         # target_size = decoder_f.output_dim
PAD_IDX = 0

F32 = jnp.float32


def _vmem_specs(n):
  return [pl.BlockSpec(memory_space=pltpu.MemorySpace.VMEM) for _ in range(n)]


# ------------------------------ fused kernel -------------------------------
def fused_bilstm_kernel(gx_enc_ref, whh_enc_ref, gx_dec_ref, wch_ref,
                        wtag_ref, btag_ref, wbin_ref, bbin_ref,
                        out_ref, bin_ref):
  """Article encoder + bidirectional attention decoders + output heads."""
  T_a = gx_enc_ref.shape[0]
  L = gx_dec_ref.shape[0]
  Bk = gx_enc_ref.shape[1]
  Hd = whh_enc_ref.shape[0]

  def lstm_update(gates, c_prev):
    # full-width sigmoid/tanh once (EUP, whole vreg), then lane-slice gates.
    sg = jax.nn.sigmoid(gates)
    tg = jnp.tanh(gates)
    i = sg[:, 0:Hd]
    f = sg[:, Hd:2 * Hd]
    o = sg[:, 3 * Hd:4 * Hd]
    g = tg[:, 2 * Hd:3 * Hd]
    c_new = f * c_prev + i * g
    h_new = o * jnp.tanh(c_new)
    return h_new, c_new

  # ---------------- encoder_article (fully unrolled) ------------------------
  # gx_enc[t] = x_t @ W_ih + b was precomputed for the whole sequence outside;
  # only h @ W_hh remains in the serial recurrence.
  whh = whh_enc_ref[...]                                      # hoisted
  h = jnp.zeros((Bk, Hd), F32)
  c = jnp.zeros((Bk, Hd), F32)
  enc_steps = []
  for t in range(T_a):
    gates = gx_enc_ref[t]
    if t > 0:                                                 # h == 0 at t == 0
      gates = gates + jnp.dot(h, whh, preferred_element_type=F32)
    h, c = lstm_update(gates, c)
    enc_steps.append(h)
  enc = jnp.stack(enc_steps, axis=0)                          # (T_a, B, H)
  # encoder outputs tiled ONCE for the (fwd | bwd) virtual batch used below
  enc2 = jnp.concatenate([enc, enc], axis=1)                  # (T_a, 2B, H)

  # ---------------- bidirectional attention decoders ------------------------
  # virtual batch: rows [0, B) = forward decoder, rows [B, 2B) = backward
  # decoder; both start from the encoder's final (hidden, cell).
  wch = wch_ref[...]                                          # (4H, 4H) = [Wf ; Wb]
  fwd_rows = lax.broadcasted_iota(jnp.int32, (2 * Bk, 1), 0) < Bk

  vh = jnp.concatenate([h, h], axis=0)                        # (2B, H)
  vc = jnp.concatenate([c, c], axis=0)

  hf_by_idx = [None] * L
  hb_by_idx = [None] * L
  for t in range(L):
    # one batched attention pass serves both directions.
    scores = jnp.sum(enc2 * vh[None, :, :], axis=-1, keepdims=True)  # (T_a,2B,1)
    m = jnp.max(scores, axis=0, keepdims=True)
    e = jnp.exp(scores - m)
    att = e / jnp.sum(e, axis=0, keepdims=True)
    ctx = jnp.sum(enc2 * att, axis=0)                                # (2B, H)

    # single block-diagonal recurrent matmul for both directions:
    #   [xin_fwd | 0] rows use Wf, [0 | xin_bwd] rows use Wb.
    xin = jnp.concatenate([ctx, vh], axis=1)                         # (2B, 2H)
    xin_f = jnp.where(fwd_rows, xin, 0.0)
    xin_b = xin - xin_f
    rec = jnp.dot(jnp.concatenate([xin_f, xin_b], axis=1), wch,
                  preferred_element_type=F32)                        # (2B, 4H)
    gates = gx_dec_ref[t] + rec
    vh, vc = lstm_update(gates, vc)

    hf_by_idx[t] = vh[0:Bk]                 # output_forward[t]
    hb_by_idx[L - 1 - t] = vh[Bk:2 * Bk]    # output_backward[L - 1 - t]

  # ---------------- hidden2tag / hidden2binary epilogue ---------------------
  hf_all = jnp.concatenate(hf_by_idx, axis=0)                 # (L*B, H)
  hb_all = jnp.concatenate(hb_by_idx, axis=0)                 # (L*B, H)
  combined = jnp.concatenate([hf_all, hb_all], axis=1)        # (L*B, 2H)
  out_ref[...] = (jnp.dot(combined, wtag_ref[...], preferred_element_type=F32)
                  + btag_ref[...])                            # (L*B, V)

  # mean over time of the linear binary head == binary head of the time-mean.
  inv_len = 1.0 / float(L)
  mean_comb = jnp.concatenate([sum(hf_by_idx), sum(hb_by_idx)],
                              axis=1) * inv_len               # (B, 2H)
  bin_ref[...] = (jnp.sum(mean_comb * wbin_ref[...], axis=-1, keepdims=True)
                  + bbin_ref[...])


# --------------------------------- forward ----------------------------------
@jax.jit
def verification_bilstm_forward(params, article, article_lengths,
                                summary, summary_lengths):
  del article_lengths, summary_lengths   # TODO(synk): length masking not modeled
  p = params

  # ---- glue: embedding gathers + whole-sequence input-side gate matmuls ----
  art_emb = p["emb_art"][article]                                        # (T_a,B,E)
  gx_enc = jnp.einsum("tbe,eg->tbg", art_emb, p["w_ih_enc"]) + p["b_enc"]

  # decoder token streams exactly as in the reference loop:
  # forward sees summary[max(t-1, 0)], backward sees summary[min(L-1, L-t)].
  tok_f = jnp.concatenate([summary[:1], summary[:-1]], axis=0)
  rev = summary[::-1]
  tok_b = jnp.concatenate([rev[:1], rev[:-1]], axis=0)
  gx_f = jnp.einsum("tbe,eg->tbg", p["emb_dec_f"][tok_f], p["w_e_f"]) + p["b_f"]
  gx_b = jnp.einsum("tbe,eg->tbg", p["emb_dec_b"][tok_b], p["w_e_b"]) + p["b_b"]
  gx_dec = jnp.concatenate([gx_f, gx_b], axis=1)                         # (L,2B,4H)

  # stacked per-direction recurrent weights for the block-diagonal matmul
  w_ch_stack = jnp.concatenate([p["w_ch_f"], p["w_ch_b"]], axis=0)       # (4H,4H)

  outputs_flat, output_binary = pl.pallas_call(
      fused_bilstm_kernel,
      out_shape=(jax.ShapeDtypeStruct((T_SUM * B, V), F32),
                 jax.ShapeDtypeStruct((B, 1), F32)),
      in_specs=_vmem_specs(8),
      out_specs=tuple(_vmem_specs(2)),
  )(gx_enc, p["w_hh_enc"], gx_dec, w_ch_stack,
    p["w_tag"], p["b_tag"], p["w_bin"], p["b_bin"])

  return outputs_flat.reshape(T_SUM, B, V), output_binary


# ------------------------------ pure-JAX ref --------------------------------
def _lstm_update_ref(gates, c):
  i = jax.nn.sigmoid(gates[:, :H])
  f = jax.nn.sigmoid(gates[:, H:2 * H])
  g = jnp.tanh(gates[:, 2 * H:3 * H])
  o = jax.nn.sigmoid(gates[:, 3 * H:])
  c_new = f * c + i * g
  return o * jnp.tanh(c_new), c_new


def _forward_ref(p, article, summary):
  art_emb = p["emb_art"][article]
  h = jnp.zeros((B, H), F32)
  c = jnp.zeros((B, H), F32)
  enc = []
  for t in range(T_ART):
    gates = art_emb[t] @ p["w_ih_enc"] + h @ p["w_hh_enc"] + p["b_enc"]
    h, c = _lstm_update_ref(gates, c)
    enc.append(h)
  enc = jnp.stack(enc, axis=0)                                  # (T_a, B, H)

  def dec_step(tok, h, c, emb_tbl, w_e, w_ch, b):
    emb = emb_tbl[tok]                                          # (B, E)
    scores = jnp.sum(enc * h[None], axis=-1)                    # (T_a, B)
    w = jax.nn.softmax(scores, axis=0)
    ctx = jnp.sum(enc * w[:, :, None], axis=0)                  # (B, H)
    gates = emb @ w_e + jnp.concatenate([ctx, h], axis=1) @ w_ch + b
    h, c = _lstm_update_ref(gates, c)
    return h, h, c

  h_f, c_f, h_b, c_b = h, c, h, c
  out_f = [None] * T_SUM
  out_b = [None] * T_SUM
  tok_f = summary[0]
  tok_b = summary[-1]
  for idx_f in range(T_SUM):
    idx_b = T_SUM - 1 - idx_f
    o_f, h_f, c_f = dec_step(tok_f, h_f, c_f,
                             p["emb_dec_f"], p["w_e_f"], p["w_ch_f"], p["b_f"])
    o_b, h_b, c_b = dec_step(tok_b, h_b, c_b,
                             p["emb_dec_b"], p["w_e_b"], p["w_ch_b"], p["b_b"])
    out_f[idx_f] = o_f
    out_b[idx_b] = o_b
    tok_f = summary[idx_f]
    tok_b = summary[idx_b]

  combined = jnp.concatenate([jnp.stack(out_f, 0), jnp.stack(out_b, 0)], axis=2)
  outputs = jnp.einsum("lbh,hv->lbv", combined, p["w_tag"]) + p["b_tag"]
  outs_bin = jnp.einsum("lbh,h->lb", combined, p["w_bin"][0])[..., None] + p["b_bin"]
  return outputs, jnp.mean(outs_bin, axis=0)


# ----------------------------- parameter init -------------------------------
def init_params(key):
  def nrm(k, shape, scale=0.1):
    return scale * jax.random.normal(k, shape, dtype=F32)

  ks = jax.random.split(key, 16)
  return {
      # embedding tables (glue)
      "emb_art": nrm(ks[0], (V_IN, E)),
      "emb_dec_f": nrm(ks[1], (V_IN, E)),
      "emb_dec_b": nrm(ks[2], (V_IN, E)),
      # encoder_article LSTM
      "w_ih_enc": nrm(ks[3], (E, 4 * H)),
      "w_hh_enc": nrm(ks[4], (H, 4 * H)),
      "b_enc": nrm(ks[5], (1, 4 * H)),
      # forward attention decoder LSTM (input = [emb, ctx])
      "w_e_f": nrm(ks[6], (E, 4 * H)),
      "w_ch_f": nrm(ks[7], (2 * H, 4 * H)),     # [W_ctx ; W_hh] stacked
      "b_f": nrm(ks[8], (1, 4 * H)),
      # backward attention decoder LSTM
      "w_e_b": nrm(ks[9], (E, 4 * H)),
      "w_ch_b": nrm(ks[10], (2 * H, 4 * H)),
      "b_b": nrm(ks[11], (1, 4 * H)),
      # hidden2tag: Linear(2H -> V), stored transposed
      "w_tag": nrm(ks[12], (2 * H, V)),
      "b_tag": nrm(ks[13], (1, V)),
      # hidden2binary: Linear(2H -> 1), stored as a (1, 2H) row
      "w_bin": nrm(ks[14], (1, 2 * H)),
      "b_bin": nrm(ks[15], (1, 1)),
  }


# ----------------------------------- main ------------------------------------
if __name__ == "__main__":
  key = jax.random.PRNGKey(0)
  k_par, k_art, k_sum = jax.random.split(key, 3)
  params = init_params(k_par)

  article = jax.random.randint(k_art, (T_ART, B), 0, V_IN, dtype=jnp.int32)
  summary = jax.random.randint(k_sum, (T_SUM, B), 0, V_IN, dtype=jnp.int32)
  article_lengths = jnp.full((B,), T_ART, dtype=jnp.int32)
  summary_lengths = jnp.full((B,), T_SUM, dtype=jnp.int32)

  outputs, output_binary = verification_bilstm_forward(
      params, article, article_lengths, summary, summary_lengths)
  jax.block_until_ready((outputs, output_binary))

  assert outputs.shape == (T_SUM, B, V), outputs.shape
  assert output_binary.shape == (B, 1), output_binary.shape

  # pure-JAX reference check (mirrors the PyTorch loop literally)
  ref_out, ref_bin = _forward_ref(params, article, summary)
  assert jnp.allclose(outputs, ref_out, atol=2e-3, rtol=2e-3), \
      float(jnp.max(jnp.abs(outputs - ref_out)))
  assert jnp.allclose(output_binary, ref_bin, atol=2e-3, rtol=2e-3), \
      float(jnp.max(jnp.abs(output_binary - ref_bin)))

  print("KERNEL_OK")
</pallas_src>

<mosaic_0001>
module attributes {stable_mosaic.version = 11 : i64} {
  func.func @fused_bilstm_kernel(%arg0: memref<10x2x128xf32, #tpu.memory_space<vmem>>, %arg1: memref<32x128xf32, #tpu.memory_space<vmem>>, %arg2: memref<8x4x128xf32, #tpu.memory_space<vmem>>, %arg3: memref<128x128xf32, #tpu.memory_space<vmem>>, %arg4: memref<64x32xf32, #tpu.memory_space<vmem>>, %arg5: memref<1x32xf32, #tpu.memory_space<vmem>>, %arg6: memref<1x64xf32, #tpu.memory_space<vmem>>, %arg7: memref<1x1xf32, #tpu.memory_space<vmem>>, %arg8: memref<16x32xf32, #tpu.memory_space<vmem>>, %arg9: memref<2x1xf32, #tpu.memory_space<vmem>>) attributes {dimension_semantics = [], scalar_prefetch = 0 : i64, scratch_operands = 0 : i64, tpu.core_type = #tpu.core_type<tc>} {
    %c0 = arith.constant 0 : index
    %c0_0 = arith.constant 0 : index
    %0 = vector.load %arg1[%c0, %c0_0] : memref<32x128xf32, #tpu.memory_space<vmem>>, vector<32x128xf32>
    %cst = arith.constant 0.000000e+00 : f32
    %1 = vector.broadcast %cst : f32 to vector<2x32xf32>
    %c0_1 = arith.constant 0 : index
    %c0_2 = arith.constant 0 : index
    %c0_3 = arith.constant 0 : index
    %2 = vector.load %arg0[%c0_1, %c0_2, %c0_3] : memref<10x2x128xf32, #tpu.memory_space<vmem>>, vector<1x2x128xf32>
    %3 = vector.shape_cast %2 : vector<1x2x128xf32> to vector<2x128xf32>
    %4 = arith.negf %3 : vector<2x128xf32>
    %5 = math.exp %4 : vector<2x128xf32>
    %cst_4 = arith.constant 1.000000e+00 : f32
    %6 = vector.broadcast %cst_4 : f32 to vector<2x128xf32>
    %7 = arith.addf %6, %5 : vector<2x128xf32>
    %8 = arith.divf %6, %7 : vector<2x128xf32>
    %9 = math.tanh %3 : vector<2x128xf32>
    %10 = vector.extract_strided_slice %8 {offsets = [0, 0], sizes = [2, 32], strides = [1, 1]} : vector<2x128xf32> to vector<2x32xf32>
    %11 = vector.extract_strided_slice %8 {offsets = [0, 32], sizes = [2, 32], strides = [1, 1]} : vector<2x128xf32> to vector<2x32xf32>
    %12 = vector.extract_strided_slice %8 {offsets = [0, 96], sizes = [2, 32], strides = [1, 1]} : vector<2x128xf32> to vector<2x32xf32>
    %13 = vector.extract_strided_slice %9 {offsets = [0, 64], sizes = [2, 32], strides = [1, 1]} : vector<2x128xf32> to vector<2x32xf32>
    %14 = arith.mulf %11, %1 : vector<2x32xf32>
    %15 = arith.mulf %10, %13 : vector<2x32xf32>
    %16 = arith.addf %14, %15 : vector<2x32xf32>
    %17 = math.tanh %16 : vector<2x32xf32>
    %18 = arith.mulf %12, %17 : vector<2x32xf32>
    %c1 = arith.constant 1 : index
    %c0_5 = arith.constant 0 : index
    %c0_6 = arith.constant 0 : index
    %19 = vector.load %arg0[%c1, %c0_5, %c0_6] : memref<10x2x128xf32, #tpu.memory_space<vmem>>, vector<1x2x128xf32>
    %20 = vector.shape_cast %19 : vector<1x2x128xf32> to vector<2x128xf32>
    %cst_7 = arith.constant dense<0.000000e+00> : vector<2x128xf32>
    %21 = tpu.matmul %18, %0, %cst_7 {dimension_numbers = #tpu.dot_dimension_numbers<[1], [0], [0], [1], [0, 0, 1, 1], [], []>} : vector<2x32xf32>, vector<32x128xf32>, vector<2x128xf32> -> vector<2x128xf32>
    %22 = arith.addf %20, %21 : vector<2x128xf32>
    %23 = arith.negf %22 : vector<2x128xf32>
    %24 = math.exp %23 : vector<2x128xf32>
    %cst_8 = arith.constant 1.000000e+00 : f32
    %25 = vector.broadcast %cst_8 : f32 to vector<2x128xf32>
    %26 = arith.addf %25, %24 : vector<2x128xf32>
    %27 = arith.divf %25, %26 : vector<2x128xf32>
    %28 = math.tanh %22 : vector<2x128xf32>
    %29 = vector.extract_strided_slice %27 {offsets = [0, 0], sizes = [2, 32], strides = [1, 1]} : vector<2x128xf32> to vector<2x32xf32>
    %30 = vector.extract_strided_slice %27 {offsets = [0, 32], sizes = [2, 32], strides = [1, 1]} : vector<2x128xf32> to vector<2x32xf32>
    %31 = vector.extract_strided_slice %27 {offsets = [0, 96], sizes = [2, 32], strides = [1, 1]} : vector<2x128xf32> to vector<2x32xf32>
    %32 = vector.extract_strided_slice %28 {offsets = [0, 64], sizes = [2, 32], strides = [1, 1]} : vector<2x128xf32> to vector<2x32xf32>
    %33 = arith.mulf %30, %16 : vector<2x32xf32>
    %34 = arith.mulf %29, %32 : vector<2x32xf32>
    %35 = arith.addf %33, %34 : vector<2x32xf32>
    %36 = math.tanh %35 : vector<2x32xf32>
    %37 = arith.mulf %31, %36 : vector<2x32xf32>
    %c2 = arith.constant 2 : index
    %c0_9 = arith.constant 0 : index
    %c0_10 = arith.constant 0 : index
    %38 = vector.load %arg0[%c2, %c0_9, %c0_10] : memref<10x2x128xf32, #tpu.memory_space<vmem>>, vector<1x2x128xf32>
    %39 = vector.shape_cast %38 : vector<1x2x128xf32> to vector<2x128xf32>
    %cst_11 = arith.constant dense<0.000000e+00> : vector<2x128xf32>
    %40 = tpu.matmul %37, %0, %cst_11 {dimension_numbers = #tpu.dot_dimension_numbers<[1], [0], [0], [1], [0, 0, 1, 1], [], []>} : vector<2x32xf32>, vector<32x128xf32>, vector<2x128xf32> -> vector<2x128xf32>
    %41 = arith.addf %39, %40 : vector<2x128xf32>
    %42 = arith.negf %41 : vector<2x128xf32>
    %43 = math.exp %42 : vector<2x128xf32>
    %cst_12 = arith.constant 1.000000e+00 : f32
    %44 = vector.broadcast %cst_12 : f32 to vector<2x128xf32>
    %45 = arith.addf %44, %43 : vector<2x128xf32>
    %46 = arith.divf %44, %45 : vector<2x128xf32>
    %47 = math.tanh %41 : vector<2x128xf32>
    %48 = vector.extract_strided_slice %46 {offsets = [0, 0], sizes = [2, 32], strides = [1, 1]} : vector<2x128xf32> to vector<2x32xf32>
    %49 = vector.extract_strided_slice %46 {offsets = [0, 32], sizes = [2, 32], strides = [1, 1]} : vector<2x128xf32> to vector<2x32xf32>
    %50 = vector.extract_strided_slice %46 {offsets = [0, 96], sizes = [2, 32], strides = [1, 1]} : vector<2x128xf32> to vector<2x32xf32>
    %51 = vector.extract_strided_slice %47 {offsets = [0, 64], sizes = [2, 32], strides = [1, 1]} : vector<2x128xf32> to vector<2x32xf32>
    %52 = arith.mulf %49, %35 : vector<2x32xf32>
    %53 = arith.mulf %48, %51 : vector<2x32xf32>
    %54 = arith.addf %52, %53 : vector<2x32xf32>
    %55 = math.tanh %54 : vector<2x32xf32>
    %56 = arith.mulf %50, %55 : vector<2x32xf32>
    %c3 = arith.constant 3 : index
    %c0_13 = arith.constant 0 : index
    %c0_14 = arith.constant 0 : index
    %57 = vector.load %arg0[%c3, %c0_13, %c0_14] : memref<10x2x128xf32, #tpu.memory_space<vmem>>, vector<1x2x128xf32>
    %58 = vector.shape_cast %57 : vector<1x2x128xf32> to vector<2x128xf32>
    %cst_15 = arith.constant dense<0.000000e+00> : vector<2x128xf32>
    %59 = tpu.matmul %56, %0, %cst_15 {dimension_numbers = #tpu.dot_dimension_numbers<[1], [0], [0], [1], [0, 0, 1, 1], [], []>} : vector<2x32xf32>, vector<32x128xf32>, vector<2x128xf32> -> vector<2x128xf32>
    %60 = arith.addf %58, %59 : vector<2x128xf32>
    %61 = arith.negf %60 : vector<2x128xf32>
    %62 = math.exp %61 : vector<2x128xf32>
    %cst_16 = arith.constant 1.000000e+00 : f32
    %63 = vector.broadcast %cst_16 : f32 to vector<2x128xf32>
    %64 = arith.addf %63, %62 : vector<2x128xf32>
    %65 = arith.divf %63, %64 : vector<2x128xf32>
    %66 = math.tanh %60 : vector<2x128xf32>
    %67 = vector.extract_strided_slice %65 {offsets = [0, 0], sizes = [2, 32], strides = [1, 1]} : vector<2x128xf32> to vector<2x32xf32>
    %68 = vector.extract_strided_slice %65 {offsets = [0, 32], sizes = [2, 32], strides = [1, 1]} : vector<2x128xf32> to vector<2x32xf32>
    %69 = vector.extract_strided_slice %65 {offsets = [0, 96], sizes = [2, 32], strides = [1, 1]} : vector<2x128xf32> to vector<2x32xf32>
    %70 = vector.extract_strided_slice %66 {offsets = [0, 64], sizes = [2, 32], strides = [1, 1]} : vector<2x128xf32> to vector<2x32xf32>
    %71 = arith.mulf %68, %54 : vector<2x32xf32>
    %72 = arith.mulf %67, %70 : vector<2x32xf32>
    %73 = arith.addf %71, %72 : vector<2x32xf32>
    %74 = math.tanh %73 : vector<2x32xf32>
    %75 = arith.mulf %69, %74 : vector<2x32xf32>
    %c4 = arith.constant 4 : index
    %c0_17 = arith.constant 0 : index
    %c0_18 = arith.constant 0 : index
    %76 = vector.load %arg0[%c4, %c0_17, %c0_18] : memref<10x2x128xf32, #tpu.memory_space<vmem>>, vector<1x2x128xf32>
    %77 = vector.shape_cast %76 : vector<1x2x128xf32> to vector<2x128xf32>
    %cst_19 = arith.constant dense<0.000000e+00> : vector<2x128xf32>
    %78 = tpu.matmul %75, %0, %cst_19 {dimension_numbers = #tpu.dot_dimension_numbers<[1], [0], [0], [1], [0, 0, 1, 1], [], []>} : vector<2x32xf32>, vector<32x128xf32>, vector<2x128xf32> -> vector<2x128xf32>
    %79 = arith.addf %77, %78 : vector<2x128xf32>
    %80 = arith.negf %79 : vector<2x128xf32>
    %81 = math.exp %80 : vector<2x128xf32>
    %cst_20 = arith.constant 1.000000e+00 : f32
    %82 = vector.broadcast %cst_20 : f32 to vector<2x128xf32>
    %83 = arith.addf %82, %81 : vector<2x128xf32>
    %84 = arith.divf %82, %83 : vector<2x128xf32>
    %85 = math.tanh %79 : vector<2x128xf32>
    %86 = vector.extract_strided_slice %84 {offsets = [0, 0], sizes = [2, 32], strides = [1, 1]} : vector<2x128xf32> to vector<2x32xf32>
    %87 = vector.extract_strided_slice %84 {offsets = [0, 32], sizes = [2, 32], strides = [1, 1]} : vector<2x128xf32> to vector<2x32xf32>
    %88 = vector.extract_strided_slice %84 {offsets = [0, 96], sizes = [2, 32], strides = [1, 1]} : vector<2x128xf32> to vector<2x32xf32>
    %89 = vector.extract_strided_slice %85 {offsets = [0, 64], sizes = [2, 32], strides = [1, 1]} : vector<2x128xf32> to vector<2x32xf32>
    %90 = arith.mulf %87, %73 : vector<2x32xf32>
    %91 = arith.mulf %86, %89 : vector<2x32xf32>
    %92 = arith.addf %90, %91 : vector<2x32xf32>
    %93 = math.tanh %92 : vector<2x32xf32>
    %94 = arith.mulf %88, %93 : vector<2x32xf32>
    %c5 = arith.constant 5 : index
    %c0_21 = arith.constant 0 : index
    %c0_22 = arith.constant 0 : index
    %95 = vector.load %arg0[%c5, %c0_21, %c0_22] : memref<10x2x128xf32, #tpu.memory_space<vmem>>, vector<1x2x128xf32>
    %96 = vector.shape_cast %95 : vector<1x2x128xf32> to vector<2x128xf32>
    %cst_23 = arith.constant dense<0.000000e+00> : vector<2x128xf32>
    %97 = tpu.matmul %94, %0, %cst_23 {dimension_numbers = #tpu.dot_dimension_numbers<[1], [0], [0], [1], [0, 0, 1, 1], [], []>} : vector<2x32xf32>, vector<32x128xf32>, vector<2x128xf32> -> vector<2x128xf32>
    %98 = arith.addf %96, %97 : vector<2x128xf32>
    %99 = arith.negf %98 : vector<2x128xf32>
    %100 = math.exp %99 : vector<2x128xf32>
    %cst_24 = arith.constant 1.000000e+00 : f32
    %101 = vector.broadcast %cst_24 : f32 to vector<2x128xf32>
    %102 = arith.addf %101, %100 : vector<2x128xf32>
    %103 = arith.divf %101, %102 : vector<2x128xf32>
    %104 = math.tanh %98 : vector<2x128xf32>
    %105 = vector.extract_strided_slice %103 {offsets = [0, 0], sizes = [2, 32], strides = [1, 1]} : vector<2x128xf32> to vector<2x32xf32>
    %106 = vector.extract_strided_slice %103 {offsets = [0, 32], sizes = [2, 32], strides = [1, 1]} : vector<2x128xf32> to vector<2x32xf32>
    %107 = vector.extract_strided_slice %103 {offsets = [0, 96], sizes = [2, 32], strides = [1, 1]} : vector<2x128xf32> to vector<2x32xf32>
    %108 = vector.extract_strided_slice %104 {offsets = [0, 64], sizes = [2, 32], strides = [1, 1]} : vector<2x128xf32> to vector<2x32xf32>
    %109 = arith.mulf %106, %92 : vector<2x32xf32>
    %110 = arith.mulf %105, %108 : vector<2x32xf32>
    %111 = arith.addf %109, %110 : vector<2x32xf32>
    %112 = math.tanh %111 : vector<2x32xf32>
    %113 = arith.mulf %107, %112 : vector<2x32xf32>
    %c6 = arith.constant 6 : index
    %c0_25 = arith.constant 0 : index
    %c0_26 = arith.constant 0 : index
    %114 = vector.load %arg0[%c6, %c0_25, %c0_26] : memref<10x2x128xf32, #tpu.memory_space<vmem>>, vector<1x2x128xf32>
    %115 = vector.shape_cast %114 : vector<1x2x128xf32> to vector<2x128xf32>
    %cst_27 = arith.constant dense<0.000000e+00> : vector<2x128xf32>
    %116 = tpu.matmul %113, %0, %cst_27 {dimension_numbers = #tpu.dot_dimension_numbers<[1], [0], [0], [1], [0, 0, 1, 1], [], []>} : vector<2x32xf32>, vector<32x128xf32>, vector<2x128xf32> -> vector<2x128xf32>
    %117 = arith.addf %115, %116 : vector<2x128xf32>
    %118 = arith.negf %117 : vector<2x128xf32>
    %119 = math.exp %118 : vector<2x128xf32>
    %cst_28 = arith.constant 1.000000e+00 : f32
    %120 = vector.broadcast %cst_28 : f32 to vector<2x128xf32>
    %121 = arith.addf %120, %119 : vector<2x128xf32>
    %122 = arith.divf %120, %121 : vector<2x128xf32>
    %123 = math.tanh %117 : vector<2x128xf32>
    %124 = vector.extract_strided_slice %122 {offsets = [0, 0], sizes = [2, 32], strides = [1, 1]} : vector<2x128xf32> to vector<2x32xf32>
    %125 = vector.extract_strided_slice %122 {offsets = [0, 32], sizes = [2, 32], strides = [1, 1]} : vector<2x128xf32> to vector<2x32xf32>
    %126 = vector.extract_strided_slice %122 {offsets = [0, 96], sizes = [2, 32], strides = [1, 1]} : vector<2x128xf32> to vector<2x32xf32>
    %127 = vector.extract_strided_slice %123 {offsets = [0, 64], sizes = [2, 32], strides = [1, 1]} : vector<2x128xf32> to vector<2x32xf32>
    %128 = arith.mulf %125, %111 : vector<2x32xf32>
    %129 = arith.mulf %124, %127 : vector<2x32xf32>
    %130 = arith.addf %128, %129 : vector<2x32xf32>
    %131 = math.tanh %130 : vector<2x32xf32>
    %132 = arith.mulf %126, %131 : vector<2x32xf32>
    %c7 = arith.constant 7 : index
    %c0_29 = arith.constant 0 : index
    %c0_30 = arith.constant 0 : index
    %133 = vector.load %arg0[%c7, %c0_29, %c0_30] : memref<10x2x128xf32, #tpu.memory_space<vmem>>, vector<1x2x128xf32>
    %134 = vector.shape_cast %133 : vector<1x2x128xf32> to vector<2x128xf32>
    %cst_31 = arith.constant dense<0.000000e+00> : vector<2x128xf32>
    %135 = tpu.matmul %132, %0, %cst_31 {dimension_numbers = #tpu.dot_dimension_numbers<[1], [0], [0], [1], [0, 0, 1, 1], [], []>} : vector<2x32xf32>, vector<32x128xf32>, vector<2x128xf32> -> vector<2x128xf32>
    %136 = arith.addf %134, %135 : vector<2x128xf32>
    %137 = arith.negf %136 : vector<2x128xf32>
    %138 = math.exp %137 : vector<2x128xf32>
    %cst_32 = arith.constant 1.000000e+00 : f32
    %139 = vector.broadcast %cst_32 : f32 to vector<2x128xf32>
    %140 = arith.addf %139, %138 : vector<2x128xf32>
    %141 = arith.divf %139, %140 : vector<2x128xf32>
    %142 = math.tanh %136 : vector<2x128xf32>
    %143 = vector.extract_strided_slice %141 {offsets = [0, 0], sizes = [2, 32], strides = [1, 1]} : vector<2x128xf32> to vector<2x32xf32>
    %144 = vector.extract_strided_slice %141 {offsets = [0, 32], sizes = [2, 32], strides = [1, 1]} : vector<2x128xf32> to vector<2x32xf32>
    %145 = vector.extract_strided_slice %141 {offsets = [0, 96], sizes = [2, 32], strides = [1, 1]} : vector<2x128xf32> to vector<2x32xf32>
    %146 = vector.extract_strided_slice %142 {offsets = [0, 64], sizes = [2, 32], strides = [1, 1]} : vector<2x128xf32> to vector<2x32xf32>
    %147 = arith.mulf %144, %130 : vector<2x32xf32>
    %148 = arith.mulf %143, %146 : vector<2x32xf32>
    %149 = arith.addf %147, %148 : vector<2x32xf32>
    %150 = math.tanh %149 : vector<2x32xf32>
    %151 = arith.mulf %145, %150 : vector<2x32xf32>
    %c8 = arith.constant 8 : index
    %c0_33 = arith.constant 0 : index
    %c0_34 = arith.constant 0 : index
    %152 = vector.load %arg0[%c8, %c0_33, %c0_34] : memref<10x2x128xf32, #tpu.memory_space<vmem>>, vector<1x2x128xf32>
    %153 = vector.shape_cast %152 : vector<1x2x128xf32> to vector<2x128xf32>
    %cst_35 = arith.constant dense<0.000000e+00> : vector<2x128xf32>
    %154 = tpu.matmul %151, %0, %cst_35 {dimension_numbers = #tpu.dot_dimension_numbers<[1], [0], [0], [1], [0, 0, 1, 1], [], []>} : vector<2x32xf32>, vector<32x128xf32>, vector<2x128xf32> -> vector<2x128xf32>
    %155 = arith.addf %153, %154 : vector<2x128xf32>
    %156 = arith.negf %155 : vector<2x128xf32>
    %157 = math.exp %156 : vector<2x128xf32>
    %cst_36 = arith.constant 1.000000e+00 : f32
    %158 = vector.broadcast %cst_36 : f32 to vector<2x128xf32>
    %159 = arith.addf %158, %157 : vector<2x128xf32>
    %160 = arith.divf %158, %159 : vector<2x128xf32>
    %161 = math.tanh %155 : vector<2x128xf32>
    %162 = vector.extract_strided_slice %160 {offsets = [0, 0], sizes = [2, 32], strides = [1, 1]} : vector<2x128xf32> to vector<2x32xf32>
    %163 = vector.extract_strided_slice %160 {offsets = [0, 32], sizes = [2, 32], strides = [1, 1]} : vector<2x128xf32> to vector<2x32xf32>
    %164 = vector.extract_strided_slice %160 {offsets = [0, 96], sizes = [2, 32], strides = [1, 1]} : vector<2x128xf32> to vector<2x32xf32>
    %165 = vector.extract_strided_slice %161 {offsets = [0, 64], sizes = [2, 32], strides = [1, 1]} : vector<2x128xf32> to vector<2x32xf32>
    %166 = arith.mulf %163, %149 : vector<2x32xf32>
    %167 = arith.mulf %162, %165 : vector<2x32xf32>
    %168 = arith.addf %166, %167 : vector<2x32xf32>
    %169 = math.tanh %168 : vector<2x32xf32>
    %170 = arith.mulf %164, %169 : vector<2x32xf32>
    %c9 = arith.constant 9 : index
    %c0_37 = arith.constant 0 : index
    %c0_38 = arith.constant 0 : index
    %171 = vector.load %arg0[%c9, %c0_37, %c0_38] : memref<10x2x128xf32, #tpu.memory_space<vmem>>, vector<1x2x128xf32>
    %172 = vector.shape_cast %171 : vector<1x2x128xf32> to vector<2x128xf32>
    %cst_39 = arith.constant dense<0.000000e+00> : vector<2x128xf32>
    %173 = tpu.matmul %170, %0, %cst_39 {dimension_numbers = #tpu.dot_dimension_numbers<[1], [0], [0], [1], [0, 0, 1, 1], [], []>} : vector<2x32xf32>, vector<32x128xf32>, vector<2x128xf32> -> vector<2x128xf32>
    %174 = arith.addf %172, %173 : vector<2x128xf32>
    %175 = arith.negf %174 : vector<2x128xf32>
    %176 = math.exp %175 : vector<2x128xf32>
    %cst_40 = arith.constant 1.000000e+00 : f32
    %177 = vector.broadcast %cst_40 : f32 to vector<2x128xf32>
    %178 = arith.addf %177, %176 : vector<2x128xf32>
    %179 = arith.divf %177, %178 : vector<2x128xf32>
    %180 = math.tanh %174 : vector<2x128xf32>
    %181 = vector.extract_strided_slice %179 {offsets = [0, 0], sizes = [2, 32], strides = [1, 1]} : vector<2x128xf32> to vector<2x32xf32>
    %182 = vector.extract_strided_slice %179 {offsets = [0, 32], sizes = [2, 32], strides = [1, 1]} : vector<2x128xf32> to vector<2x32xf32>
    %183 = vector.extract_strided_slice %179 {offsets = [0, 96], sizes = [2, 32], strides = [1, 1]} : vector<2x128xf32> to vector<2x32xf32>
    %184 = vector.extract_strided_slice %180 {offsets = [0, 64], sizes = [2, 32], strides = [1, 1]} : vector<2x128xf32> to vector<2x32xf32>
    %185 = arith.mulf %182, %168 : vector<2x32xf32>
    %186 = arith.mulf %181, %184 : vector<2x32xf32>
    %187 = arith.addf %185, %186 : vector<2x32xf32>
    %188 = math.tanh %187 : vector<2x32xf32>
    %189 = arith.mulf %183, %188 : vector<2x32xf32>
    %190 = vector.shape_cast %18 : vector<2x32xf32> to vector<1x2x32xf32>
    %191 = vector.shape_cast %37 : vector<2x32xf32> to vector<1x2x32xf32>
    %192 = vector.shape_cast %56 : vector<2x32xf32> to vector<1x2x32xf32>
    %193 = vector.shape_cast %75 : vector<2x32xf32> to vector<1x2x32xf32>
    %194 = vector.shape_cast %94 : vector<2x32xf32> to vector<1x2x32xf32>
    %195 = vector.shape_cast %113 : vector<2x32xf32> to vector<1x2x32xf32>
    %196 = vector.shape_cast %132 : vector<2x32xf32> to vector<1x2x32xf32>
    %197 = vector.shape_cast %151 : vector<2x32xf32> to vector<1x2x32xf32>
    %198 = vector.shape_cast %170 : vector<2x32xf32> to vector<1x2x32xf32>
    %199 = vector.shape_cast %189 : vector<2x32xf32> to vector<1x2x32xf32>
    %200 = tpu.concatenate %190, %191, %192, %193, %194, %195, %196, %197, %198, %199 in 0 : vector<1x2x32xf32>, vector<1x2x32xf32>, vector<1x2x32xf32>, vector<1x2x32xf32>, vector<1x2x32xf32>, vector<1x2x32xf32>, vector<1x2x32xf32>, vector<1x2x32xf32>, vector<1x2x32xf32>, vector<1x2x32xf32> -> vector<10x2x32xf32>
    %201 = tpu.concatenate %200, %200 in 1 : vector<10x2x32xf32>, vector<10x2x32xf32> -> vector<10x4x32xf32>
    %c0_41 = arith.constant 0 : index
    %c0_42 = arith.constant 0 : index
    %202 = vector.load %arg3[%c0_41, %c0_42] : memref<128x128xf32, #tpu.memory_space<vmem>>, vector<128x128xf32>
    %203 = tpu.iota {dimensions = array<i32: 0>} : vector<4x1xi32>
    %c2_i32 = arith.constant 2 : i32
    %204 = vector.broadcast %c2_i32 : i32 to vector<4x1xi32>
    %205 = arith.cmpi slt, %203, %204 : vector<4x1xi32>
    %206 = tpu.concatenate %189, %189 in 0 : vector<2x32xf32>, vector<2x32xf32> -> vector<4x32xf32>
    %207 = tpu.concatenate %187, %187 in 0 : vector<2x32xf32>, vector<2x32xf32> -> vector<4x32xf32>
    %208 = vector.shape_cast %206 : vector<4x32xf32> to vector<1x4x32xf32>
    %209 = vector.broadcast %208 : vector<1x4x32xf32> to vector<10x4x32xf32>
    %210 = arith.mulf %201, %209 : vector<10x4x32xf32>
    %cst_43 = arith.constant dense<0.000000e+00> : vector<10x4xf32>
    %211 = vector.multi_reduction <add>, %210, %cst_43 [2] : vector<10x4x32xf32> to vector<10x4xf32>
    %212 = vector.shape_cast %211 : vector<10x4xf32> to vector<10x4x1xf32>
    %cst_44 = arith.constant dense<0xFF800000> : vector<4x1xf32>
    %213 = vector.multi_reduction <maximumf>, %212, %cst_44 [0] : vector<10x4x1xf32> to vector<4x1xf32>
    %214 = vector.shape_cast %213 : vector<4x1xf32> to vector<1x4x1xf32>
    %215 = vector.broadcast %214 : vector<1x4x1xf32> to vector<10x4x1xf32>
    %216 = arith.subf %212, %215 : vector<10x4x1xf32>
    %217 = math.exp %216 : vector<10x4x1xf32>
    %cst_45 = arith.constant dense<0.000000e+00> : vector<4x1xf32>
    %218 = vector.multi_reduction <add>, %217, %cst_45 [0] : vector<10x4x1xf32> to vector<4x1xf32>
    %219 = vector.shape_cast %218 : vector<4x1xf32> to vector<1x4x1xf32>
    %220 = vector.broadcast %219 : vector<1x4x1xf32> to vector<10x4x1xf32>
    %221 = arith.divf %217, %220 : vector<10x4x1xf32>
    %222 = vector.broadcast %221 : vector<10x4x1xf32> to vector<10x4x32xf32>
    %223 = arith.mulf %201, %222 : vector<10x4x32xf32>
    %cst_46 = arith.constant dense<0.000000e+00> : vector<4x32xf32>
    %224 = vector.multi_reduction <add>, %223, %cst_46 [0] : vector<10x4x32xf32> to vector<4x32xf32>
    %225 = tpu.concatenate %224, %206 in 1 : vector<4x32xf32>, vector<4x32xf32> -> vector<4x64xf32>
    %cst_47 = arith.constant 0.000000e+00 : f32
    %226 = vector.shape_cast %205 : vector<4x1xi1> to vector<4x1xi1>
    %227 = vector.broadcast %226 : vector<4x1xi1> to vector<4x64xi1>
    %228 = vector.broadcast %cst_47 : f32 to vector<4x64xf32>
    %229 = arith.select %227, %225, %228 : vector<4x64xi1>, vector<4x64xf32>
    %230 = arith.subf %225, %229 : vector<4x64xf32>
    %231 = tpu.concatenate %229, %230 in 1 : vector<4x64xf32>, vector<4x64xf32> -> vector<4x128xf32>
    %cst_48 = arith.constant dense<0.000000e+00> : vector<4x128xf32>
    %232 = tpu.matmul %231, %202, %cst_48 {dimension_numbers = #tpu.dot_dimension_numbers<[1], [0], [0], [1], [0, 0, 1, 1], [], []>} : vector<4x128xf32>, vector<128x128xf32>, vector<4x128xf32> -> vector<4x128xf32>
    %c0_49 = arith.constant 0 : index
    %c0_50 = arith.constant 0 : index
    %c0_51 = arith.constant 0 : index
    %233 = vector.load %arg2[%c0_49, %c0_50, %c0_51] : memref<8x4x128xf32, #tpu.memory_space<vmem>>, vector<1x4x128xf32>
    %234 = vector.shape_cast %233 : vector<1x4x128xf32> to vector<4x128xf32>
    %235 = arith.addf %234, %232 : vector<4x128xf32>
    %236 = arith.negf %235 : vector<4x128xf32>
    %237 = math.exp %236 : vector<4x128xf32>
    %cst_52 = arith.constant 1.000000e+00 : f32
    %238 = vector.broadcast %cst_52 : f32 to vector<4x128xf32>
    %239 = arith.addf %238, %237 : vector<4x128xf32>
    %240 = arith.divf %238, %239 : vector<4x128xf32>
    %241 = math.tanh %235 : vector<4x128xf32>
    %242 = vector.extract_strided_slice %240 {offsets = [0, 0], sizes = [4, 32], strides = [1, 1]} : vector<4x128xf32> to vector<4x32xf32>
    %243 = vector.extract_strided_slice %240 {offsets = [0, 32], sizes = [4, 32], strides = [1, 1]} : vector<4x128xf32> to vector<4x32xf32>
    %244 = vector.extract_strided_slice %240 {offsets = [0, 96], sizes = [4, 32], strides = [1, 1]} : vector<4x128xf32> to vector<4x32xf32>
    %245 = vector.extract_strided_slice %241 {offsets = [0, 64], sizes = [4, 32], strides = [1, 1]} : vector<4x128xf32> to vector<4x32xf32>
    %246 = arith.mulf %243, %207 : vector<4x32xf32>
    %247 = arith.mulf %242, %245 : vector<4x32xf32>
    %248 = arith.addf %246, %247 : vector<4x32xf32>
    %249 = math.tanh %248 : vector<4x32xf32>
    %250 = arith.mulf %244, %249 : vector<4x32xf32>
    %251 = vector.extract_strided_slice %250 {offsets = [0, 0], sizes = [2, 32], strides = [1, 1]} : vector<4x32xf32> to vector<2x32xf32>
    %252 = vector.extract_strided_slice %250 {offsets = [2, 0], sizes = [2, 32], strides = [1, 1]} : vector<4x32xf32> to vector<2x32xf32>
    %253 = vector.shape_cast %250 : vector<4x32xf32> to vector<1x4x32xf32>
    %254 = vector.broadcast %253 : vector<1x4x32xf32> to vector<10x4x32xf32>
    %255 = arith.mulf %201, %254 : vector<10x4x32xf32>
    %cst_53 = arith.constant dense<0.000000e+00> : vector<10x4xf32>
    %256 = vector.multi_reduction <add>, %255, %cst_53 [2] : vector<10x4x32xf32> to vector<10x4xf32>
    %257 = vector.shape_cast %256 : vector<10x4xf32> to vector<10x4x1xf32>
    %cst_54 = arith.constant dense<0xFF800000> : vector<4x1xf32>
    %258 = vector.multi_reduction <maximumf>, %257, %cst_54 [0] : vector<10x4x1xf32> to vector<4x1xf32>
    %259 = vector.shape_cast %258 : vector<4x1xf32> to vector<1x4x1xf32>
    %260 = vector.broadcast %259 : vector<1x4x1xf32> to vector<10x4x1xf32>
    %261 = arith.subf %257, %260 : vector<10x4x1xf32>
    %262 = math.exp %261 : vector<10x4x1xf32>
    %cst_55 = arith.constant dense<0.000000e+00> : vector<4x1xf32>
    %263 = vector.multi_reduction <add>, %262, %cst_55 [0] : vector<10x4x1xf32> to vector<4x1xf32>
    %264 = vector.shape_cast %263 : vector<4x1xf32> to vector<1x4x1xf32>
    %265 = vector.broadcast %264 : vector<1x4x1xf32> to vector<10x4x1xf32>
    %266 = arith.divf %262, %265 : vector<10x4x1xf32>
    %267 = vector.broadcast %266 : vector<10x4x1xf32> to vector<10x4x32xf32>
    %268 = arith.mulf %201, %267 : vector<10x4x32xf32>
    %cst_56 = arith.constant dense<0.000000e+00> : vector<4x32xf32>
    %269 = vector.multi_reduction <add>, %268, %cst_56 [0] : vector<10x4x32xf32> to vector<4x32xf32>
    %270 = tpu.concatenate %269, %250 in 1 : vector<4x32xf32>, vector<4x32xf32> -> vector<4x64xf32>
    %cst_57 = arith.constant 0.000000e+00 : f32
    %271 = vector.shape_cast %205 : vector<4x1xi1> to vector<4x1xi1>
    %272 = vector.broadcast %271 : vector<4x1xi1> to vector<4x64xi1>
    %273 = vector.broadcast %cst_57 : f32 to vector<4x64xf32>
    %274 = arith.select %272, %270, %273 : vector<4x64xi1>, vector<4x64xf32>
    %275 = arith.subf %270, %274 : vector<4x64xf32>
    %276 = tpu.concatenate %274, %275 in 1 : vector<4x64xf32>, vector<4x64xf32> -> vector<4x128xf32>
    %cst_58 = arith.constant dense<0.000000e+00> : vector<4x128xf32>
    %277 = tpu.matmul %276, %202, %cst_58 {dimension_numbers = #tpu.dot_dimension_numbers<[1], [0], [0], [1], [0, 0, 1, 1], [], []>} : vector<4x128xf32>, vector<128x128xf32>, vector<4x128xf32> -> vector<4x128xf32>
    %c1_59 = arith.constant 1 : index
    %c0_60 = arith.constant 0 : index
    %c0_61 = arith.constant 0 : index
    %278 = vector.load %arg2[%c1_59, %c0_60, %c0_61] : memref<8x4x128xf32, #tpu.memory_space<vmem>>, vector<1x4x128xf32>
    %279 = vector.shape_cast %278 : vector<1x4x128xf32> to vector<4x128xf32>
    %280 = arith.addf %279, %277 : vector<4x128xf32>
    %281 = arith.negf %280 : vector<4x128xf32>
    %282 = math.exp %281 : vector<4x128xf32>
    %cst_62 = arith.constant 1.000000e+00 : f32
    %283 = vector.broadcast %cst_62 : f32 to vector<4x128xf32>
    %284 = arith.addf %283, %282 : vector<4x128xf32>
    %285 = arith.divf %283, %284 : vector<4x128xf32>
    %286 = math.tanh %280 : vector<4x128xf32>
    %287 = vector.extract_strided_slice %285 {offsets = [0, 0], sizes = [4, 32], strides = [1, 1]} : vector<4x128xf32> to vector<4x32xf32>
    %288 = vector.extract_strided_slice %285 {offsets = [0, 32], sizes = [4, 32], strides = [1, 1]} : vector<4x128xf32> to vector<4x32xf32>
    %289 = vector.extract_strided_slice %285 {offsets = [0, 96], sizes = [4, 32], strides = [1, 1]} : vector<4x128xf32> to vector<4x32xf32>
    %290 = vector.extract_strided_slice %286 {offsets = [0, 64], sizes = [4, 32], strides = [1, 1]} : vector<4x128xf32> to vector<4x32xf32>
    %291 = arith.mulf %288, %248 : vector<4x32xf32>
    %292 = arith.mulf %287, %290 : vector<4x32xf32>
    %293 = arith.addf %291, %292 : vector<4x32xf32>
    %294 = math.tanh %293 : vector<4x32xf32>
    %295 = arith.mulf %289, %294 : vector<4x32xf32>
    %296 = vector.extract_strided_slice %295 {offsets = [0, 0], sizes = [2, 32], strides = [1, 1]} : vector<4x32xf32> to vector<2x32xf32>
    %297 = vector.extract_strided_slice %295 {offsets = [2, 0], sizes = [2, 32], strides = [1, 1]} : vector<4x32xf32> to vector<2x32xf32>
    %298 = vector.shape_cast %295 : vector<4x32xf32> to vector<1x4x32xf32>
    %299 = vector.broadcast %298 : vector<1x4x32xf32> to vector<10x4x32xf32>
    %300 = arith.mulf %201, %299 : vector<10x4x32xf32>
    %cst_63 = arith.constant dense<0.000000e+00> : vector<10x4xf32>
    %301 = vector.multi_reduction <add>, %300, %cst_63 [2] : vector<10x4x32xf32> to vector<10x4xf32>
    %302 = vector.shape_cast %301 : vector<10x4xf32> to vector<10x4x1xf32>
    %cst_64 = arith.constant dense<0xFF800000> : vector<4x1xf32>
    %303 = vector.multi_reduction <maximumf>, %302, %cst_64 [0] : vector<10x4x1xf32> to vector<4x1xf32>
    %304 = vector.shape_cast %303 : vector<4x1xf32> to vector<1x4x1xf32>
    %305 = vector.broadcast %304 : vector<1x4x1xf32> to vector<10x4x1xf32>
    %306 = arith.subf %302, %305 : vector<10x4x1xf32>
    %307 = math.exp %306 : vector<10x4x1xf32>
    %cst_65 = arith.constant dense<0.000000e+00> : vector<4x1xf32>
    %308 = vector.multi_reduction <add>, %307, %cst_65 [0] : vector<10x4x1xf32> to vector<4x1xf32>
    %309 = vector.shape_cast %308 : vector<4x1xf32> to vector<1x4x1xf32>
    %310 = vector.broadcast %309 : vector<1x4x1xf32> to vector<10x4x1xf32>
    %311 = arith.divf %307, %310 : vector<10x4x1xf32>
    %312 = vector.broadcast %311 : vector<10x4x1xf32> to vector<10x4x32xf32>
    %313 = arith.mulf %201, %312 : vector<10x4x32xf32>
    %cst_66 = arith.constant dense<0.000000e+00> : vector<4x32xf32>
    %314 = vector.multi_reduction <add>, %313, %cst_66 [0] : vector<10x4x32xf32> to vector<4x32xf32>
    %315 = tpu.concatenate %314, %295 in 1 : vector<4x32xf32>, vector<4x32xf32> -> vector<4x64xf32>
    %cst_67 = arith.constant 0.000000e+00 : f32
    %316 = vector.shape_cast %205 : vector<4x1xi1> to vector<4x1xi1>
    %317 = vector.broadcast %316 : vector<4x1xi1> to vector<4x64xi1>
    %318 = vector.broadcast %cst_67 : f32 to vector<4x64xf32>
    %319 = arith.select %317, %315, %318 : vector<4x64xi1>, vector<4x64xf32>
    %320 = arith.subf %315, %319 : vector<4x64xf32>
    %321 = tpu.concatenate %319, %320 in 1 : vector<4x64xf32>, vector<4x64xf32> -> vector<4x128xf32>
    %cst_68 = arith.constant dense<0.000000e+00> : vector<4x128xf32>
    %322 = tpu.matmul %321, %202, %cst_68 {dimension_numbers = #tpu.dot_dimension_numbers<[1], [0], [0], [1], [0, 0, 1, 1], [], []>} : vector<4x128xf32>, vector<128x128xf32>, vector<4x128xf32> -> vector<4x128xf32>
    %c2_69 = arith.constant 2 : index
    %c0_70 = arith.constant 0 : index
    %c0_71 = arith.constant 0 : index
    %323 = vector.load %arg2[%c2_69, %c0_70, %c0_71] : memref<8x4x128xf32, #tpu.memory_space<vmem>>, vector<1x4x128xf32>
    %324 = vector.shape_cast %323 : vector<1x4x128xf32> to vector<4x128xf32>
    %325 = arith.addf %324, %322 : vector<4x128xf32>
    %326 = arith.negf %325 : vector<4x128xf32>
    %327 = math.exp %326 : vector<4x128xf32>
    %cst_72 = arith.constant 1.000000e+00 : f32
    %328 = vector.broadcast %cst_72 : f32 to vector<4x128xf32>
    %329 = arith.addf %328, %327 : vector<4x128xf32>
    %330 = arith.divf %328, %329 : vector<4x128xf32>
    %331 = math.tanh %325 : vector<4x128xf32>
    %332 = vector.extract_strided_slice %330 {offsets = [0, 0], sizes = [4, 32], strides = [1, 1]} : vector<4x128xf32> to vector<4x32xf32>
    %333 = vector.extract_strided_slice %330 {offsets = [0, 32], sizes = [4, 32], strides = [1, 1]} : vector<4x128xf32> to vector<4x32xf32>
    %334 = vector.extract_strided_slice %330 {offsets = [0, 96], sizes = [4, 32], strides = [1, 1]} : vector<4x128xf32> to vector<4x32xf32>
    %335 = vector.extract_strided_slice %331 {offsets = [0, 64], sizes = [4, 32], strides = [1, 1]} : vector<4x128xf32> to vector<4x32xf32>
    %336 = arith.mulf %333, %293 : vector<4x32xf32>
    %337 = arith.mulf %332, %335 : vector<4x32xf32>
    %338 = arith.addf %336, %337 : vector<4x32xf32>
    %339 = math.tanh %338 : vector<4x32xf32>
    %340 = arith.mulf %334, %339 : vector<4x32xf32>
    %341 = vector.extract_strided_slice %340 {offsets = [0, 0], sizes = [2, 32], strides = [1, 1]} : vector<4x32xf32> to vector<2x32xf32>
    %342 = vector.extract_strided_slice %340 {offsets = [2, 0], sizes = [2, 32], strides = [1, 1]} : vector<4x32xf32> to vector<2x32xf32>
    %343 = vector.shape_cast %340 : vector<4x32xf32> to vector<1x4x32xf32>
    %344 = vector.broadcast %343 : vector<1x4x32xf32> to vector<10x4x32xf32>
    %345 = arith.mulf %201, %344 : vector<10x4x32xf32>
    %cst_73 = arith.constant dense<0.000000e+00> : vector<10x4xf32>
    %346 = vector.multi_reduction <add>, %345, %cst_73 [2] : vector<10x4x32xf32> to vector<10x4xf32>
    %347 = vector.shape_cast %346 : vector<10x4xf32> to vector<10x4x1xf32>
    %cst_74 = arith.constant dense<0xFF800000> : vector<4x1xf32>
    %348 = vector.multi_reduction <maximumf>, %347, %cst_74 [0] : vector<10x4x1xf32> to vector<4x1xf32>
    %349 = vector.shape_cast %348 : vector<4x1xf32> to vector<1x4x1xf32>
    %350 = vector.broadcast %349 : vector<1x4x1xf32> to vector<10x4x1xf32>
    %351 = arith.subf %347, %350 : vector<10x4x1xf32>
    %352 = math.exp %351 : vector<10x4x1xf32>
    %cst_75 = arith.constant dense<0.000000e+00> : vector<4x1xf32>
    %353 = vector.multi_reduction <add>, %352, %cst_75 [0] : vector<10x4x1xf32> to vector<4x1xf32>
    %354 = vector.shape_cast %353 : vector<4x1xf32> to vector<1x4x1xf32>
    %355 = vector.broadcast %354 : vector<1x4x1xf32> to vector<10x4x1xf32>
    %356 = arith.divf %352, %355 : vector<10x4x1xf32>
    %357 = vector.broadcast %356 : vector<10x4x1xf32> to vector<10x4x32xf32>
    %358 = arith.mulf %201, %357 : vector<10x4x32xf32>
    %cst_76 = arith.constant dense<0.000000e+00> : vector<4x32xf32>
    %359 = vector.multi_reduction <add>, %358, %cst_76 [0] : vector<10x4x32xf32> to vector<4x32xf32>
    %360 = tpu.concatenate %359, %340 in 1 : vector<4x32xf32>, vector<4x32xf32> -> vector<4x64xf32>
    %cst_77 = arith.constant 0.000000e+00 : f32
    %361 = vector.shape_cast %205 : vector<4x1xi1> to vector<4x1xi1>
    %362 = vector.broadcast %361 : vector<4x1xi1> to vector<4x64xi1>
    %363 = vector.broadcast %cst_77 : f32 to vector<4x64xf32>
    %364 = arith.select %362, %360, %363 : vector<4x64xi1>, vector<4x64xf32>
    %365 = arith.subf %360, %364 : vector<4x64xf32>
    %366 = tpu.concatenate %364, %365 in 1 : vector<4x64xf32>, vector<4x64xf32> -> vector<4x128xf32>
    %cst_78 = arith.constant dense<0.000000e+00> : vector<4x128xf32>
    %367 = tpu.matmul %366, %202, %cst_78 {dimension_numbers = #tpu.dot_dimension_numbers<[1], [0], [0], [1], [0, 0, 1, 1], [], []>} : vector<4x128xf32>, vector<128x128xf32>, vector<4x128xf32> -> vector<4x128xf32>
    %c3_79 = arith.constant 3 : index
    %c0_80 = arith.constant 0 : index
    %c0_81 = arith.constant 0 : index
    %368 = vector.load %arg2[%c3_79, %c0_80, %c0_81] : memref<8x4x128xf32, #tpu.memory_space<vmem>>, vector<1x4x128xf32>
    %369 = vector.shape_cast %368 : vector<1x4x128xf32> to vector<4x128xf32>
    %370 = arith.addf %369, %367 : vector<4x128xf32>
    %371 = arith.negf %370 : vector<4x128xf32>
    %372 = math.exp %371 : vector<4x128xf32>
    %cst_82 = arith.constant 1.000000e+00 : f32
    %373 = vector.broadcast %cst_82 : f32 to vector<4x128xf32>
    %374 = arith.addf %373, %372 : vector<4x128xf32>
    %375 = arith.divf %373, %374 : vector<4x128xf32>
    %376 = math.tanh %370 : vector<4x128xf32>
    %377 = vector.extract_strided_slice %375 {offsets = [0, 0], sizes = [4, 32], strides = [1, 1]} : vector<4x128xf32> to vector<4x32xf32>
    %378 = vector.extract_strided_slice %375 {offsets = [0, 32], sizes = [4, 32], strides = [1, 1]} : vector<4x128xf32> to vector<4x32xf32>
    %379 = vector.extract_strided_slice %375 {offsets = [0, 96], sizes = [4, 32], strides = [1, 1]} : vector<4x128xf32> to vector<4x32xf32>
    %380 = vector.extract_strided_slice %376 {offsets = [0, 64], sizes = [4, 32], strides = [1, 1]} : vector<4x128xf32> to vector<4x32xf32>
    %381 = arith.mulf %378, %338 : vector<4x32xf32>
    %382 = arith.mulf %377, %380 : vector<4x32xf32>
    %383 = arith.addf %381, %382 : vector<4x32xf32>
    %384 = math.tanh %383 : vector<4x32xf32>
    %385 = arith.mulf %379, %384 : vector<4x32xf32>
    %386 = vector.extract_strided_slice %385 {offsets = [0, 0], sizes = [2, 32], strides = [1, 1]} : vector<4x32xf32> to vector<2x32xf32>
    %387 = vector.extract_strided_slice %385 {offsets = [2, 0], sizes = [2, 32], strides = [1, 1]} : vector<4x32xf32> to vector<2x32xf32>
    %388 = vector.shape_cast %385 : vector<4x32xf32> to vector<1x4x32xf32>
    %389 = vector.broadcast %388 : vector<1x4x32xf32> to vector<10x4x32xf32>
    %390 = arith.mulf %201, %389 : vector<10x4x32xf32>
    %cst_83 = arith.constant dense<0.000000e+00> : vector<10x4xf32>
    %391 = vector.multi_reduction <add>, %390, %cst_83 [2] : vector<10x4x32xf32> to vector<10x4xf32>
    %392 = vector.shape_cast %391 : vector<10x4xf32> to vector<10x4x1xf32>
    %cst_84 = arith.constant dense<0xFF800000> : vector<4x1xf32>
    %393 = vector.multi_reduction <maximumf>, %392, %cst_84 [0] : vector<10x4x1xf32> to vector<4x1xf32>
    %394 = vector.shape_cast %393 : vector<4x1xf32> to vector<1x4x1xf32>
    %395 = vector.broadcast %394 : vector<1x4x1xf32> to vector<10x4x1xf32>
    %396 = arith.subf %392, %395 : vector<10x4x1xf32>
    %397 = math.exp %396 : vector<10x4x1xf32>
    %cst_85 = arith.constant dense<0.000000e+00> : vector<4x1xf32>
    %398 = vector.multi_reduction <add>, %397, %cst_85 [0] : vector<10x4x1xf32> to vector<4x1xf32>
    %399 = vector.shape_cast %398 : vector<4x1xf32> to vector<1x4x1xf32>
    %400 = vector.broadcast %399 : vector<1x4x1xf32> to vector<10x4x1xf32>
    %401 = arith.divf %397, %400 : vector<10x4x1xf32>
    %402 = vector.broadcast %401 : vector<10x4x1xf32> to vector<10x4x32xf32>
    %403 = arith.mulf %201, %402 : vector<10x4x32xf32>
    %cst_86 = arith.constant dense<0.000000e+00> : vector<4x32xf32>
    %404 = vector.multi_reduction <add>, %403, %cst_86 [0] : vector<10x4x32xf32> to vector<4x32xf32>
    %405 = tpu.concatenate %404, %385 in 1 : vector<4x32xf32>, vector<4x32xf32> -> vector<4x64xf32>
    %cst_87 = arith.constant 0.000000e+00 : f32
    %406 = vector.shape_cast %205 : vector<4x1xi1> to vector<4x1xi1>
    %407 = vector.broadcast %406 : vector<4x1xi1> to vector<4x64xi1>
    %408 = vector.broadcast %cst_87 : f32 to vector<4x64xf32>
    %409 = arith.select %407, %405, %408 : vector<4x64xi1>, vector<4x64xf32>
    %410 = arith.subf %405, %409 : vector<4x64xf32>
    %411 = tpu.concatenate %409, %410 in 1 : vector<4x64xf32>, vector<4x64xf32> -> vector<4x128xf32>
    %cst_88 = arith.constant dense<0.000000e+00> : vector<4x128xf32>
    %412 = tpu.matmul %411, %202, %cst_88 {dimension_numbers = #tpu.dot_dimension_numbers<[1], [0], [0], [1], [0, 0, 1, 1], [], []>} : vector<4x128xf32>, vector<128x128xf32>, vector<4x128xf32> -> vector<4x128xf32>
    %c4_89 = arith.constant 4 : index
    %c0_90 = arith.constant 0 : index
    %c0_91 = arith.constant 0 : index
    %413 = vector.load %arg2[%c4_89, %c0_90, %c0_91] : memref<8x4x128xf32, #tpu.memory_space<vmem>>, vector<1x4x128xf32>
    %414 = vector.shape_cast %413 : vector<1x4x128xf32> to vector<4x128xf32>
    %415 = arith.addf %414, %412 : vector<4x128xf32>
    %416 = arith.negf %415 : vector<4x128xf32>
    %417 = math.exp %416 : vector<4x128xf32>
    %cst_92 = arith.constant 1.000000e+00 : f32
    %418 = vector.broadcast %cst_92 : f32 to vector<4x128xf32>
    %419 = arith.addf %418, %417 : vector<4x128xf32>
    %420 = arith.divf %418, %419 : vector<4x128xf32>
    %421 = math.tanh %415 : vector<4x128xf32>
    %422 = vector.extract_strided_slice %420 {offsets = [0, 0], sizes = [4, 32], strides = [1, 1]} : vector<4x128xf32> to vector<4x32xf32>
    %423 = vector.extract_strided_slice %420 {offsets = [0, 32], sizes = [4, 32], strides = [1, 1]} : vector<4x128xf32> to vector<4x32xf32>
    %424 = vector.extract_strided_slice %420 {offsets = [0, 96], sizes = [4, 32], strides = [1, 1]} : vector<4x128xf32> to vector<4x32xf32>
    %425 = vector.extract_strided_slice %421 {offsets = [0, 64], sizes = [4, 32], strides = [1, 1]} : vector<4x128xf32> to vector<4x32xf32>
    %426 = arith.mulf %423, %383 : vector<4x32xf32>
    %427 = arith.mulf %422, %425 : vector<4x32xf32>
    %428 = arith.addf %426, %427 : vector<4x32xf32>
    %429 = math.tanh %428 : vector<4x32xf32>
    %430 = arith.mulf %424, %429 : vector<4x32xf32>
    %431 = vector.extract_strided_slice %430 {offsets = [0, 0], sizes = [2, 32], strides = [1, 1]} : vector<4x32xf32> to vector<2x32xf32>
    %432 = vector.extract_strided_slice %430 {offsets = [2, 0], sizes = [2, 32], strides = [1, 1]} : vector<4x32xf32> to vector<2x32xf32>
    %433 = vector.shape_cast %430 : vector<4x32xf32> to vector<1x4x32xf32>
    %434 = vector.broadcast %433 : vector<1x4x32xf32> to vector<10x4x32xf32>
    %435 = arith.mulf %201, %434 : vector<10x4x32xf32>
    %cst_93 = arith.constant dense<0.000000e+00> : vector<10x4xf32>
    %436 = vector.multi_reduction <add>, %435, %cst_93 [2] : vector<10x4x32xf32> to vector<10x4xf32>
    %437 = vector.shape_cast %436 : vector<10x4xf32> to vector<10x4x1xf32>
    %cst_94 = arith.constant dense<0xFF800000> : vector<4x1xf32>
    %438 = vector.multi_reduction <maximumf>, %437, %cst_94 [0] : vector<10x4x1xf32> to vector<4x1xf32>
    %439 = vector.shape_cast %438 : vector<4x1xf32> to vector<1x4x1xf32>
    %440 = vector.broadcast %439 : vector<1x4x1xf32> to vector<10x4x1xf32>
    %441 = arith.subf %437, %440 : vector<10x4x1xf32>
    %442 = math.exp %441 : vector<10x4x1xf32>
    %cst_95 = arith.constant dense<0.000000e+00> : vector<4x1xf32>
    %443 = vector.multi_reduction <add>, %442, %cst_95 [0] : vector<10x4x1xf32> to vector<4x1xf32>
    %444 = vector.shape_cast %443 : vector<4x1xf32> to vector<1x4x1xf32>
    %445 = vector.broadcast %444 : vector<1x4x1xf32> to vector<10x4x1xf32>
    %446 = arith.divf %442, %445 : vector<10x4x1xf32>
    %447 = vector.broadcast %446 : vector<10x4x1xf32> to vector<10x4x32xf32>
    %448 = arith.mulf %201, %447 : vector<10x4x32xf32>
    %cst_96 = arith.constant dense<0.000000e+00> : vector<4x32xf32>
    %449 = vector.multi_reduction <add>, %448, %cst_96 [0] : vector<10x4x32xf32> to vector<4x32xf32>
    %450 = tpu.concatenate %449, %430 in 1 : vector<4x32xf32>, vector<4x32xf32> -> vector<4x64xf32>
    %cst_97 = arith.constant 0.000000e+00 : f32
    %451 = vector.shape_cast %205 : vector<4x1xi1> to vector<4x1xi1>
    %452 = vector.broadcast %451 : vector<4x1xi1> to vector<4x64xi1>
    %453 = vector.broadcast %cst_97 : f32 to vector<4x64xf32>
    %454 = arith.select %452, %450, %453 : vector<4x64xi1>, vector<4x64xf32>
    %455 = arith.subf %450, %454 : vector<4x64xf32>
    %456 = tpu.concatenate %454, %455 in 1 : vector<4x64xf32>, vector<4x64xf32> -> vector<4x128xf32>
    %cst_98 = arith.constant dense<0.000000e+00> : vector<4x128xf32>
    %457 = tpu.matmul %456, %202, %cst_98 {dimension_numbers = #tpu.dot_dimension_numbers<[1], [0], [0], [1], [0, 0, 1, 1], [], []>} : vector<4x128xf32>, vector<128x128xf32>, vector<4x128xf32> -> vector<4x128xf32>
    %c5_99 = arith.constant 5 : index
    %c0_100 = arith.constant 0 : index
    %c0_101 = arith.constant 0 : index
    %458 = vector.load %arg2[%c5_99, %c0_100, %c0_101] : memref<8x4x128xf32, #tpu.memory_space<vmem>>, vector<1x4x128xf32>
    %459 = vector.shape_cast %458 : vector<1x4x128xf32> to vector<4x128xf32>
    %460 = arith.addf %459, %457 : vector<4x128xf32>
    %461 = arith.negf %460 : vector<4x128xf32>
    %462 = math.exp %461 : vector<4x128xf32>
    %cst_102 = arith.constant 1.000000e+00 : f32
    %463 = vector.broadcast %cst_102 : f32 to vector<4x128xf32>
    %464 = arith.addf %463, %462 : vector<4x128xf32>
    %465 = arith.divf %463, %464 : vector<4x128xf32>
    %466 = math.tanh %460 : vector<4x128xf32>
    %467 = vector.extract_strided_slice %465 {offsets = [0, 0], sizes = [4, 32], strides = [1, 1]} : vector<4x128xf32> to vector<4x32xf32>
    %468 = vector.extract_strided_slice %465 {offsets = [0, 32], sizes = [4, 32], strides = [1, 1]} : vector<4x128xf32> to vector<4x32xf32>
    %469 = vector.extract_strided_slice %465 {offsets = [0, 96], sizes = [4, 32], strides = [1, 1]} : vector<4x128xf32> to vector<4x32xf32>
    %470 = vector.extract_strided_slice %466 {offsets = [0, 64], sizes = [4, 32], strides = [1, 1]} : vector<4x128xf32> to vector<4x32xf32>
    %471 = arith.mulf %468, %428 : vector<4x32xf32>
    %472 = arith.mulf %467, %470 : vector<4x32xf32>
    %473 = arith.addf %471, %472 : vector<4x32xf32>
    %474 = math.tanh %473 : vector<4x32xf32>
    %475 = arith.mulf %469, %474 : vector<4x32xf32>
    %476 = vector.extract_strided_slice %475 {offsets = [0, 0], sizes = [2, 32], strides = [1, 1]} : vector<4x32xf32> to vector<2x32xf32>
    %477 = vector.extract_strided_slice %475 {offsets = [2, 0], sizes = [2, 32], strides = [1, 1]} : vector<4x32xf32> to vector<2x32xf32>
    %478 = vector.shape_cast %475 : vector<4x32xf32> to vector<1x4x32xf32>
    %479 = vector.broadcast %478 : vector<1x4x32xf32> to vector<10x4x32xf32>
    %480 = arith.mulf %201, %479 : vector<10x4x32xf32>
    %cst_103 = arith.constant dense<0.000000e+00> : vector<10x4xf32>
    %481 = vector.multi_reduction <add>, %480, %cst_103 [2] : vector<10x4x32xf32> to vector<10x4xf32>
    %482 = vector.shape_cast %481 : vector<10x4xf32> to vector<10x4x1xf32>
    %cst_104 = arith.constant dense<0xFF800000> : vector<4x1xf32>
    %483 = vector.multi_reduction <maximumf>, %482, %cst_104 [0] : vector<10x4x1xf32> to vector<4x1xf32>
    %484 = vector.shape_cast %483 : vector<4x1xf32> to vector<1x4x1xf32>
    %485 = vector.broadcast %484 : vector<1x4x1xf32> to vector<10x4x1xf32>
    %486 = arith.subf %482, %485 : vector<10x4x1xf32>
    %487 = math.exp %486 : vector<10x4x1xf32>
    %cst_105 = arith.constant dense<0.000000e+00> : vector<4x1xf32>
    %488 = vector.multi_reduction <add>, %487, %cst_105 [0] : vector<10x4x1xf32> to vector<4x1xf32>
    %489 = vector.shape_cast %488 : vector<4x1xf32> to vector<1x4x1xf32>
    %490 = vector.broadcast %489 : vector<1x4x1xf32> to vector<10x4x1xf32>
    %491 = arith.divf %487, %490 : vector<10x4x1xf32>
    %492 = vector.broadcast %491 : vector<10x4x1xf32> to vector<10x4x32xf32>
    %493 = arith.mulf %201, %492 : vector<10x4x32xf32>
    %cst_106 = arith.constant dense<0.000000e+00> : vector<4x32xf32>
    %494 = vector.multi_reduction <add>, %493, %cst_106 [0] : vector<10x4x32xf32> to vector<4x32xf32>
    %495 = tpu.concatenate %494, %475 in 1 : vector<4x32xf32>, vector<4x32xf32> -> vector<4x64xf32>
    %cst_107 = arith.constant 0.000000e+00 : f32
    %496 = vector.shape_cast %205 : vector<4x1xi1> to vector<4x1xi1>
    %497 = vector.broadcast %496 : vector<4x1xi1> to vector<4x64xi1>
    %498 = vector.broadcast %cst_107 : f32 to vector<4x64xf32>
    %499 = arith.select %497, %495, %498 : vector<4x64xi1>, vector<4x64xf32>
    %500 = arith.subf %495, %499 : vector<4x64xf32>
    %501 = tpu.concatenate %499, %500 in 1 : vector<4x64xf32>, vector<4x64xf32> -> vector<4x128xf32>
    %cst_108 = arith.constant dense<0.000000e+00> : vector<4x128xf32>
    %502 = tpu.matmul %501, %202, %cst_108 {dimension_numbers = #tpu.dot_dimension_numbers<[1], [0], [0], [1], [0, 0, 1, 1], [], []>} : vector<4x128xf32>, vector<128x128xf32>, vector<4x128xf32> -> vector<4x128xf32>
    %c6_109 = arith.constant 6 : index
    %c0_110 = arith.constant 0 : index
    %c0_111 = arith.constant 0 : index
    %503 = vector.load %arg2[%c6_109, %c0_110, %c0_111] : memref<8x4x128xf32, #tpu.memory_space<vmem>>, vector<1x4x128xf32>
    %504 = vector.shape_cast %503 : vector<1x4x128xf32> to vector<4x128xf32>
    %505 = arith.addf %504, %502 : vector<4x128xf32>
    %506 = arith.negf %505 : vector<4x128xf32>
    %507 = math.exp %506 : vector<4x128xf32>
    %cst_112 = arith.constant 1.000000e+00 : f32
    %508 = vector.broadcast %cst_112 : f32 to vector<4x128xf32>
    %509 = arith.addf %508, %507 : vector<4x128xf32>
    %510 = arith.divf %508, %509 : vector<4x128xf32>
    %511 = math.tanh %505 : vector<4x128xf32>
    %512 = vector.extract_strided_slice %510 {offsets = [0, 0], sizes = [4, 32], strides = [1, 1]} : vector<4x128xf32> to vector<4x32xf32>
    %513 = vector.extract_strided_slice %510 {offsets = [0, 32], sizes = [4, 32], strides = [1, 1]} : vector<4x128xf32> to vector<4x32xf32>
    %514 = vector.extract_strided_slice %510 {offsets = [0, 96], sizes = [4, 32], strides = [1, 1]} : vector<4x128xf32> to vector<4x32xf32>
    %515 = vector.extract_strided_slice %511 {offsets = [0, 64], sizes = [4, 32], strides = [1, 1]} : vector<4x128xf32> to vector<4x32xf32>
    %516 = arith.mulf %513, %473 : vector<4x32xf32>
    %517 = arith.mulf %512, %515 : vector<4x32xf32>
    %518 = arith.addf %516, %517 : vector<4x32xf32>
    %519 = math.tanh %518 : vector<4x32xf32>
    %520 = arith.mulf %514, %519 : vector<4x32xf32>
    %521 = vector.extract_strided_slice %520 {offsets = [0, 0], sizes = [2, 32], strides = [1, 1]} : vector<4x32xf32> to vector<2x32xf32>
    %522 = vector.extract_strided_slice %520 {offsets = [2, 0], sizes = [2, 32], strides = [1, 1]} : vector<4x32xf32> to vector<2x32xf32>
    %523 = vector.shape_cast %520 : vector<4x32xf32> to vector<1x4x32xf32>
    %524 = vector.broadcast %523 : vector<1x4x32xf32> to vector<10x4x32xf32>
    %525 = arith.mulf %201, %524 : vector<10x4x32xf32>
    %cst_113 = arith.constant dense<0.000000e+00> : vector<10x4xf32>
    %526 = vector.multi_reduction <add>, %525, %cst_113 [2] : vector<10x4x32xf32> to vector<10x4xf32>
    %527 = vector.shape_cast %526 : vector<10x4xf32> to vector<10x4x1xf32>
    %cst_114 = arith.constant dense<0xFF800000> : vector<4x1xf32>
    %528 = vector.multi_reduction <maximumf>, %527, %cst_114 [0] : vector<10x4x1xf32> to vector<4x1xf32>
    %529 = vector.shape_cast %528 : vector<4x1xf32> to vector<1x4x1xf32>
    %530 = vector.broadcast %529 : vector<1x4x1xf32> to vector<10x4x1xf32>
    %531 = arith.subf %527, %530 : vector<10x4x1xf32>
    %532 = math.exp %531 : vector<10x4x1xf32>
    %cst_115 = arith.constant dense<0.000000e+00> : vector<4x1xf32>
    %533 = vector.multi_reduction <add>, %532, %cst_115 [0] : vector<10x4x1xf32> to vector<4x1xf32>
    %534 = vector.shape_cast %533 : vector<4x1xf32> to vector<1x4x1xf32>
    %535 = vector.broadcast %534 : vector<1x4x1xf32> to vector<10x4x1xf32>
    %536 = arith.divf %532, %535 : vector<10x4x1xf32>
    %537 = vector.broadcast %536 : vector<10x4x1xf32> to vector<10x4x32xf32>
    %538 = arith.mulf %201, %537 : vector<10x4x32xf32>
    %cst_116 = arith.constant dense<0.000000e+00> : vector<4x32xf32>
    %539 = vector.multi_reduction <add>, %538, %cst_116 [0] : vector<10x4x32xf32> to vector<4x32xf32>
    %540 = tpu.concatenate %539, %520 in 1 : vector<4x32xf32>, vector<4x32xf32> -> vector<4x64xf32>
    %cst_117 = arith.constant 0.000000e+00 : f32
    %541 = vector.shape_cast %205 : vector<4x1xi1> to vector<4x1xi1>
    %542 = vector.broadcast %541 : vector<4x1xi1> to vector<4x64xi1>
    %543 = vector.broadcast %cst_117 : f32 to vector<4x64xf32>
    %544 = arith.select %542, %540, %543 : vector<4x64xi1>, vector<4x64xf32>
    %545 = arith.subf %540, %544 : vector<4x64xf32>
    %546 = tpu.concatenate %544, %545 in 1 : vector<4x64xf32>, vector<4x64xf32> -> vector<4x128xf32>
    %cst_118 = arith.constant dense<0.000000e+00> : vector<4x128xf32>
    %547 = tpu.matmul %546, %202, %cst_118 {dimension_numbers = #tpu.dot_dimension_numbers<[1], [0], [0], [1], [0, 0, 1, 1], [], []>} : vector<4x128xf32>, vector<128x128xf32>, vector<4x128xf32> -> vector<4x128xf32>
    %c7_119 = arith.constant 7 : index
    %c0_120 = arith.constant 0 : index
    %c0_121 = arith.constant 0 : index
    %548 = vector.load %arg2[%c7_119, %c0_120, %c0_121] : memref<8x4x128xf32, #tpu.memory_space<vmem>>, vector<1x4x128xf32>
    %549 = vector.shape_cast %548 : vector<1x4x128xf32> to vector<4x128xf32>
    %550 = arith.addf %549, %547 : vector<4x128xf32>
    %551 = arith.negf %550 : vector<4x128xf32>
    %552 = math.exp %551 : vector<4x128xf32>
    %cst_122 = arith.constant 1.000000e+00 : f32
    %553 = vector.broadcast %cst_122 : f32 to vector<4x128xf32>
    %554 = arith.addf %553, %552 : vector<4x128xf32>
    %555 = arith.divf %553, %554 : vector<4x128xf32>
    %556 = math.tanh %550 : vector<4x128xf32>
    %557 = vector.extract_strided_slice %555 {offsets = [0, 0], sizes = [4, 32], strides = [1, 1]} : vector<4x128xf32> to vector<4x32xf32>
    %558 = vector.extract_strided_slice %555 {offsets = [0, 32], sizes = [4, 32], strides = [1, 1]} : vector<4x128xf32> to vector<4x32xf32>
    %559 = vector.extract_strided_slice %555 {offsets = [0, 96], sizes = [4, 32], strides = [1, 1]} : vector<4x128xf32> to vector<4x32xf32>
    %560 = vector.extract_strided_slice %556 {offsets = [0, 64], sizes = [4, 32], strides = [1, 1]} : vector<4x128xf32> to vector<4x32xf32>
    %561 = arith.mulf %558, %518 : vector<4x32xf32>
    %562 = arith.mulf %557, %560 : vector<4x32xf32>
    %563 = arith.addf %561, %562 : vector<4x32xf32>
    %564 = math.tanh %563 : vector<4x32xf32>
    %565 = arith.mulf %559, %564 : vector<4x32xf32>
    %566 = vector.extract_strided_slice %565 {offsets = [0, 0], sizes = [2, 32], strides = [1, 1]} : vector<4x32xf32> to vector<2x32xf32>
    %567 = vector.extract_strided_slice %565 {offsets = [2, 0], sizes = [2, 32], strides = [1, 1]} : vector<4x32xf32> to vector<2x32xf32>
    %568 = tpu.concatenate %251, %296, %341, %386, %431, %476, %521, %566 in 0 : vector<2x32xf32>, vector<2x32xf32>, vector<2x32xf32>, vector<2x32xf32>, vector<2x32xf32>, vector<2x32xf32>, vector<2x32xf32>, vector<2x32xf32> -> vector<16x32xf32>
    %569 = tpu.concatenate %567, %522, %477, %432, %387, %342, %297, %252 in 0 : vector<2x32xf32>, vector<2x32xf32>, vector<2x32xf32>, vector<2x32xf32>, vector<2x32xf32>, vector<2x32xf32>, vector<2x32xf32>, vector<2x32xf32> -> vector<16x32xf32>
    %570 = tpu.concatenate %568, %569 in 1 : vector<16x32xf32>, vector<16x32xf32> -> vector<16x64xf32>
    %c0_123 = arith.constant 0 : index
    %c0_124 = arith.constant 0 : index
    %571 = vector.load %arg4[%c0_123, %c0_124] : memref<64x32xf32, #tpu.memory_space<vmem>>, vector<64x32xf32>
    %cst_125 = arith.constant dense<0.000000e+00> : vector<16x32xf32>
    %572 = tpu.matmul %570, %571, %cst_125 {dimension_numbers = #tpu.dot_dimension_numbers<[1], [0], [0], [1], [0, 0, 1, 1], [], []>} : vector<16x64xf32>, vector<64x32xf32>, vector<16x32xf32> -> vector<16x32xf32>
    %c0_126 = arith.constant 0 : index
    %c0_127 = arith.constant 0 : index
    %573 = vector.load %arg5[%c0_126, %c0_127] : memref<1x32xf32, #tpu.memory_space<vmem>>, vector<1x32xf32>
    %574 = vector.broadcast %573 : vector<1x32xf32> to vector<16x32xf32>
    %575 = arith.addf %572, %574 : vector<16x32xf32>
    %c0_128 = arith.constant 0 : index
    %c0_129 = arith.constant 0 : index
    %576 = vector.load %arg8[%c0_128, %c0_129] : memref<16x32xf32, #tpu.memory_space<vmem>>, vector<16x32xf32>
    tpu.vector_store %arg8[%c0_128, %c0_129], %575 {strides = array<i32>} : memref<16x32xf32, #tpu.memory_space<vmem>>, vector<16x32xf32>,
    %cst_130 = arith.constant 0.000000e+00 : f32
    %577 = vector.broadcast %cst_130 : f32 to vector<2x32xf32>
    %578 = arith.addf %577, %251 : vector<2x32xf32>
    %579 = arith.addf %578, %296 : vector<2x32xf32>
    %580 = arith.addf %579, %341 : vector<2x32xf32>
    %581 = arith.addf %580, %386 : vector<2x32xf32>
    %582 = arith.addf %581, %431 : vector<2x32xf32>
    %583 = arith.addf %582, %476 : vector<2x32xf32>
    %584 = arith.addf %583, %521 : vector<2x32xf32>
    %585 = arith.addf %584, %566 : vector<2x32xf32>
    %cst_131 = arith.constant 0.000000e+00 : f32
    %586 = vector.broadcast %cst_131 : f32 to vector<2x32xf32>
    %587 = arith.addf %586, %567 : vector<2x32xf32>
    %588 = arith.addf %587, %522 : vector<2x32xf32>
    %589 = arith.addf %588, %477 : vector<2x32xf32>
    %590 = arith.addf %589, %432 : vector<2x32xf32>
    %591 = arith.addf %590, %387 : vector<2x32xf32>
    %592 = arith.addf %591, %342 : vector<2x32xf32>
    %593 = arith.addf %592, %297 : vector<2x32xf32>
    %594 = arith.addf %593, %252 : vector<2x32xf32>
    %595 = tpu.concatenate %585, %594 in 1 : vector<2x32xf32>, vector<2x32xf32> -> vector<2x64xf32>
    %cst_132 = arith.constant 1.250000e-01 : f32
    %596 = vector.broadcast %cst_132 : f32 to vector<2x64xf32>
    %597 = arith.mulf %595, %596 : vector<2x64xf32>
    %c0_133 = arith.constant 0 : index
    %c0_134 = arith.constant 0 : index
    %598 = vector.load %arg6[%c0_133, %c0_134] : memref<1x64xf32, #tpu.memory_space<vmem>>, vector<1x64xf32>
    %599 = vector.broadcast %598 : vector<1x64xf32> to vector<2x64xf32>
    %600 = arith.mulf %597, %599 : vector<2x64xf32>
    %cst_135 = arith.constant dense<0.000000e+00> : vector<2xf32>
    %601 = vector.multi_reduction <add>, %600, %cst_135 [1] : vector<2x64xf32> to vector<2xf32>
    %602 = vector.shape_cast %601 : vector<2xf32> to vector<2x1xf32>
    %c0_136 = arith.constant 0 : index
    %c0_137 = arith.constant 0 : index
    %603 = vector.load %arg7[%c0_136, %c0_137] : memref<1x1xf32, #tpu.memory_space<vmem>>, vector<1x1xf32>
    %604 = vector.broadcast %603 : vector<1x1xf32> to vector<2x1xf32>
    %605 = arith.addf %602, %604 : vector<2x1xf32>
    %c0_138 = arith.constant 0 : index
    %c0_139 = arith.constant 0 : index
    %606 = vector.load %arg9[%c0_138, %c0_139] : memref<2x1xf32, #tpu.memory_space<vmem>>, vector<2x1xf32>
    tpu.vector_store %arg9[%c0_138, %c0_139], %605 {strides = array<i32>} : memref<2x1xf32, #tpu.memory_space<vmem>>, vector<2x1xf32>,
    return
  }
}

</mosaic_0001>

<llo_original>
// kernel: reverse.1
$region0: #{reverse.1}
  %s0 = inlined_call_operand.vmem [shape: s32[7,2], index: 0, kind: input, shape index: {}]
  %s1 = inlined_call_operand.vmem [shape: s32[7,2], index: 1, kind: output, shape index: {}]
  %v2 = vlaneseq
  %v3 = vsub.s32 6, %v2
  %4 = vset.pattern.permute.xlu0 %v3
  $region1: #{reverse.1} parent=0
    #allocation0 [shape = 'u8[4096]{0}', space=vmem, size = 0x1000, scoped, tag = 'operand span for operand 0']
    #allocation1 [shape = 'u8[1024]{0}', space=vmem, size = 0x400, scoped, tag = 'packed  for operand 0']
    #allocation2 [shape = 'u8[4096]{0}', space=vmem, size = 0x1000, scoped, tag = 'operand span for operand 1']
    #allocation3 [shape = 'u8[1024]{0}', space=vmem, size = 0x400, scoped, tag = 'packed  for operand 1']
    // Predicated region
    $region2: #{reverse.1} parent=1 // pred_check
      _
    $region3: #{reverse.1} parent=1 // pred_check_branch
      %6 = sbr.rel (0) target = $region5
    $region4: #{reverse.1} parent=1 // pred_region
      // Predicated region
      $region6: #{reverse.1} parent=4 // pred_check
        _
      $region7: #{reverse.1} parent=4 // pred_check_branch
        %8 = sbr.rel target = $region9
      $region8: #{reverse.1} parent=4 // pred_region
        // Predicated region
        $region21: #{reverse.1} parent=8 // pred_check
          _
        $region22: #{reverse.1} parent=8 // pred_check_branch
          %24 = sbr.rel (0) target = $region24
        $region23: #{reverse.1} parent=8 // pred_region
          %s26 = ssub.s32 4, 1
          loop: start=0, step=1, limit=1
          $region25: #{reverse.1} parent=23 // loop_pre_header
            _
          $region26: #{reverse.1} parent=23 // loop_header
            %s28 = sphi 0, %s32
            %p29 = scmp.ge.s32.totalorder %s28, 1
            %s33 = sphi %s0, %s0
            %s34 = sphi [#allocation1], [#allocation1]
          $region27: #{reverse.1} parent=23 // loop_header_branch
            %31 = sbr.rel (%p29) target = $region31
          $region28: #{reverse.1} parent=23 // loop_body
            %v35 = vld [vmem:[%s33] sm:%s26]
            %36 = vst [vmem:[%s34] sm:%s26] %v35
          $region29: #{reverse.1} parent=23 // loop_footer
            %s32 = sadd.s32 1, %s28
          $region30: #{reverse.1} parent=23 // loop_footer_branch
            %27 = sbr.rel target = $region26
          $region31: #{reverse.1} parent=23 // loop_exit
            _
        $region24: #{reverse.1} parent=8 // pred_fallthru
          _
      $region9: #{reverse.1} parent=4 // pred_fallthru
        _
      // Predicated region
      $region10: #{reverse.1} parent=4 // pred_check
        _
      $region11: #{reverse.1} parent=4 // pred_check_branch
        %10 = sbr.rel (0) target = $region13
      $region12: #{reverse.1} parent=4 // pred_region
        %s12 = ssub.s32 4, 1
        loop: start=0, step=1, limit=1
        $region14: #{reverse.1} parent=12 // loop_pre_header
          _
        $region15: #{reverse.1} parent=12 // loop_header
          %s14 = sphi 0, %s18
          %p15 = scmp.ge.s32.totalorder %s14, 1
          %s19 = sphi %s0, %s0
          %s20 = sphi [#allocation1], [#allocation1]
        $region16: #{reverse.1} parent=12 // loop_header_branch
          %17 = sbr.rel (%p15) target = $region20
        $region17: #{reverse.1} parent=12 // loop_body
          %v21 = vld [vmem:[%s19] sm:%s12]
          %22 = vst [vmem:[%s20] sm:%s12] %v21
        $region18: #{reverse.1} parent=12 // loop_footer
          %s18 = sadd.s32 1, %s14
        $region19: #{reverse.1} parent=12 // loop_footer_branch
          %13 = sbr.rel target = $region15
        $region20: #{reverse.1} parent=12 // loop_exit
          _
      $region13: #{reverse.1} parent=4 // pred_fallthru
        _
    $region5: #{reverse.1} parent=1 // pred_fallthru
      _
    %37 = vnop
    %s39 = ssub.s32 4, 1
    %v40 = vld [vmem:[#allocation1] sm:%s39]
    %41 = vst [vmem:[#allocation0] sm:%s39] %v40
    %v42 = vld [vmem:[#allocation0] sm:$0xff]
    %43 = vperm.xlu0 %4, %v42
    %v44 = vpop.permute.xlu0 %43
    %45 = vst [vmem:[#allocation2] sm:$0xff] %v44
    %s47 = ssub.s32 4, 1
    %v48 = vld [vmem:[#allocation2] sm:%s47]
    %s50 = ssub.s32 4, 1
    %51 = vst [vmem:[#allocation3] sm:%s50] %v48
    // Predicated region
    $region32: #{reverse.1} parent=1 // pred_check
      _
    $region33: #{reverse.1} parent=1 // pred_check_branch
      %53 = sbr.rel (0) target = $region35
    $region34: #{reverse.1} parent=1 // pred_region
      // Predicated region
      $region36: #{reverse.1} parent=34 // pred_check
        _
      $region37: #{reverse.1} parent=34 // pred_check_branch
        %55 = sbr.rel target = $region39
      $region38: #{reverse.1} parent=34 // pred_region
        // Predicated region
        $region51: #{reverse.1} parent=38 // pred_check
          _
        $region52: #{reverse.1} parent=38 // pred_check_branch
          %71 = sbr.rel (0) target = $region54
        $region53: #{reverse.1} parent=38 // pred_region
          %s73 = ssub.s32 4, 1
          loop: start=0, step=1, limit=1
          $region55: #{reverse.1} parent=53 // loop_pre_header
            _
          $region56: #{reverse.1} parent=53 // loop_header
            %s75 = sphi 0, %s79
            %p76 = scmp.ge.s32.totalorder %s75, 1
            %s80 = sphi [#allocation3], [#allocation3]
            %s81 = sphi %s1, %s1
          $region57: #{reverse.1} parent=53 // loop_header_branch
            %78 = sbr.rel (%p76) target = $region61
          $region58: #{reverse.1} parent=53 // loop_body
            %v82 = vld [vmem:[%s80] sm:%s73]
            %83 = vst [vmem:[%s81] sm:%s73] %v82
          $region59: #{reverse.1} parent=53 // loop_footer
            %s79 = sadd.s32 1, %s75
          $region60: #{reverse.1} parent=53 // loop_footer_branch
            %74 = sbr.rel target = $region56
          $region61: #{reverse.1} parent=53 // loop_exit
            _
        $region54: #{reverse.1} parent=38 // pred_fallthru
          _
      $region39: #{reverse.1} parent=34 // pred_fallthru
        _
      // Predicated region
      $region40: #{reverse.1} parent=34 // pred_check
        _
      $region41: #{reverse.1} parent=34 // pred_check_branch
        %57 = sbr.rel (0) target = $region43
      $region42: #{reverse.1} parent=34 // pred_region
        %s59 = ssub.s32 4, 1
        loop: start=0, step=1, limit=1
        $region44: #{reverse.1} parent=42 // loop_pre_header
          _
        $region45: #{reverse.1} parent=42 // loop_header
          %s61 = sphi 0, %s65
          %p62 = scmp.ge.s32.totalorder %s61, 1
          %s66 = sphi [#allocation3], [#allocation3]
          %s67 = sphi %s1, %s1
        $region46: #{reverse.1} parent=42 // loop_header_branch
          %64 = sbr.rel (%p62) target = $region50
        $region47: #{reverse.1} parent=42 // loop_body
          %v68 = vld [vmem:[%s66] sm:%s59]
          %69 = vst [vmem:[%s67] sm:%s59] %v68
        $region48: #{reverse.1} parent=42 // loop_footer
          %s65 = sadd.s32 1, %s61
        $region49: #{reverse.1} parent=42 // loop_footer_branch
          %60 = sbr.rel target = $region45
        $region50: #{reverse.1} parent=42 // loop_exit
          _
      $region43: #{reverse.1} parent=34 // pred_fallthru
        _
    $region35: #{reverse.1} parent=1 // pred_fallthru
      _
    %84 = vnop

// kernel: verification_bilstm_forward.1
$region0: #{verification_bilstm_forward.1}
  #allocation0 [shape = 'u32[]', space=smem, size = 0x4, offset = 0x4, fixed_abs, tag = 'smem constant byte address 0x4 - core index']
  #allocation1 [shape = 'u32[72,128]{1,0:T(1,128)}', space=vmem, size = 0x9000, scoped, tag = 'internal scratch']
  #allocation2 [shape = 'f32[1,1]{1,0:T(1,128)S(1)}', space=vmem, size = 0x200, scoped, tag = 'scoped memory for verification_bilstm_forward.1']
  %s0 = inlined_call_operand.vmem [shape: f32[10,2,128], index: 0, kind: input, shape index: {}]
  %s1 = inlined_call_operand.vmem [shape: f32[32,128], index: 1, kind: input, shape index: {}]
  %s2 = inlined_call_operand.vmem [shape: f32[8,4,128], index: 2, kind: input, shape index: {}]
  %s3 = inlined_call_operand.vmem [shape: f32[128,128], index: 3, kind: input, shape index: {}]
  %s4 = inlined_call_operand.vmem [shape: f32[64,32], index: 4, kind: input, shape index: {}]
  %s5 = inlined_call_operand.vmem [shape: f32[1,32], index: 5, kind: input, shape index: {}]
  %s6 = inlined_call_operand.vmem [shape: f32[1,64], index: 6, kind: input, shape index: {}]
  %s7 = inlined_call_operand.<no memory space> [shape: f32[1,1], index: 7, kind: input, shape index: {}]
  %s8 = inlined_call_operand.hbm [shape: f32[16,32], index: 8, kind: output, shape index: {0}]
  %s9 = inlined_call_operand.vmem [shape: f32[2,1], index: 9, kind: output, shape index: {1}]
  %10 = xla_tuple %s8, %s9
  %s11 = sld [smem:[#allocation0]]
  $region50: #{verification_bilstm_forward.1} parent=0
    _
  %s13 = ssub.s32 1, %s11
  %s14 = scalar_select 0, %s13, %s11
  %v15 = vstv %s7
  %16 = vst [vmem:[#allocation2] sm:$0x1] %v15
  $region1: #{verification_bilstm_forward.1} parent=0
    #allocation3 [shape = 'u8[8192]{0}', space=vmem, size = 0x2000, scoped, tag = 'output window, operand 0, single buffered']
    #allocation4 [shape = 's32[1]{0}', space=sflag, size = 0x4, scoped, tag = 'scoped memory for verification_bilstm_forward.1']
    %17 = vsyncpa [#allocation4], 0
    // Predicated region
    $region2: #{verification_bilstm_forward.1} parent=1 // pred_check
      _
    $region3: #{verification_bilstm_forward.1} parent=1 // pred_check_branch
      %19 = sbr.rel (0) target = $region5
    $region4: #{verification_bilstm_forward.1} parent=1 // pred_region
      _
    $region5: #{verification_bilstm_forward.1} parent=1 // pred_fallthru
      _
    // Predicated region
    $region6: #{verification_bilstm_forward.1} parent=1 // pred_check
      _
    $region7: #{verification_bilstm_forward.1} parent=1 // pred_check_branch
      %21 = sbr.rel (0) target = $region9
    $region8: #{verification_bilstm_forward.1} parent=1 // pred_region
      _
    $region9: #{verification_bilstm_forward.1} parent=1 // pred_fallthru
      _
    // Predicated region
    $region10: #{verification_bilstm_forward.1} parent=1 // pred_check
      _
    $region11: #{verification_bilstm_forward.1} parent=1 // pred_check_branch
      %23 = sbr.rel (0) target = $region13
    $region12: #{verification_bilstm_forward.1} parent=1 // pred_region
      _
    $region13: #{verification_bilstm_forward.1} parent=1 // pred_fallthru
      _
    // Predicated region
    $region14: #{verification_bilstm_forward.1} parent=1 // pred_check
      _
    $region15: #{verification_bilstm_forward.1} parent=1 // pred_check_branch
      %25 = sbr.rel (0) target = $region17
    $region16: #{verification_bilstm_forward.1} parent=1 // pred_region
      _
    $region17: #{verification_bilstm_forward.1} parent=1 // pred_fallthru
      _
    // Predicated region
    $region18: #{verification_bilstm_forward.1} parent=1 // pred_check
      _
    $region19: #{verification_bilstm_forward.1} parent=1 // pred_check_branch
      %27 = sbr.rel (0) target = $region21
    $region20: #{verification_bilstm_forward.1} parent=1 // pred_region
      _
    $region21: #{verification_bilstm_forward.1} parent=1 // pred_fallthru
      _
    // Predicated region
    $region22: #{verification_bilstm_forward.1} parent=1 // pred_check
      _
    $region23: #{verification_bilstm_forward.1} parent=1 // pred_check_branch
      %29 = sbr.rel (0) target = $region25
    $region24: #{verification_bilstm_forward.1} parent=1 // pred_region
      _
    $region25: #{verification_bilstm_forward.1} parent=1 // pred_fallthru
      _
    // Predicated region
    $region26: #{verification_bilstm_forward.1} parent=1 // pred_check
      _
    $region27: #{verification_bilstm_forward.1} parent=1 // pred_check_branch
      %31 = sbr.rel (0) target = $region29
    $region28: #{verification_bilstm_forward.1} parent=1 // pred_region
      _
    $region29: #{verification_bilstm_forward.1} parent=1 // pred_fallthru
      _
    // Predicated region
    $region30: #{verification_bilstm_forward.1} parent=1 // pred_check
      _
    $region31: #{verification_bilstm_forward.1} parent=1 // pred_check_branch
      %33 = sbr.rel (0) target = $region33
    $region32: #{verification_bilstm_forward.1} parent=1 // pred_region
      _
    $region33: #{verification_bilstm_forward.1} parent=1 // pred_fallthru
      _
    %v34 = vld [vmem:[%s1] sm:$0xff]
    %v35 = vld [vmem:[%s1 + $0x8] sm:$0xff]
    %v36 = vld [vmem:[%s1 + $0x10] sm:$0xff]
    %v37 = vld [vmem:[%s1 + $0x18] sm:$0xff]
    %v38 = vld [vmem:[%s0] sm:$0x3]
    %v39 = vxor.u32 %v38, 2147483648
    %v40 = vmul.f32 %v39, 1.442695
    %v41 = vpow.pop %v40
    %v42 = vadd.f32 %v41, 1.0
    %v43 = vrcp.pop %v42
    %v44 = vmul.f32 %v42, %v43
    %v45 = vsub.f32 1.0, %v44
    %v46 = vmul.f32 %v43, %v45
    %v47 = vadd.f32 %v43, %v46
    %vm48 = vweird.f32 %v42
    %vm49 = vweird.f32 %v43
    %vm50 = vmor %vm48, %vm49
    %v51 = vsel %vm50, %v43, %v47
    %v52 = vand.u32 2147483647, %v42
    %vm53 = vcmp.eq.f32.partialorder %v52, 8.507059e+37
    %v54 = vand.u32 %v42, 2147483648
    %v55 = vor.u32 1.1754944e-38, %v54
    %v56 = vsel %vm53, %v55, %v51
    %v57 = vmul.f32 1.0, %v56
    %v58 = vtanh.pop %v38
    %v59 = vmul.f32 %v57, 0.0
    %61 = vrot.lane.b32.xlu0 %v58, 64
    %v62 = vpop.permute.xlu0 %61
    %v64 = vmul.f32 %v57, %v62
    %66 = vrot.lane.b32.xlu0 %v64, 32
    %v67 = vpop.permute.xlu0 %66
    %v69 = vadd.f32 %v59, %v67
    %v70 = vtanh.pop %v69
    %72 = vrot.lane.b32.xlu0 %v70, 64
    %v73 = vpop.permute.xlu0 %72
    %v75 = vmul.f32 %v57, %v73
    %s76 = scalar_lea.vmem %s0, 2
    %v77 = vld [vmem:[%s76] sm:$0x3]
    %79 = vrot.lane.b32.xlu0 %v75, 32
    %v80 = vpop.permute.xlu0 %79
    %vm81 = vcmask 261120
    %v82 = vsel %vm81, %v80, 0
    %84 = vmatpush.msra.mxu0 0.0
    %85 = vmatpush.msra.mxu0 0.0
    %86 = vmatpush.msra.mxu0 0.0
    %87 = vmatpush.msra.mxu0 0.0
    %88 = vmatpush.msra.mxu0 0.0
    %89 = vmatpush.msra.mxu0 0.0
    %90 = vmatpush.msra.mxu0 0.0
    %91 = vmatpush.msra.mxu0 0.0
    %92 = vmatpush.msra.mxu0 0.0
    %93 = vmatpush.msra.mxu0 0.0
    %94 = vmatpush.msra.mxu0 0.0
    %95 = vmatpush.msra.mxu0 0.0
    %96 = vmatpush.msra.mxu0 %v37
    %97 = vmatpush.msra.mxu0 %v36
    %98 = vmatpush.msra.mxu0 %v35
    %99 = vmatpush.msra.mxu0 %v34
    %100 = vmatmul.f32.gmra.mxu0 %v82
    %v101 = vpop.f32.mrf.mxu0
    %v102 = vadd.f32 0.0, %v101
    %103 = vdwg.mxu0
    %v104 = vadd.f32 %v77, %v102
    %v105 = vxor.u32 %v104, 2147483648
    %v106 = vmul.f32 %v105, 1.442695
    %v107 = vpow.pop %v106
    %v108 = vadd.f32 %v107, 1.0
    %v109 = vrcp.pop %v108
    %v110 = vmul.f32 %v108, %v109
    %v111 = vsub.f32 1.0, %v110
    %v112 = vmul.f32 %v109, %v111
    %v113 = vadd.f32 %v109, %v112
    %vm114 = vweird.f32 %v108
    %vm115 = vweird.f32 %v109
    %vm116 = vmor %vm114, %vm115
    %v117 = vsel %vm116, %v109, %v113
    %v118 = vand.u32 2147483647, %v108
    %vm119 = vcmp.eq.f32.partialorder %v118, 8.507059e+37
    %v120 = vand.u32 %v108, 2147483648
    %v121 = vor.u32 1.1754944e-38, %v120
    %v122 = vsel %vm119, %v121, %v117
    %v123 = vmul.f32 1.0, %v122
    %v124 = vtanh.pop %v104
    %v125 = vmul.f32 %v123, %v69
    %127 = vrot.lane.b32.xlu0 %v124, 64
    %v128 = vpop.permute.xlu0 %127
    %v130 = vmul.f32 %v123, %v128
    %132 = vrot.lane.b32.xlu0 %v130, 32
    %v133 = vpop.permute.xlu0 %132
    %v135 = vadd.f32 %v125, %v133
    %v136 = vtanh.pop %v135
    %138 = vrot.lane.b32.xlu0 %v136, 64
    %v139 = vpop.permute.xlu0 %138
    %v141 = vmul.f32 %v123, %v139
    %s142 = scalar_lea.vmem %s0, 4
    %v143 = vld [vmem:[%s142] sm:$0x3]
    %145 = vrot.lane.b32.xlu0 %v141, 32
    %v146 = vpop.permute.xlu0 %145
    %v147 = vsel %vm81, %v146, 0
    %149 = vmatpush.msra.mxu0 0.0
    %150 = vmatpush.msra.mxu0 0.0
    %151 = vmatpush.msra.mxu0 0.0
    %152 = vmatpush.msra.mxu0 0.0
    %153 = vmatpush.msra.mxu0 0.0
    %154 = vmatpush.msra.mxu0 0.0
    %155 = vmatpush.msra.mxu0 0.0
    %156 = vmatpush.msra.mxu0 0.0
    %157 = vmatpush.msra.mxu0 0.0
    %158 = vmatpush.msra.mxu0 0.0
    %159 = vmatpush.msra.mxu0 0.0
    %160 = vmatpush.msra.mxu0 0.0
    %161 = vmatpush.msra.mxu0 %v37
    %162 = vmatpush.msra.mxu0 %v36
    %163 = vmatpush.msra.mxu0 %v35
    %164 = vmatpush.msra.mxu0 %v34
    %165 = vmatmul.f32.gmra.mxu0 %v147
    %v166 = vpop.f32.mrf.mxu0
    %v167 = vadd.f32 0.0, %v166
    %168 = vdwg.mxu0
    %v169 = vadd.f32 %v143, %v167
    %v170 = vxor.u32 %v169, 2147483648
    %v171 = vmul.f32 %v170, 1.442695
    %v172 = vpow.pop %v171
    %v173 = vadd.f32 %v172, 1.0
    %v174 = vrcp.pop %v173
    %v175 = vmul.f32 %v173, %v174
    %v176 = vsub.f32 1.0, %v175
    %v177 = vmul.f32 %v174, %v176
    %v178 = vadd.f32 %v174, %v177
    %vm179 = vweird.f32 %v173
    %vm180 = vweird.f32 %v174
    %vm181 = vmor %vm179, %vm180
    %v182 = vsel %vm181, %v174, %v178
    %v183 = vand.u32 2147483647, %v173
    %vm184 = vcmp.eq.f32.partialorder %v183, 8.507059e+37
    %v185 = vand.u32 %v173, 2147483648
    %v186 = vor.u32 1.1754944e-38, %v185
    %v187 = vsel %vm184, %v186, %v182
    %v188 = vmul.f32 1.0, %v187
    %v189 = vtanh.pop %v169
    %v190 = vmul.f32 %v188, %v135
    %192 = vrot.lane.b32.xlu0 %v189, 64
    %v193 = vpop.permute.xlu0 %192
    %v195 = vmul.f32 %v188, %v193
    %197 = vrot.lane.b32.xlu0 %v195, 32
    %v198 = vpop.permute.xlu0 %197
    %v200 = vadd.f32 %v190, %v198
    %v201 = vtanh.pop %v200
    %203 = vrot.lane.b32.xlu0 %v201, 64
    %v204 = vpop.permute.xlu0 %203
    %v206 = vmul.f32 %v188, %v204
    %s207 = scalar_lea.vmem %s0, 6
    %v208 = vld [vmem:[%s207] sm:$0x3]
    %210 = vrot.lane.b32.xlu0 %v206, 32
    %v211 = vpop.permute.xlu0 %210
    %v212 = vsel %vm81, %v211, 0
    %214 = vmatpush.msra.mxu0 0.0
    %215 = vmatpush.msra.mxu0 0.0
    %216 = vmatpush.msra.mxu0 0.0
    %217 = vmatpush.msra.mxu0 0.0
    %218 = vmatpush.msra.mxu0 0.0
    %219 = vmatpush.msra.mxu0 0.0
    %220 = vmatpush.msra.mxu0 0.0
    %221 = vmatpush.msra.mxu0 0.0
    %222 = vmatpush.msra.mxu0 0.0
    %223 = vmatpush.msra.mxu0 0.0
    %224 = vmatpush.msra.mxu0 0.0
    %225 = vmatpush.msra.mxu0 0.0
    %226 = vmatpush.msra.mxu0 %v37
    %227 = vmatpush.msra.mxu0 %v36
    %228 = vmatpush.msra.mxu0 %v35
    %229 = vmatpush.msra.mxu0 %v34
    %230 = vmatmul.f32.gmra.mxu0 %v212
    %v231 = vpop.f32.mrf.mxu0
    %v232 = vadd.f32 0.0, %v231
    %233 = vdwg.mxu0
    %v234 = vadd.f32 %v208, %v232
    %v235 = vxor.u32 %v234, 2147483648
    %v236 = vmul.f32 %v235, 1.442695
    %v237 = vpow.pop %v236
    %v238 = vadd.f32 %v237, 1.0
    %v239 = vrcp.pop %v238
    %v240 = vmul.f32 %v238, %v239
    %v241 = vsub.f32 1.0, %v240
    %v242 = vmul.f32 %v239, %v241
    %v243 = vadd.f32 %v239, %v242
    %vm244 = vweird.f32 %v238
    %vm245 = vweird.f32 %v239
    %vm246 = vmor %vm244, %vm245
    %v247 = vsel %vm246, %v239, %v243
    %v248 = vand.u32 2147483647, %v238
    %vm249 = vcmp.eq.f32.partialorder %v248, 8.507059e+37
    %v250 = vand.u32 %v238, 2147483648
    %v251 = vor.u32 1.1754944e-38, %v250
    %v252 = vsel %vm249, %v251, %v247
    %v253 = vmul.f32 1.0, %v252
    %v254 = vtanh.pop %v234
    %v255 = vmul.f32 %v253, %v200
    %257 = vrot.lane.b32.xlu0 %v254, 64
    %v258 = vpop.permute.xlu0 %257
    %v260 = vmul.f32 %v253, %v258
    %262 = vrot.lane.b32.xlu0 %v260, 32
    %v263 = vpop.permute.xlu0 %262
    %v265 = vadd.f32 %v255, %v263
    %v266 = vtanh.pop %v265
    %268 = vrot.lane.b32.xlu0 %v266, 64
    %v269 = vpop.permute.xlu0 %268
    %v271 = vmul.f32 %v253, %v269
    %s272 = scalar_lea.vmem %s0, 8
    %v273 = vld [vmem:[%s272] sm:$0x3]
    %275 = vrot.lane.b32.xlu0 %v271, 32
    %v276 = vpop.permute.xlu0 %275
    %v277 = vsel %vm81, %v276, 0
    %279 = vmatpush.msra.mxu0 0.0
    %280 = vmatpush.msra.mxu0 0.0
    %281 = vmatpush.msra.mxu0 0.0
    %282 = vmatpush.msra.mxu0 0.0
    %283 = vmatpush.msra.mxu0 0.0
    %284 = vmatpush.msra.mxu0 0.0
    %285 = vmatpush.msra.mxu0 0.0
    %286 = vmatpush.msra.mxu0 0.0
    %287 = vmatpush.msra.mxu0 0.0
    %288 = vmatpush.msra.mxu0 0.0
    %289 = vmatpush.msra.mxu0 0.0
    %290 = vmatpush.msra.mxu0 0.0
    %291 = vmatpush.msra.mxu0 %v37
    %292 = vmatpush.msra.mxu0 %v36
    %293 = vmatpush.msra.mxu0 %v35
    %294 = vmatpush.msra.mxu0 %v34
    %295 = vmatmul.f32.gmra.mxu0 %v277
    %v296 = vpop.f32.mrf.mxu0
    %v297 = vadd.f32 0.0, %v296
    %298 = vdwg.mxu0
    %v299 = vadd.f32 %v273, %v297
    %v300 = vxor.u32 %v299, 2147483648
    %v301 = vmul.f32 %v300, 1.442695
    %v302 = vpow.pop %v301
    %v303 = vadd.f32 %v302, 1.0
    %v304 = vrcp.pop %v303
    %v305 = vmul.f32 %v303, %v304
    %v306 = vsub.f32 1.0, %v305
    %v307 = vmul.f32 %v304, %v306
    %v308 = vadd.f32 %v304, %v307
    %vm309 = vweird.f32 %v303
    %vm310 = vweird.f32 %v304
    %vm311 = vmor %vm309, %vm310
    %v312 = vsel %vm311, %v304, %v308
    %v313 = vand.u32 2147483647, %v303
    %vm314 = vcmp.eq.f32.partialorder %v313, 8.507059e+37
    %v315 = vand.u32 %v303, 2147483648
    %v316 = vor.u32 1.1754944e-38, %v315
    %v317 = vsel %vm314, %v316, %v312
    %v318 = vmul.f32 1.0, %v317
    %v319 = vtanh.pop %v299
    %v320 = vmul.f32 %v318, %v265
    %322 = vrot.lane.b32.xlu0 %v319, 64
    %v323 = vpop.permute.xlu0 %322
    %v325 = vmul.f32 %v318, %v323
    %327 = vrot.lane.b32.xlu0 %v325, 32
    %v328 = vpop.permute.xlu0 %327
    %v330 = vadd.f32 %v320, %v328
    %v331 = vtanh.pop %v330
    %333 = vrot.lane.b32.xlu0 %v331, 64
    %v334 = vpop.permute.xlu0 %333
    %v336 = vmul.f32 %v318, %v334
    %s337 = scalar_lea.vmem %s0, 10
    %v338 = vld [vmem:[%s337] sm:$0x3]
    %340 = vrot.lane.b32.xlu0 %v336, 32
    %v341 = vpop.permute.xlu0 %340
    %v342 = vsel %vm81, %v341, 0
    %344 = vmatpush.msra.mxu0 0.0
    %345 = vmatpush.msra.mxu0 0.0
    %346 = vmatpush.msra.mxu0 0.0
    %347 = vmatpush.msra.mxu0 0.0
    %348 = vmatpush.msra.mxu0 0.0
    %349 = vmatpush.msra.mxu0 0.0
    %350 = vmatpush.msra.mxu0 0.0
    %351 = vmatpush.msra.mxu0 0.0
    %352 = vmatpush.msra.mxu0 0.0
    %353 = vmatpush.msra.mxu0 0.0
    %354 = vmatpush.msra.mxu0 0.0
    %355 = vmatpush.msra.mxu0 0.0
    %356 = vmatpush.msra.mxu0 %v37
    %357 = vmatpush.msra.mxu0 %v36
    %358 = vmatpush.msra.mxu0 %v35
    %359 = vmatpush.msra.mxu0 %v34
    %360 = vmatmul.f32.gmra.mxu0 %v342
    %v361 = vpop.f32.mrf.mxu0
    %v362 = vadd.f32 0.0, %v361
    %363 = vdwg.mxu0
    %v364 = vadd.f32 %v338, %v362
    %v365 = vxor.u32 %v364, 2147483648
    %v366 = vmul.f32 %v365, 1.442695
    %v367 = vpow.pop %v366
    %v368 = vadd.f32 %v367, 1.0
    %v369 = vrcp.pop %v368
    %v370 = vmul.f32 %v368, %v369
    %v371 = vsub.f32 1.0, %v370
    %v372 = vmul.f32 %v369, %v371
    %v373 = vadd.f32 %v369, %v372
    %vm374 = vweird.f32 %v368
    %vm375 = vweird.f32 %v369
    %vm376 = vmor %vm374, %vm375
    %v377 = vsel %vm376, %v369, %v373
    %v378 = vand.u32 2147483647, %v368
    %vm379 = vcmp.eq.f32.partialorder %v378, 8.507059e+37
    %v380 = vand.u32 %v368, 2147483648
    %v381 = vor.u32 1.1754944e-38, %v380
    %v382 = vsel %vm379, %v381, %v377
    %v383 = vmul.f32 1.0, %v382
    %v384 = vtanh.pop %v364
    %v385 = vmul.f32 %v383, %v330
    %387 = vrot.lane.b32.xlu0 %v384, 64
    %v388 = vpop.permute.xlu0 %387
    %v390 = vmul.f32 %v383, %v388
    %392 = vrot.lane.b32.xlu0 %v390, 32
    %v393 = vpop.permute.xlu0 %392
    %v395 = vadd.f32 %v385, %v393
    %v396 = vtanh.pop %v395
    %398 = vrot.lane.b32.xlu0 %v396, 64
    %v399 = vpop.permute.xlu0 %398
    %v401 = vmul.f32 %v383, %v399
    %s402 = scalar_lea.vmem %s0, 12
    %v403 = vld [vmem:[%s402] sm:$0x3]
    %405 = vrot.lane.b32.xlu0 %v401, 32
    %v406 = vpop.permute.xlu0 %405
    %v407 = vsel %vm81, %v406, 0
    %409 = vmatpush.msra.mxu0 0.0
    %410 = vmatpush.msra.mxu0 0.0
    %411 = vmatpush.msra.mxu0 0.0
    %412 = vmatpush.msra.mxu0 0.0
    %413 = vmatpush.msra.mxu0 0.0
    %414 = vmatpush.msra.mxu0 0.0
    %415 = vmatpush.msra.mxu0 0.0
    %416 = vmatpush.msra.mxu0 0.0
    %417 = vmatpush.msra.mxu0 0.0
    %418 = vmatpush.msra.mxu0 0.0
    %419 = vmatpush.msra.mxu0 0.0
    %420 = vmatpush.msra.mxu0 0.0
    %421 = vmatpush.msra.mxu0 %v37
    %422 = vmatpush.msra.mxu0 %v36
    %423 = vmatpush.msra.mxu0 %v35
    %424 = vmatpush.msra.mxu0 %v34
    %425 = vmatmul.f32.gmra.mxu0 %v407
    %v426 = vpop.f32.mrf.mxu0
    %v427 = vadd.f32 0.0, %v426
    %428 = vdwg.mxu0
    %v429 = vadd.f32 %v403, %v427
    %v430 = vxor.u32 %v429, 2147483648
    %v431 = vmul.f32 %v430, 1.442695
    %v432 = vpow.pop %v431
    %v433 = vadd.f32 %v432, 1.0
    %v434 = vrcp.pop %v433
    %v435 = vmul.f32 %v433, %v434
    %v436 = vsub.f32 1.0, %v435
    %v437 = vmul.f32 %v434, %v436
    %v438 = vadd.f32 %v434, %v437
    %vm439 = vweird.f32 %v433
    %vm440 = vweird.f32 %v434
    %vm441 = vmor %vm439, %vm440
    %v442 = vsel %vm441, %v434, %v438
    %v443 = vand.u32 2147483647, %v433
    %vm444 = vcmp.eq.f32.partialorder %v443, 8.507059e+37
    %v445 = vand.u32 %v433, 2147483648
    %v446 = vor.u32 1.1754944e-38, %v445
    %v447 = vsel %vm444, %v446, %v442
    %v448 = vmul.f32 1.0, %v447
    %v449 = vtanh.pop %v429
    %v450 = vmul.f32 %v448, %v395
    %452 = vrot.lane.b32.xlu0 %v449, 64
    %v453 = vpop.permute.xlu0 %452
    %v455 = vmul.f32 %v448, %v453
    %457 = vrot.lane.b32.xlu0 %v455, 32
    %v458 = vpop.permute.xlu0 %457
    %v460 = vadd.f32 %v450, %v458
    %v461 = vtanh.pop %v460
    %463 = vrot.lane.b32.xlu0 %v461, 64
    %v464 = vpop.permute.xlu0 %463
    %v466 = vmul.f32 %v448, %v464
    %s467 = scalar_lea.vmem %s0, 14
    %v468 = vld [vmem:[%s467] sm:$0x3]
    %470 = vrot.lane.b32.xlu0 %v466, 32
    %v471 = vpop.permute.xlu0 %470
    %v472 = vsel %vm81, %v471, 0
    %474 = vmatpush.msra.mxu0 0.0
    %475 = vmatpush.msra.mxu0 0.0
    %476 = vmatpush.msra.mxu0 0.0
    %477 = vmatpush.msra.mxu0 0.0
    %478 = vmatpush.msra.mxu0 0.0
    %479 = vmatpush.msra.mxu0 0.0
    %480 = vmatpush.msra.mxu0 0.0
    %481 = vmatpush.msra.mxu0 0.0
    %482 = vmatpush.msra.mxu0 0.0
    %483 = vmatpush.msra.mxu0 0.0
    %484 = vmatpush.msra.mxu0 0.0
    %485 = vmatpush.msra.mxu0 0.0
    %486 = vmatpush.msra.mxu0 %v37
    %487 = vmatpush.msra.mxu0 %v36
    %488 = vmatpush.msra.mxu0 %v35
    %489 = vmatpush.msra.mxu0 %v34
    %490 = vmatmul.f32.gmra.mxu0 %v472
    %v491 = vpop.f32.mrf.mxu0
    %v492 = vadd.f32 0.0, %v491
    %493 = vdwg.mxu0
    %v494 = vadd.f32 %v468, %v492
    %v495 = vxor.u32 %v494, 2147483648
    %v496 = vmul.f32 %v495, 1.442695
    %v497 = vpow.pop %v496
    %v498 = vadd.f32 %v497, 1.0
    %v499 = vrcp.pop %v498
    %v500 = vmul.f32 %v498, %v499
    %v501 = vsub.f32 1.0, %v500
    %v502 = vmul.f32 %v499, %v501
    %v503 = vadd.f32 %v499, %v502
    %vm504 = vweird.f32 %v498
    %vm505 = vweird.f32 %v499
    %vm506 = vmor %vm504, %vm505
    %v507 = vsel %vm506, %v499, %v503
    %v508 = vand.u32 2147483647, %v498
    %vm509 = vcmp.eq.f32.partialorder %v508, 8.507059e+37
    %v510 = vand.u32 %v498, 2147483648
    %v511 = vor.u32 1.1754944e-38, %v510
    %v512 = vsel %vm509, %v511, %v507
    %v513 = vmul.f32 1.0, %v512
    %v514 = vtanh.pop %v494
    %v515 = vmul.f32 %v513, %v460
    %517 = vrot.lane.b32.xlu0 %v514, 64
    %v518 = vpop.permute.xlu0 %517
    %v520 = vmul.f32 %v513, %v518
    %522 = vrot.lane.b32.xlu0 %v520, 32
    %v523 = vpop.permute.xlu0 %522
    %v525 = vadd.f32 %v515, %v523
    %v526 = vtanh.pop %v525
    %528 = vrot.lane.b32.xlu0 %v526, 64
    %v529 = vpop.permute.xlu0 %528
    %v531 = vmul.f32 %v513, %v529
    %s532 = scalar_lea.vmem %s0, 16
    %v533 = vld [vmem:[%s532] sm:$0x3]
    %535 = vrot.lane.b32.xlu0 %v531, 32
    %v536 = vpop.permute.xlu0 %535
    %v537 = vsel %vm81, %v536, 0
    %539 = vmatpush.msra.mxu0 0.0
    %540 = vmatpush.msra.mxu0 0.0
    %541 = vmatpush.msra.mxu0 0.0
    %542 = vmatpush.msra.mxu0 0.0
    %543 = vmatpush.msra.mxu0 0.0
    %544 = vmatpush.msra.mxu0 0.0
    %545 = vmatpush.msra.mxu0 0.0
    %546 = vmatpush.msra.mxu0 0.0
    %547 = vmatpush.msra.mxu0 0.0
    %548 = vmatpush.msra.mxu0 0.0
    %549 = vmatpush.msra.mxu0 0.0
    %550 = vmatpush.msra.mxu0 0.0
    %551 = vmatpush.msra.mxu0 %v37
    %552 = vmatpush.msra.mxu0 %v36
    %553 = vmatpush.msra.mxu0 %v35
    %554 = vmatpush.msra.mxu0 %v34
    %555 = vmatmul.f32.gmra.mxu0 %v537
    %v556 = vpop.f32.mrf.mxu0
    %v557 = vadd.f32 0.0, %v556
    %558 = vdwg.mxu0
    %v559 = vadd.f32 %v533, %v557
    %v560 = vxor.u32 %v559, 2147483648
    %v561 = vmul.f32 %v560, 1.442695
    %v562 = vpow.pop %v561
    %v563 = vadd.f32 %v562, 1.0
    %v564 = vrcp.pop %v563
    %v565 = vmul.f32 %v563, %v564
    %v566 = vsub.f32 1.0, %v565
    %v567 = vmul.f32 %v564, %v566
    %v568 = vadd.f32 %v564, %v567
    %vm569 = vweird.f32 %v563
    %vm570 = vweird.f32 %v564
    %vm571 = vmor %vm569, %vm570
    %v572 = vsel %vm571, %v564, %v568
    %v573 = vand.u32 2147483647, %v563
    %vm574 = vcmp.eq.f32.partialorder %v573, 8.507059e+37
    %v575 = vand.u32 %v563, 2147483648
    %v576 = vor.u32 1.1754944e-38, %v575
    %v577 = vsel %vm574, %v576, %v572
    %v578 = vmul.f32 1.0, %v577
    %v579 = vtanh.pop %v559
    %v580 = vmul.f32 %v578, %v525
    %582 = vrot.lane.b32.xlu0 %v579, 64
    %v583 = vpop.permute.xlu0 %582
    %v585 = vmul.f32 %v578, %v583
    %587 = vrot.lane.b32.xlu0 %v585, 32
    %v588 = vpop.permute.xlu0 %587
    %v590 = vadd.f32 %v580, %v588
    %v591 = vtanh.pop %v590
    %593 = vrot.lane.b32.xlu0 %v591, 64
    %v594 = vpop.permute.xlu0 %593
    %v596 = vmul.f32 %v578, %v594
    %s597 = scalar_lea.vmem %s0, 18
    %v598 = vld [vmem:[%s597] sm:$0x3]
    %600 = vrot.lane.b32.xlu0 %v596, 32
    %v601 = vpop.permute.xlu0 %600
    %v602 = vsel %vm81, %v601, 0
    %604 = vmatpush.msra.mxu0 0.0
    %605 = vmatpush.msra.mxu0 0.0
    %606 = vmatpush.msra.mxu0 0.0
    %607 = vmatpush.msra.mxu0 0.0
    %608 = vmatpush.msra.mxu0 0.0
    %609 = vmatpush.msra.mxu0 0.0
    %610 = vmatpush.msra.mxu0 0.0
    %611 = vmatpush.msra.mxu0 0.0
    %612 = vmatpush.msra.mxu0 0.0
    %613 = vmatpush.msra.mxu0 0.0
    %614 = vmatpush.msra.mxu0 0.0
    %615 = vmatpush.msra.mxu0 0.0
    %616 = vmatpush.msra.mxu0 %v37
    %617 = vmatpush.msra.mxu0 %v36
    %618 = vmatpush.msra.mxu0 %v35
    %619 = vmatpush.msra.mxu0 %v34
    %620 = vmatmul.f32.gmra.mxu0 %v602
    %v621 = vpop.f32.mrf.mxu0
    %v622 = vadd.f32 0.0, %v621
    %623 = vdwg.mxu0
    %v624 = vadd.f32 %v598, %v622
    %v625 = vxor.u32 %v624, 2147483648
    %v626 = vmul.f32 %v625, 1.442695
    %v627 = vpow.pop %v626
    %v628 = vadd.f32 %v627, 1.0
    %v629 = vrcp.pop %v628
    %v630 = vmul.f32 %v628, %v629
    %v631 = vsub.f32 1.0, %v630
    %v632 = vmul.f32 %v629, %v631
    %v633 = vadd.f32 %v629, %v632
    %vm634 = vweird.f32 %v628
    %vm635 = vweird.f32 %v629
    %vm636 = vmor %vm634, %vm635
    %v637 = vsel %vm636, %v629, %v633
    %v638 = vand.u32 2147483647, %v628
    %vm639 = vcmp.eq.f32.partialorder %v638, 8.507059e+37
    %v640 = vand.u32 %v628, 2147483648
    %v641 = vor.u32 1.1754944e-38, %v640
    %v642 = vsel %vm639, %v641, %v637
    %v643 = vmul.f32 1.0, %v642
    %v644 = vtanh.pop %v624
    %v645 = vmul.f32 %v643, %v590
    %647 = vrot.lane.b32.xlu0 %v644, 64
    %v648 = vpop.permute.xlu0 %647
    %v650 = vmul.f32 %v643, %v648
    %652 = vrot.lane.b32.xlu0 %v650, 32
    %v653 = vpop.permute.xlu0 %652
    %v655 = vadd.f32 %v645, %v653
    %v656 = vtanh.pop %v655
    %658 = vrot.lane.b32.xlu0 %v656, 64
    %v659 = vpop.permute.xlu0 %658
    %v661 = vmul.f32 %v643, %v659
    %v663 = vrot.slane %v75, 6
    %v664 = vrot.slane %v141, 6
    %v665 = vrot.slane %v206, 6
    %v666 = vrot.slane %v271, 6
    %v667 = vrot.slane %v336, 6
    %v668 = vrot.slane %v401, 6
    %v669 = vrot.slane %v466, 6
    %v670 = vrot.slane %v531, 6
    %v671 = vrot.slane %v596, 6
    %v672 = vrot.slane %v661, 6
    %vm683 = vcmask 1041408
    %v684 = vsel %vm683, %v75, %v663
    %v685 = vsel %vm683, %v141, %v664
    %v686 = vsel %vm683, %v206, %v665
    %v687 = vsel %vm683, %v271, %v666
    %v688 = vsel %vm683, %v336, %v667
    %v689 = vsel %vm683, %v401, %v668
    %v690 = vsel %vm683, %v466, %v669
    %v691 = vsel %vm683, %v531, %v670
    %v692 = vsel %vm683, %v596, %v671
    %v693 = vsel %vm683, %v661, %v672
    %v694 = vld [vmem:[%s3] sm:$0xff]
    %v695 = vld [vmem:[%s3 + $0x8] sm:$0xff]
    %v696 = vld [vmem:[%s3 + $0x10] sm:$0xff]
    %v697 = vld [vmem:[%s3 + $0x18] sm:$0xff]
    %v698 = vld [vmem:[%s3 + $0x20] sm:$0xff]
    %v699 = vld [vmem:[%s3 + $0x28] sm:$0xff]
    %v700 = vld [vmem:[%s3 + $0x30] sm:$0xff]
    %v701 = vld [vmem:[%s3 + $0x38] sm:$0xff]
    %v702 = vld [vmem:[%s3 + $0x40] sm:$0xff]
    %v703 = vld [vmem:[%s3 + $0x48] sm:$0xff]
    %v704 = vld [vmem:[%s3 + $0x50] sm:$0xff]
    %v705 = vld [vmem:[%s3 + $0x58] sm:$0xff]
    %v706 = vld [vmem:[%s3 + $0x60] sm:$0xff]
    %v707 = vld [vmem:[%s3 + $0x68] sm:$0xff]
    %v708 = vld [vmem:[%s3 + $0x70] sm:$0xff]
    %v709 = vld [vmem:[%s3 + $0x78] sm:$0xff]
    %v710 = vlaneseq
    %v711 = vshrl.u32 %v710, 7
    %vm712 = vcmp.lt.s32.totalorder %v711, 2
    %v714 = vrot.slane %v655, 6
    %v716 = vsel %vm683, %v655, %v714
    %v717 = vmul.f32 %v684, %v693
    %v718 = vmul.f32 %v685, %v693
    %v719 = vmul.f32 %v686, %v693
    %v720 = vmul.f32 %v687, %v693
    %v721 = vmul.f32 %v688, %v693
    %v722 = vmul.f32 %v689, %v693
    %v723 = vmul.f32 %v690, %v693
    %v724 = vmul.f32 %v691, %v693
    %v725 = vmul.f32 %v692, %v693
    %v726 = vmul.f32 %v693, %v693
    %737 = vrot.lane.b32.xlu0 %v717, 32
    %v738 = vpop.permute.xlu0 %737
    %739 = vrot.lane.b32.xlu0 %v718, 32
    %v740 = vpop.permute.xlu0 %739
    %741 = vrot.lane.b32.xlu0 %v719, 32
    %v742 = vpop.permute.xlu0 %741
    %743 = vrot.lane.b32.xlu0 %v720, 32
    %v744 = vpop.permute.xlu0 %743
    %745 = vrot.lane.b32.xlu0 %v721, 32
    %v746 = vpop.permute.xlu0 %745
    %747 = vrot.lane.b32.xlu0 %v722, 32
    %v748 = vpop.permute.xlu0 %747
    %749 = vrot.lane.b32.xlu0 %v723, 32
    %v750 = vpop.permute.xlu0 %749
    %751 = vrot.lane.b32.xlu0 %v724, 32
    %v752 = vpop.permute.xlu0 %751
    %753 = vrot.lane.b32.xlu0 %v725, 32
    %v754 = vpop.permute.xlu0 %753
    %755 = vrot.lane.b32.xlu0 %v726, 32
    %v756 = vpop.permute.xlu0 %755
    %vm767 = vcmask 257024
    %v768 = vsel %vm767, %v738, 0.0
    %769 = vadd.xlane.f32.xlu0 %v768
    %v770 = vpop.xlane.xlu0 %769
    %v771 = vsel %vm767, %v740, 0.0
    %772 = vadd.xlane.f32.xlu0 %v771
    %v773 = vpop.xlane.xlu0 %772
    %v774 = vsel %vm767, %v742, 0.0
    %775 = vadd.xlane.f32.xlu0 %v774
    %v776 = vpop.xlane.xlu0 %775
    %v777 = vsel %vm767, %v744, 0.0
    %778 = vadd.xlane.f32.xlu0 %v777
    %v779 = vpop.xlane.xlu0 %778
    %v780 = vsel %vm767, %v746, 0.0
    %781 = vadd.xlane.f32.xlu0 %v780
    %v782 = vpop.xlane.xlu0 %781
    %v783 = vsel %vm767, %v748, 0.0
    %784 = vadd.xlane.f32.xlu0 %v783
    %v785 = vpop.xlane.xlu0 %784
    %v786 = vsel %vm767, %v750, 0.0
    %787 = vadd.xlane.f32.xlu0 %v786
    %v788 = vpop.xlane.xlu0 %787
    %v789 = vsel %vm767, %v752, 0.0
    %790 = vadd.xlane.f32.xlu0 %v789
    %v791 = vpop.xlane.xlu0 %790
    %v792 = vsel %vm767, %v754, 0.0
    %793 = vadd.xlane.f32.xlu0 %v792
    %v794 = vpop.xlane.xlu0 %793
    %v795 = vsel %vm767, %v756, 0.0
    %796 = vadd.xlane.f32.xlu0 %v795
    %v797 = vpop.xlane.xlu0 %796
    %vm798 = vcmask 1043456
    %v799 = vsel %vm798, %v770, -inf
    %v800 = vsel %vm798, %v773, -inf
    %v801 = vsel %vm798, %v776, -inf
    %v802 = vsel %vm798, %v779, -inf
    %v803 = vsel %vm798, %v782, -inf
    %v804 = vmax.f32 %v799, %v803
    %v805 = vsel %vm798, %v785, -inf
    %v806 = vmax.f32 %v800, %v805
    %v807 = vsel %vm798, %v788, -inf
    %v808 = vmax.f32 %v801, %v807
    %v809 = vsel %vm798, %v791, -inf
    %v810 = vmax.f32 %v802, %v809
    %v811 = vsel %vm798, %v794, -inf
    %v812 = vmax.f32 %v804, %v811
    %v813 = vsel %vm798, %v797, -inf
    %v814 = vmax.f32 %v806, %v813
    %v815 = vmax.f32 %v812, %v814
    %v816 = vmax.f32 %v808, %v810
    %v817 = vmax.f32 %v815, %v816
    %v818 = vsub.f32 %v770, %v817
    %v819 = vsub.f32 %v773, %v817
    %v820 = vsub.f32 %v776, %v817
    %v821 = vsub.f32 %v779, %v817
    %v822 = vsub.f32 %v782, %v817
    %v823 = vsub.f32 %v785, %v817
    %v824 = vsub.f32 %v788, %v817
    %v825 = vsub.f32 %v791, %v817
    %v826 = vsub.f32 %v794, %v817
    %v827 = vsub.f32 %v797, %v817
    %v828 = vmul.f32 %v818, 1.442695
    %v829 = vpow.pop %v828
    %v830 = vmul.f32 %v819, 1.442695
    %v831 = vpow.pop %v830
    %v832 = vmul.f32 %v820, 1.442695
    %v833 = vpow.pop %v832
    %v834 = vmul.f32 %v821, 1.442695
    %v835 = vpow.pop %v834
    %v836 = vmul.f32 %v822, 1.442695
    %v837 = vpow.pop %v836
    %v838 = vmul.f32 %v823, 1.442695
    %v839 = vpow.pop %v838
    %v840 = vmul.f32 %v824, 1.442695
    %v841 = vpow.pop %v840
    %v842 = vmul.f32 %v825, 1.442695
    %v843 = vpow.pop %v842
    %v844 = vmul.f32 %v826, 1.442695
    %v845 = vpow.pop %v844
    %v846 = vmul.f32 %v827, 1.442695
    %v847 = vpow.pop %v846
    %v848 = vsel %vm798, %v829, 0.0
    %v849 = vsel %vm798, %v831, 0.0
    %v850 = vadd.f32 %v848, %v849
    %v851 = vsel %vm798, %v833, 0.0
    %v852 = vadd.f32 %v850, %v851
    %v853 = vsel %vm798, %v835, 0.0
    %v854 = vadd.f32 %v852, %v853
    %v855 = vsel %vm798, %v837, 0.0
    %v856 = vadd.f32 %v854, %v855
    %v857 = vsel %vm798, %v839, 0.0
    %v858 = vadd.f32 %v856, %v857
    %v859 = vsel %vm798, %v841, 0.0
    %v860 = vadd.f32 %v858, %v859
    %v861 = vsel %vm798, %v843, 0.0
    %v862 = vadd.f32 %v860, %v861
    %v863 = vsel %vm798, %v845, 0.0
    %v864 = vadd.f32 %v862, %v863
    %v865 = vsel %vm798, %v847, 0.0
    %v866 = vadd.f32 %v864, %v865
    %v867 = vrcp.pop %v866
    %v868 = vmul.f32 %v866, %v867
    %v869 = vsub.f32 1.0, %v868
    %v870 = vmul.f32 %v867, %v869
    %v871 = vadd.f32 %v867, %v870
    %vm872 = vweird.f32 %v866
    %vm873 = vweird.f32 %v867
    %vm874 = vmor %vm872, %vm873
    %v875 = vsel %vm874, %v867, %v871
    %v876 = vand.u32 2147483647, %v866
    %vm877 = vcmp.eq.f32.partialorder %v876, 8.507059e+37
    %v878 = vand.u32 %v866, 2147483648
    %v879 = vor.u32 1.1754944e-38, %v878
    %v880 = vsel %vm877, %v879, %v875
    %v881 = vmul.f32 %v829, %v880
    %v882 = vmul.f32 %v831, %v880
    %v883 = vmul.f32 %v833, %v880
    %v884 = vmul.f32 %v835, %v880
    %v885 = vmul.f32 %v837, %v880
    %v886 = vmul.f32 %v839, %v880
    %v887 = vmul.f32 %v841, %v880
    %v888 = vmul.f32 %v843, %v880
    %v889 = vmul.f32 %v845, %v880
    %v890 = vmul.f32 %v847, %v880
    %v891 = vmul.f32 %v684, %v881
    %v892 = vmul.f32 %v685, %v882
    %v893 = vmul.f32 %v686, %v883
    %v894 = vmul.f32 %v687, %v884
    %v895 = vmul.f32 %v688, %v885
    %v896 = vmul.f32 %v689, %v886
    %v897 = vmul.f32 %v690, %v887
    %v898 = vmul.f32 %v691, %v888
    %v899 = vmul.f32 %v692, %v889
    %v900 = vmul.f32 %v693, %v890
    %vm901 = vcmask 1044224
    %v902 = vsel %vm901, %v891, 0.0
    %v903 = vsel %vm901, %v892, 0.0
    %v904 = vadd.f32 %v902, %v903
    %v905 = vsel %vm901, %v893, 0.0
    %v906 = vadd.f32 %v904, %v905
    %v907 = vsel %vm901, %v894, 0.0
    %v908 = vadd.f32 %v906, %v907
    %v909 = vsel %vm901, %v895, 0.0
    %v910 = vadd.f32 %v908, %v909
    %v911 = vsel %vm901, %v896, 0.0
    %v912 = vadd.f32 %v910, %v911
    %v913 = vsel %vm901, %v897, 0.0
    %v914 = vadd.f32 %v912, %v913
    %v915 = vsel %vm901, %v898, 0.0
    %v916 = vadd.f32 %v914, %v915
    %v917 = vsel %vm901, %v899, 0.0
    %v918 = vadd.f32 %v916, %v917
    %v919 = vsel %vm901, %v900, 0.0
    %v920 = vadd.f32 %v918, %v919
    %922 = vrot.lane.b32.xlu0 %v920, 32
    %v923 = vpop.permute.xlu0 %922
    %926 = vrot.lane.b32.xlu0 %v693, 64
    %v927 = vpop.permute.xlu0 %926
    %v929 = vsel %vm81, %v923, %v927
    %v930 = vsel %vm712, 1, 0
    %vm931 = vcmp.eq.s32.totalorder %v930, 1
    %v932 = vsel %vm931, %v929, 0.0
    %v933 = vsub.f32 %v929, %v932
    %935 = vrot.lane.b32.xlu0 %v933, 64
    %v936 = vpop.permute.xlu0 %935
    %vm938 = vcmask 523264
    %v939 = vsel %vm938, %v932, %v936
    %940 = vmatpush.msra.mxu0 %v709
    %941 = vmatpush.msra.mxu0 %v708
    %942 = vmatpush.msra.mxu0 %v707
    %943 = vmatpush.msra.mxu0 %v706
    %944 = vmatpush.msra.mxu0 %v705
    %945 = vmatpush.msra.mxu0 %v704
    %946 = vmatpush.msra.mxu0 %v703
    %947 = vmatpush.msra.mxu0 %v702
    %948 = vmatpush.msra.mxu0 %v701
    %949 = vmatpush.msra.mxu0 %v700
    %950 = vmatpush.msra.mxu0 %v699
    %951 = vmatpush.msra.mxu0 %v698
    %952 = vmatpush.msra.mxu0 %v697
    %953 = vmatpush.msra.mxu0 %v696
    %954 = vmatpush.msra.mxu0 %v695
    %955 = vmatpush.msra.mxu0 %v694
    %956 = vmatmul.f32.gmra.mxu0 %v939
    %v957 = vpop.f32.mrf.mxu0
    %v958 = vadd.f32 0.0, %v957
    %959 = vdwg.mxu0
    %v960 = vld [vmem:[%s2] sm:$0xf]
    %v961 = vadd.f32 %v960, %v958
    %v962 = vxor.u32 %v961, 2147483648
    %v963 = vmul.f32 %v962, 1.442695
    %v964 = vpow.pop %v963
    %v965 = vadd.f32 %v964, 1.0
    %v966 = vrcp.pop %v965
    %v967 = vmul.f32 %v965, %v966
    %v968 = vsub.f32 1.0, %v967
    %v969 = vmul.f32 %v966, %v968
    %v970 = vadd.f32 %v966, %v969
    %vm971 = vweird.f32 %v965
    %vm972 = vweird.f32 %v966
    %vm973 = vmor %vm971, %vm972
    %v974 = vsel %vm973, %v966, %v970
    %v975 = vand.u32 2147483647, %v965
    %vm976 = vcmp.eq.f32.partialorder %v975, 8.507059e+37
    %v977 = vand.u32 %v965, 2147483648
    %v978 = vor.u32 1.1754944e-38, %v977
    %v979 = vsel %vm976, %v978, %v974
    %v980 = vmul.f32 1.0, %v979
    %v981 = vtanh.pop %v961
    %v982 = vmul.f32 %v980, %v716
    %984 = vrot.lane.b32.xlu0 %v981, 64
    %v985 = vpop.permute.xlu0 %984
    %v987 = vmul.f32 %v980, %v985
    %989 = vrot.lane.b32.xlu0 %v987, 32
    %v990 = vpop.permute.xlu0 %989
    %v992 = vadd.f32 %v982, %v990
    %v993 = vtanh.pop %v992
    %995 = vrot.lane.b32.xlu0 %v993, 64
    %v996 = vpop.permute.xlu0 %995
    %v998 = vmul.f32 %v980, %v996
    %v999 = vmul.f32 %v684, %v998
    %v1000 = vmul.f32 %v685, %v998
    %v1001 = vmul.f32 %v686, %v998
    %v1002 = vmul.f32 %v687, %v998
    %v1003 = vmul.f32 %v688, %v998
    %v1004 = vmul.f32 %v689, %v998
    %v1005 = vmul.f32 %v690, %v998
    %v1006 = vmul.f32 %v691, %v998
    %v1007 = vmul.f32 %v692, %v998
    %v1008 = vmul.f32 %v693, %v998
    %1019 = vrot.lane.b32.xlu0 %v999, 32
    %v1020 = vpop.permute.xlu0 %1019
    %1021 = vrot.lane.b32.xlu0 %v1000, 32
    %v1022 = vpop.permute.xlu0 %1021
    %1023 = vrot.lane.b32.xlu0 %v1001, 32
    %v1024 = vpop.permute.xlu0 %1023
    %1025 = vrot.lane.b32.xlu0 %v1002, 32
    %v1026 = vpop.permute.xlu0 %1025
    %1027 = vrot.lane.b32.xlu0 %v1003, 32
    %v1028 = vpop.permute.xlu0 %1027
    %1029 = vrot.lane.b32.xlu0 %v1004, 32
    %v1030 = vpop.permute.xlu0 %1029
    %1031 = vrot.lane.b32.xlu0 %v1005, 32
    %v1032 = vpop.permute.xlu0 %1031
    %1033 = vrot.lane.b32.xlu0 %v1006, 32
    %v1034 = vpop.permute.xlu0 %1033
    %1035 = vrot.lane.b32.xlu0 %v1007, 32
    %v1036 = vpop.permute.xlu0 %1035
    %1037 = vrot.lane.b32.xlu0 %v1008, 32
    %v1038 = vpop.permute.xlu0 %1037
    %v1049 = vsel %vm767, %v1020, 0.0
    %1050 = vadd.xlane.f32.xlu0 %v1049
    %v1051 = vpop.xlane.xlu0 %1050
    %v1052 = vsel %vm767, %v1022, 0.0
    %1053 = vadd.xlane.f32.xlu0 %v1052
    %v1054 = vpop.xlane.xlu0 %1053
    %v1055 = vsel %vm767, %v1024, 0.0
    %1056 = vadd.xlane.f32.xlu0 %v1055
    %v1057 = vpop.xlane.xlu0 %1056
    %v1058 = vsel %vm767, %v1026, 0.0
    %1059 = vadd.xlane.f32.xlu0 %v1058
    %v1060 = vpop.xlane.xlu0 %1059
    %v1061 = vsel %vm767, %v1028, 0.0
    %1062 = vadd.xlane.f32.xlu0 %v1061
    %v1063 = vpop.xlane.xlu0 %1062
    %v1064 = vsel %vm767, %v1030, 0.0
    %1065 = vadd.xlane.f32.xlu0 %v1064
    %v1066 = vpop.xlane.xlu0 %1065
    %v1067 = vsel %vm767, %v1032, 0.0
    %1068 = vadd.xlane.f32.xlu0 %v1067
    %v1069 = vpop.xlane.xlu0 %1068
    %v1070 = vsel %vm767, %v1034, 0.0
    %1071 = vadd.xlane.f32.xlu0 %v1070
    %v1072 = vpop.xlane.xlu0 %1071
    %v1073 = vsel %vm767, %v1036, 0.0
    %1074 = vadd.xlane.f32.xlu0 %v1073
    %v1075 = vpop.xlane.xlu0 %1074
    %v1076 = vsel %vm767, %v1038, 0.0
    %1077 = vadd.xlane.f32.xlu0 %v1076
    %v1078 = vpop.xlane.xlu0 %1077
    %v1079 = vsel %vm798, %v1051, -inf
    %v1080 = vsel %vm798, %v1054, -inf
    %v1081 = vsel %vm798, %v1057, -inf
    %v1082 = vsel %vm798, %v1060, -inf
    %v1083 = vsel %vm798, %v1063, -inf
    %v1084 = vmax.f32 %v1079, %v1083
    %v1085 = vsel %vm798, %v1066, -inf
    %v1086 = vmax.f32 %v1080, %v1085
    %v1087 = vsel %vm798, %v1069, -inf
    %v1088 = vmax.f32 %v1081, %v1087
    %v1089 = vsel %vm798, %v1072, -inf
    %v1090 = vmax.f32 %v1082, %v1089
    %v1091 = vsel %vm798, %v1075, -inf
    %v1092 = vmax.f32 %v1084, %v1091
    %v1093 = vsel %vm798, %v1078, -inf
    %v1094 = vmax.f32 %v1086, %v1093
    %v1095 = vmax.f32 %v1092, %v1094
    %v1096 = vmax.f32 %v1088, %v1090
    %v1097 = vmax.f32 %v1095, %v1096
    %v1098 = vsub.f32 %v1051, %v1097
    %v1099 = vsub.f32 %v1054, %v1097
    %v1100 = vsub.f32 %v1057, %v1097
    %v1101 = vsub.f32 %v1060, %v1097
    %v1102 = vsub.f32 %v1063, %v1097
    %v1103 = vsub.f32 %v1066, %v1097
    %v1104 = vsub.f32 %v1069, %v1097
    %v1105 = vsub.f32 %v1072, %v1097
    %v1106 = vsub.f32 %v1075, %v1097
    %v1107 = vsub.f32 %v1078, %v1097
    %v1108 = vmul.f32 %v1098, 1.442695
    %v1109 = vpow.pop %v1108
    %v1110 = vmul.f32 %v1099, 1.442695
    %v1111 = vpow.pop %v1110
    %v1112 = vmul.f32 %v1100, 1.442695
    %v1113 = vpow.pop %v1112
    %v1114 = vmul.f32 %v1101, 1.442695
    %v1115 = vpow.pop %v1114
    %v1116 = vmul.f32 %v1102, 1.442695
    %v1117 = vpow.pop %v1116
    %v1118 = vmul.f32 %v1103, 1.442695
    %v1119 = vpow.pop %v1118
    %v1120 = vmul.f32 %v1104, 1.442695
    %v1121 = vpow.pop %v1120
    %v1122 = vmul.f32 %v1105, 1.442695
    %v1123 = vpow.pop %v1122
    %v1124 = vmul.f32 %v1106, 1.442695
    %v1125 = vpow.pop %v1124
    %v1126 = vmul.f32 %v1107, 1.442695
    %v1127 = vpow.pop %v1126
    %v1128 = vsel %vm798, %v1109, 0.0
    %v1129 = vsel %vm798, %v1111, 0.0
    %v1130 = vadd.f32 %v1128, %v1129
    %v1131 = vsel %vm798, %v1113, 0.0
    %v1132 = vadd.f32 %v1130, %v1131
    %v1133 = vsel %vm798, %v1115, 0.0
    %v1134 = vadd.f32 %v1132, %v1133
    %v1135 = vsel %vm798, %v1117, 0.0
    %v1136 = vadd.f32 %v1134, %v1135
    %v1137 = vsel %vm798, %v1119, 0.0
    %v1138 = vadd.f32 %v1136, %v1137
    %v1139 = vsel %vm798, %v1121, 0.0
    %v1140 = vadd.f32 %v1138, %v1139
    %v1141 = vsel %vm798, %v1123, 0.0
    %v1142 = vadd.f32 %v1140, %v1141
    %v1143 = vsel %vm798, %v1125, 0.0
    %v1144 = vadd.f32 %v1142, %v1143
    %v1145 = vsel %vm798, %v1127, 0.0
    %v1146 = vadd.f32 %v1144, %v1145
    %v1147 = vrcp.pop %v1146
    %v1148 = vmul.f32 %v1146, %v1147
    %v1149 = vsub.f32 1.0, %v1148
    %v1150 = vmul.f32 %v1147, %v1149
    %v1151 = vadd.f32 %v1147, %v1150
    %vm1152 = vweird.f32 %v1146
    %vm1153 = vweird.f32 %v1147
    %vm1154 = vmor %vm1152, %vm1153
    %v1155 = vsel %vm1154, %v1147, %v1151
    %v1156 = vand.u32 2147483647, %v1146
    %vm1157 = vcmp.eq.f32.partialorder %v1156, 8.507059e+37
    %v1158 = vand.u32 %v1146, 2147483648
    %v1159 = vor.u32 1.1754944e-38, %v1158
    %v1160 = vsel %vm1157, %v1159, %v1155
    %v1161 = vmul.f32 %v1109, %v1160
    %v1162 = vmul.f32 %v1111, %v1160
    %v1163 = vmul.f32 %v1113, %v1160
    %v1164 = vmul.f32 %v1115, %v1160
    %v1165 = vmul.f32 %v1117, %v1160
    %v1166 = vmul.f32 %v1119, %v1160
    %v1167 = vmul.f32 %v1121, %v1160
    %v1168 = vmul.f32 %v1123, %v1160
    %v1169 = vmul.f32 %v1125, %v1160
    %v1170 = vmul.f32 %v1127, %v1160
    %v1171 = vmul.f32 %v684, %v1161
    %v1172 = vmul.f32 %v685, %v1162
    %v1173 = vmul.f32 %v686, %v1163
    %v1174 = vmul.f32 %v687, %v1164
    %v1175 = vmul.f32 %v688, %v1165
    %v1176 = vmul.f32 %v689, %v1166
    %v1177 = vmul.f32 %v690, %v1167
    %v1178 = vmul.f32 %v691, %v1168
    %v1179 = vmul.f32 %v692, %v1169
    %v1180 = vmul.f32 %v693, %v1170
    %v1181 = vsel %vm901, %v1171, 0.0
    %v1182 = vsel %vm901, %v1172, 0.0
    %v1183 = vadd.f32 %v1181, %v1182
    %v1184 = vsel %vm901, %v1173, 0.0
    %v1185 = vadd.f32 %v1183, %v1184
    %v1186 = vsel %vm901, %v1174, 0.0
    %v1187 = vadd.f32 %v1185, %v1186
    %v1188 = vsel %vm901, %v1175, 0.0
    %v1189 = vadd.f32 %v1187, %v1188
    %v1190 = vsel %vm901, %v1176, 0.0
    %v1191 = vadd.f32 %v1189, %v1190
    %v1192 = vsel %vm901, %v1177, 0.0
    %v1193 = vadd.f32 %v1191, %v1192
    %v1194 = vsel %vm901, %v1178, 0.0
    %v1195 = vadd.f32 %v1193, %v1194
    %v1196 = vsel %vm901, %v1179, 0.0
    %v1197 = vadd.f32 %v1195, %v1196
    %v1198 = vsel %vm901, %v1180, 0.0
    %v1199 = vadd.f32 %v1197, %v1198
    %1201 = vrot.lane.b32.xlu0 %v1199, 32
    %v1202 = vpop.permute.xlu0 %1201
    %1205 = vrot.lane.b32.xlu0 %v998, 64
    %v1206 = vpop.permute.xlu0 %1205
    %v1208 = vsel %vm81, %v1202, %v1206
    %v1209 = vsel %vm931, %v1208, 0.0
    %v1210 = vsub.f32 %v1208, %v1209
    %1212 = vrot.lane.b32.xlu0 %v1210, 64
    %v1213 = vpop.permute.xlu0 %1212
    %v1215 = vsel %vm938, %v1209, %v1213
    %1216 = vmatpush.msra.mxu0 %v709
    %1217 = vmatpush.msra.mxu0 %v708
    %1218 = vmatpush.msra.mxu0 %v707
    %1219 = vmatpush.msra.mxu0 %v706
    %1220 = vmatpush.msra.mxu0 %v705
    %1221 = vmatpush.msra.mxu0 %v704
    %1222 = vmatpush.msra.mxu0 %v703
    %1223 = vmatpush.msra.mxu0 %v702
    %1224 = vmatpush.msra.mxu0 %v701
    %1225 = vmatpush.msra.mxu0 %v700
    %1226 = vmatpush.msra.mxu0 %v699
    %1227 = vmatpush.msra.mxu0 %v698
    %1228 = vmatpush.msra.mxu0 %v697
    %1229 = vmatpush.msra.mxu0 %v696
    %1230 = vmatpush.msra.mxu0 %v695
    %1231 = vmatpush.msra.mxu0 %v694
    %1232 = vmatmul.f32.gmra.mxu0 %v1215
    %v1233 = vpop.f32.mrf.mxu0
    %v1234 = vadd.f32 0.0, %v1233
    %1235 = vdwg.mxu0
    %s1236 = scalar_lea.vmem %s2, 4
    %v1237 = vld [vmem:[%s1236] sm:$0xf]
    %v1238 = vadd.f32 %v1237, %v1234
    %v1239 = vxor.u32 %v1238, 2147483648
    %v1240 = vmul.f32 %v1239, 1.442695
    %v1241 = vpow.pop %v1240
    %v1242 = vadd.f32 %v1241, 1.0
    %v1243 = vrcp.pop %v1242
    %v1244 = vmul.f32 %v1242, %v1243
    %v1245 = vsub.f32 1.0, %v1244
    %v1246 = vmul.f32 %v1243, %v1245
    %v1247 = vadd.f32 %v1243, %v1246
    %vm1248 = vweird.f32 %v1242
    %vm1249 = vweird.f32 %v1243
    %vm1250 = vmor %vm1248, %vm1249
    %v1251 = vsel %vm1250, %v1243, %v1247
    %v1252 = vand.u32 2147483647, %v1242
    %vm1253 = vcmp.eq.f32.partialorder %v1252, 8.507059e+37
    %v1254 = vand.u32 %v1242, 2147483648
    %v1255 = vor.u32 1.1754944e-38, %v1254
    %v1256 = vsel %vm1253, %v1255, %v1251
    %v1257 = vmul.f32 1.0, %v1256
    %v1258 = vtanh.pop %v1238
    %v1259 = vmul.f32 %v1257, %v992
    %1261 = vrot.lane.b32.xlu0 %v1258, 64
    %v1262 = vpop.permute.xlu0 %1261
    %v1264 = vmul.f32 %v1257, %v1262
    %1266 = vrot.lane.b32.xlu0 %v1264, 32
    %v1267 = vpop.permute.xlu0 %1266
    %v1269 = vadd.f32 %v1259, %v1267
    %v1270 = vtanh.pop %v1269
    %1272 = vrot.lane.b32.xlu0 %v1270, 64
    %v1273 = vpop.permute.xlu0 %1272
    %v1275 = vmul.f32 %v1257, %v1273
    %v1276 = vmul.f32 %v684, %v1275
    %v1277 = vmul.f32 %v685, %v1275
    %v1278 = vmul.f32 %v686, %v1275
    %v1279 = vmul.f32 %v687, %v1275
    %v1280 = vmul.f32 %v688, %v1275
    %v1281 = vmul.f32 %v689, %v1275
    %v1282 = vmul.f32 %v690, %v1275
    %v1283 = vmul.f32 %v691, %v1275
    %v1284 = vmul.f32 %v692, %v1275
    %v1285 = vmul.f32 %v693, %v1275
    %1296 = vrot.lane.b32.xlu0 %v1276, 32
    %v1297 = vpop.permute.xlu0 %1296
    %1298 = vrot.lane.b32.xlu0 %v1277, 32
    %v1299 = vpop.permute.xlu0 %1298
    %1300 = vrot.lane.b32.xlu0 %v1278, 32
    %v1301 = vpop.permute.xlu0 %1300
    %1302 = vrot.lane.b32.xlu0 %v1279, 32
    %v1303 = vpop.permute.xlu0 %1302
    %1304 = vrot.lane.b32.xlu0 %v1280, 32
    %v1305 = vpop.permute.xlu0 %1304
    %1306 = vrot.lane.b32.xlu0 %v1281, 32
    %v1307 = vpop.permute.xlu0 %1306
    %1308 = vrot.lane.b32.xlu0 %v1282, 32
    %v1309 = vpop.permute.xlu0 %1308
    %1310 = vrot.lane.b32.xlu0 %v1283, 32
    %v1311 = vpop.permute.xlu0 %1310
    %1312 = vrot.lane.b32.xlu0 %v1284, 32
    %v1313 = vpop.permute.xlu0 %1312
    %1314 = vrot.lane.b32.xlu0 %v1285, 32
    %v1315 = vpop.permute.xlu0 %1314
    %v1326 = vsel %vm767, %v1297, 0.0
    %1327 = vadd.xlane.f32.xlu0 %v1326
    %v1328 = vpop.xlane.xlu0 %1327
    %v1329 = vsel %vm767, %v1299, 0.0
    %1330 = vadd.xlane.f32.xlu0 %v1329
    %v1331 = vpop.xlane.xlu0 %1330
    %v1332 = vsel %vm767, %v1301, 0.0
    %1333 = vadd.xlane.f32.xlu0 %v1332
    %v1334 = vpop.xlane.xlu0 %1333
    %v1335 = vsel %vm767, %v1303, 0.0
    %1336 = vadd.xlane.f32.xlu0 %v1335
    %v1337 = vpop.xlane.xlu0 %1336
    %v1338 = vsel %vm767, %v1305, 0.0
    %1339 = vadd.xlane.f32.xlu0 %v1338
    %v1340 = vpop.xlane.xlu0 %1339
    %v1341 = vsel %vm767, %v1307, 0.0
    %1342 = vadd.xlane.f32.xlu0 %v1341
    %v1343 = vpop.xlane.xlu0 %1342
    %v1344 = vsel %vm767, %v1309, 0.0
    %1345 = vadd.xlane.f32.xlu0 %v1344
    %v1346 = vpop.xlane.xlu0 %1345
    %v1347 = vsel %vm767, %v1311, 0.0
    %1348 = vadd.xlane.f32.xlu0 %v1347
    %v1349 = vpop.xlane.xlu0 %1348
    %v1350 = vsel %vm767, %v1313, 0.0
    %1351 = vadd.xlane.f32.xlu0 %v1350
    %v1352 = vpop.xlane.xlu0 %1351
    %v1353 = vsel %vm767, %v1315, 0.0
    %1354 = vadd.xlane.f32.xlu0 %v1353
    %v1355 = vpop.xlane.xlu0 %1354
    %v1356 = vsel %vm798, %v1328, -inf
    %v1357 = vsel %vm798, %v1331, -inf
    %v1358 = vsel %vm798, %v1334, -inf
    %v1359 = vsel %vm798, %v1337, -inf
    %v1360 = vsel %vm798, %v1340, -inf
    %v1361 = vmax.f32 %v1356, %v1360
    %v1362 = vsel %vm798, %v1343, -inf
    %v1363 = vmax.f32 %v1357, %v1362
    %v1364 = vsel %vm798, %v1346, -inf
    %v1365 = vmax.f32 %v1358, %v1364
    %v1366 = vsel %vm798, %v1349, -inf
    %v1367 = vmax.f32 %v1359, %v1366
    %v1368 = vsel %vm798, %v1352, -inf
    %v1369 = vmax.f32 %v1361, %v1368
    %v1370 = vsel %vm798, %v1355, -inf
    %v1371 = vmax.f32 %v1363, %v1370
    %v1372 = vmax.f32 %v1369, %v1371
    %v1373 = vmax.f32 %v1365, %v1367
    %v1374 = vmax.f32 %v1372, %v1373
    %v1375 = vsub.f32 %v1328, %v1374
    %v1376 = vsub.f32 %v1331, %v1374
    %v1377 = vsub.f32 %v1334, %v1374
    %v1378 = vsub.f32 %v1337, %v1374
    %v1379 = vsub.f32 %v1340, %v1374
    %v1380 = vsub.f32 %v1343, %v1374
    %v1381 = vsub.f32 %v1346, %v1374
    %v1382 = vsub.f32 %v1349, %v1374
    %v1383 = vsub.f32 %v1352, %v1374
    %v1384 = vsub.f32 %v1355, %v1374
    %v1385 = vmul.f32 %v1375, 1.442695
    %v1386 = vpow.pop %v1385
    %v1387 = vmul.f32 %v1376, 1.442695
    %v1388 = vpow.pop %v1387
    %v1389 = vmul.f32 %v1377, 1.442695
    %v1390 = vpow.pop %v1389
    %v1391 = vmul.f32 %v1378, 1.442695
    %v1392 = vpow.pop %v1391
    %v1393 = vmul.f32 %v1379, 1.442695
    %v1394 = vpow.pop %v1393
    %v1395 = vmul.f32 %v1380, 1.442695
    %v1396 = vpow.pop %v1395
    %v1397 = vmul.f32 %v1381, 1.442695
    %v1398 = vpow.pop %v1397
    %v1399 = vmul.f32 %v1382, 1.442695
    %v1400 = vpow.pop %v1399
    %v1401 = vmul.f32 %v1383, 1.442695
    %v1402 = vpow.pop %v1401
    %v1403 = vmul.f32 %v1384, 1.442695
    %v1404 = vpow.pop %v1403
    %v1405 = vsel %vm798, %v1386, 0.0
    %v1406 = vsel %vm798, %v1388, 0.0
    %v1407 = vadd.f32 %v1405, %v1406
    %v1408 = vsel %vm798, %v1390, 0.0
    %v1409 = vadd.f32 %v1407, %v1408
    %v1410 = vsel %vm798, %v1392, 0.0
    %v1411 = vadd.f32 %v1409, %v1410
    %v1412 = vsel %vm798, %v1394, 0.0
    %v1413 = vadd.f32 %v1411, %v1412
    %v1414 = vsel %vm798, %v1396, 0.0
    %v1415 = vadd.f32 %v1413, %v1414
    %v1416 = vsel %vm798, %v1398, 0.0
    %v1417 = vadd.f32 %v1415, %v1416
    %v1418 = vsel %vm798, %v1400, 0.0
    %v1419 = vadd.f32 %v1417, %v1418
    %v1420 = vsel %vm798, %v1402, 0.0
    %v1421 = vadd.f32 %v1419, %v1420
    %v1422 = vsel %vm798, %v1404, 0.0
    %v1423 = vadd.f32 %v1421, %v1422
    %v1424 = vrcp.pop %v1423
    %v1425 = vmul.f32 %v1423, %v1424
    %v1426 = vsub.f32 1.0, %v1425
    %v1427 = vmul.f32 %v1424, %v1426
    %v1428 = vadd.f32 %v1424, %v1427
    %vm1429 = vweird.f32 %v1423
    %vm1430 = vweird.f32 %v1424
    %vm1431 = vmor %vm1429, %vm1430
    %v1432 = vsel %vm1431, %v1424, %v1428
    %v1433 = vand.u32 2147483647, %v1423
    %vm1434 = vcmp.eq.f32.partialorder %v1433, 8.507059e+37
    %v1435 = vand.u32 %v1423, 2147483648
    %v1436 = vor.u32 1.1754944e-38, %v1435
    %v1437 = vsel %vm1434, %v1436, %v1432
    %v1438 = vmul.f32 %v1386, %v1437
    %v1439 = vmul.f32 %v1388, %v1437
    %v1440 = vmul.f32 %v1390, %v1437
    %v1441 = vmul.f32 %v1392, %v1437
    %v1442 = vmul.f32 %v1394, %v1437
    %v1443 = vmul.f32 %v1396, %v1437
    %v1444 = vmul.f32 %v1398, %v1437
    %v1445 = vmul.f32 %v1400, %v1437
    %v1446 = vmul.f32 %v1402, %v1437
    %v1447 = vmul.f32 %v1404, %v1437
    %v1448 = vmul.f32 %v684, %v1438
    %v1449 = vmul.f32 %v685, %v1439
    %v1450 = vmul.f32 %v686, %v1440
    %v1451 = vmul.f32 %v687, %v1441
    %v1452 = vmul.f32 %v688, %v1442
    %v1453 = vmul.f32 %v689, %v1443
    %v1454 = vmul.f32 %v690, %v1444
    %v1455 = vmul.f32 %v691, %v1445
    %v1456 = vmul.f32 %v692, %v1446
    %v1457 = vmul.f32 %v693, %v1447
    %v1458 = vsel %vm901, %v1448, 0.0
    %v1459 = vsel %vm901, %v1449, 0.0
    %v1460 = vadd.f32 %v1458, %v1459
    %v1461 = vsel %vm901, %v1450, 0.0
    %v1462 = vadd.f32 %v1460, %v1461
    %v1463 = vsel %vm901, %v1451, 0.0
    %v1464 = vadd.f32 %v1462, %v1463
    %v1465 = vsel %vm901, %v1452, 0.0
    %v1466 = vadd.f32 %v1464, %v1465
    %v1467 = vsel %vm901, %v1453, 0.0
    %v1468 = vadd.f32 %v1466, %v1467
    %v1469 = vsel %vm901, %v1454, 0.0
    %v1470 = vadd.f32 %v1468, %v1469
    %v1471 = vsel %vm901, %v1455, 0.0
    %v1472 = vadd.f32 %v1470, %v1471
    %v1473 = vsel %vm901, %v1456, 0.0
    %v1474 = vadd.f32 %v1472, %v1473
    %v1475 = vsel %vm901, %v1457, 0.0
    %v1476 = vadd.f32 %v1474, %v1475
    %1478 = vrot.lane.b32.xlu0 %v1476, 32
    %v1479 = vpop.permute.xlu0 %1478
    %1482 = vrot.lane.b32.xlu0 %v1275, 64
    %v1483 = vpop.permute.xlu0 %1482
    %v1485 = vsel %vm81, %v1479, %v1483
    %v1486 = vsel %vm931, %v1485, 0.0
    %v1487 = vsub.f32 %v1485, %v1486
    %1489 = vrot.lane.b32.xlu0 %v1487, 64
    %v1490 = vpop.permute.xlu0 %1489
    %v1492 = vsel %vm938, %v1486, %v1490
    %1493 = vmatpush.msra.mxu0 %v709
    %1494 = vmatpush.msra.mxu0 %v708
    %1495 = vmatpush.msra.mxu0 %v707
    %1496 = vmatpush.msra.mxu0 %v706
    %1497 = vmatpush.msra.mxu0 %v705
    %1498 = vmatpush.msra.mxu0 %v704
    %1499 = vmatpush.msra.mxu0 %v703
    %1500 = vmatpush.msra.mxu0 %v702
    %1501 = vmatpush.msra.mxu0 %v701
    %1502 = vmatpush.msra.mxu0 %v700
    %1503 = vmatpush.msra.mxu0 %v699
    %1504 = vmatpush.msra.mxu0 %v698
    %1505 = vmatpush.msra.mxu0 %v697
    %1506 = vmatpush.msra.mxu0 %v696
    %1507 = vmatpush.msra.mxu0 %v695
    %1508 = vmatpush.msra.mxu0 %v694
    %1509 = vmatmul.f32.gmra.mxu0 %v1492
    %v1510 = vpop.f32.mrf.mxu0
    %v1511 = vadd.f32 0.0, %v1510
    %1512 = vdwg.mxu0
    %s1513 = scalar_lea.vmem %s2, 8
    %v1514 = vld [vmem:[%s1513] sm:$0xf]
    %v1515 = vadd.f32 %v1514, %v1511
    %v1516 = vxor.u32 %v1515, 2147483648
    %v1517 = vmul.f32 %v1516, 1.442695
    %v1518 = vpow.pop %v1517
    %v1519 = vadd.f32 %v1518, 1.0
    %v1520 = vrcp.pop %v1519
    %v1521 = vmul.f32 %v1519, %v1520
    %v1522 = vsub.f32 1.0, %v1521
    %v1523 = vmul.f32 %v1520, %v1522
    %v1524 = vadd.f32 %v1520, %v1523
    %vm1525 = vweird.f32 %v1519
    %vm1526 = vweird.f32 %v1520
    %vm1527 = vmor %vm1525, %vm1526
    %v1528 = vsel %vm1527, %v1520, %v1524
    %v1529 = vand.u32 2147483647, %v1519
    %vm1530 = vcmp.eq.f32.partialorder %v1529, 8.507059e+37
    %v1531 = vand.u32 %v1519, 2147483648
    %v1532 = vor.u32 1.1754944e-38, %v1531
    %v1533 = vsel %vm1530, %v1532, %v1528
    %v1534 = vmul.f32 1.0, %v1533
    %v1535 = vtanh.pop %v1515
    %v1536 = vmul.f32 %v1534, %v1269
    %1538 = vrot.lane.b32.xlu0 %v1535, 64
    %v1539 = vpop.permute.xlu0 %1538
    %v1541 = vmul.f32 %v1534, %v1539
    %1543 = vrot.lane.b32.xlu0 %v1541, 32
    %v1544 = vpop.permute.xlu0 %1543
    %v1546 = vadd.f32 %v1536, %v1544
    %v1547 = vtanh.pop %v1546
    %1549 = vrot.lane.b32.xlu0 %v1547, 64
    %v1550 = vpop.permute.xlu0 %1549
    %v1552 = vmul.f32 %v1534, %v1550
    %v1553 = vmul.f32 %v684, %v1552
    %v1554 = vmul.f32 %v685, %v1552
    %v1555 = vmul.f32 %v686, %v1552
    %v1556 = vmul.f32 %v687, %v1552
    %v1557 = vmul.f32 %v688, %v1552
    %v1558 = vmul.f32 %v689, %v1552
    %v1559 = vmul.f32 %v690, %v1552
    %v1560 = vmul.f32 %v691, %v1552
    %v1561 = vmul.f32 %v692, %v1552
    %v1562 = vmul.f32 %v693, %v1552
    %1573 = vrot.lane.b32.xlu0 %v1553, 32
    %v1574 = vpop.permute.xlu0 %1573
    %1575 = vrot.lane.b32.xlu0 %v1554, 32
    %v1576 = vpop.permute.xlu0 %1575
    %1577 = vrot.lane.b32.xlu0 %v1555, 32
    %v1578 = vpop.permute.xlu0 %1577
    %1579 = vrot.lane.b32.xlu0 %v1556, 32
    %v1580 = vpop.permute.xlu0 %1579
    %1581 = vrot.lane.b32.xlu0 %v1557, 32
    %v1582 = vpop.permute.xlu0 %1581
    %1583 = vrot.lane.b32.xlu0 %v1558, 32
    %v1584 = vpop.permute.xlu0 %1583
    %1585 = vrot.lane.b32.xlu0 %v1559, 32
    %v1586 = vpop.permute.xlu0 %1585
    %1587 = vrot.lane.b32.xlu0 %v1560, 32
    %v1588 = vpop.permute.xlu0 %1587
    %1589 = vrot.lane.b32.xlu0 %v1561, 32
    %v1590 = vpop.permute.xlu0 %1589
    %1591 = vrot.lane.b32.xlu0 %v1562, 32
    %v1592 = vpop.permute.xlu0 %1591
    %v1603 = vsel %vm767, %v1574, 0.0
    %1604 = vadd.xlane.f32.xlu0 %v1603
    %v1605 = vpop.xlane.xlu0 %1604
    %v1606 = vsel %vm767, %v1576, 0.0
    %1607 = vadd.xlane.f32.xlu0 %v1606
    %v1608 = vpop.xlane.xlu0 %1607
    %v1609 = vsel %vm767, %v1578, 0.0
    %1610 = vadd.xlane.f32.xlu0 %v1609
    %v1611 = vpop.xlane.xlu0 %1610
    %v1612 = vsel %vm767, %v1580, 0.0
    %1613 = vadd.xlane.f32.xlu0 %v1612
    %v1614 = vpop.xlane.xlu0 %1613
    %v1615 = vsel %vm767, %v1582, 0.0
    %1616 = vadd.xlane.f32.xlu0 %v1615
    %v1617 = vpop.xlane.xlu0 %1616
    %v1618 = vsel %vm767, %v1584, 0.0
    %1619 = vadd.xlane.f32.xlu0 %v1618
    %v1620 = vpop.xlane.xlu0 %1619
    %v1621 = vsel %vm767, %v1586, 0.0
    %1622 = vadd.xlane.f32.xlu0 %v1621
    %v1623 = vpop.xlane.xlu0 %1622
    %v1624 = vsel %vm767, %v1588, 0.0
    %1625 = vadd.xlane.f32.xlu0 %v1624
    %v1626 = vpop.xlane.xlu0 %1625
    %v1627 = vsel %vm767, %v1590, 0.0
    %1628 = vadd.xlane.f32.xlu0 %v1627
    %v1629 = vpop.xlane.xlu0 %1628
    %v1630 = vsel %vm767, %v1592, 0.0
    %1631 = vadd.xlane.f32.xlu0 %v1630
    %v1632 = vpop.xlane.xlu0 %1631
    %v1633 = vsel %vm798, %v1605, -inf
    %v1634 = vsel %vm798, %v1608, -inf
    %v1635 = vsel %vm798, %v1611, -inf
    %v1636 = vsel %vm798, %v1614, -inf
    %v1637 = vsel %vm798, %v1617, -inf
    %v1638 = vmax.f32 %v1633, %v1637
    %v1639 = vsel %vm798, %v1620, -inf
    %v1640 = vmax.f32 %v1634, %v1639
    %v1641 = vsel %vm798, %v1623, -inf
    %v1642 = vmax.f32 %v1635, %v1641
    %v1643 = vsel %vm798, %v1626, -inf
    %v1644 = vmax.f32 %v1636, %v1643
    %v1645 = vsel %vm798, %v1629, -inf
    %v1646 = vmax.f32 %v1638, %v1645
    %v1647 = vsel %vm798, %v1632, -inf
    %v1648 = vmax.f32 %v1640, %v1647
    %v1649 = vmax.f32 %v1646, %v1648
    %v1650 = vmax.f32 %v1642, %v1644
    %v1651 = vmax.f32 %v1649, %v1650
    %v1652 = vsub.f32 %v1605, %v1651
    %v1653 = vsub.f32 %v1608, %v1651
    %v1654 = vsub.f32 %v1611, %v1651
    %v1655 = vsub.f32 %v1614, %v1651
    %v1656 = vsub.f32 %v1617, %v1651
    %v1657 = vsub.f32 %v1620, %v1651
    %v1658 = vsub.f32 %v1623, %v1651
    %v1659 = vsub.f32 %v1626, %v1651
    %v1660 = vsub.f32 %v1629, %v1651
    %v1661 = vsub.f32 %v1632, %v1651
    %v1662 = vmul.f32 %v1652, 1.442695
    %v1663 = vpow.pop %v1662
    %v1664 = vmul.f32 %v1653, 1.442695
    %v1665 = vpow.pop %v1664
    %v1666 = vmul.f32 %v1654, 1.442695
    %v1667 = vpow.pop %v1666
    %v1668 = vmul.f32 %v1655, 1.442695
    %v1669 = vpow.pop %v1668
    %v1670 = vmul.f32 %v1656, 1.442695
    %v1671 = vpow.pop %v1670
    %v1672 = vmul.f32 %v1657, 1.442695
    %v1673 = vpow.pop %v1672
    %v1674 = vmul.f32 %v1658, 1.442695
    %v1675 = vpow.pop %v1674
    %v1676 = vmul.f32 %v1659, 1.442695
    %v1677 = vpow.pop %v1676
    %v1678 = vmul.f32 %v1660, 1.442695
    %v1679 = vpow.pop %v1678
    %v1680 = vmul.f32 %v1661, 1.442695
    %v1681 = vpow.pop %v1680
    %v1682 = vsel %vm798, %v1663, 0.0
    %v1683 = vsel %vm798, %v1665, 0.0
    %v1684 = vadd.f32 %v1682, %v1683
    %v1685 = vsel %vm798, %v1667, 0.0
    %v1686 = vadd.f32 %v1684, %v1685
    %v1687 = vsel %vm798, %v1669, 0.0
    %v1688 = vadd.f32 %v1686, %v1687
    %v1689 = vsel %vm798, %v1671, 0.0
    %v1690 = vadd.f32 %v1688, %v1689
    %v1691 = vsel %vm798, %v1673, 0.0
    %v1692 = vadd.f32 %v1690, %v1691
    %v1693 = vsel %vm798, %v1675, 0.0
    %v1694 = vadd.f32 %v1692, %v1693
    %v1695 = vsel %vm798, %v1677, 0.0
    %v1696 = vadd.f32 %v1694, %v1695
    %v1697 = vsel %vm798, %v1679, 0.0
    %v1698 = vadd.f32 %v1696, %v1697
    %v1699 = vsel %vm798, %v1681, 0.0
    %v1700 = vadd.f32 %v1698, %v1699
    %v1701 = vrcp.pop %v1700
    %v1702 = vmul.f32 %v1700, %v1701
    %v1703 = vsub.f32 1.0, %v1702
    %v1704 = vmul.f32 %v1701, %v1703
    %v1705 = vadd.f32 %v1701, %v1704
    %vm1706 = vweird.f32 %v1700
    %vm1707 = vweird.f32 %v1701
    %vm1708 = vmor %vm1706, %vm1707
    %v1709 = vsel %vm1708, %v1701, %v1705
    %v1710 = vand.u32 2147483647, %v1700
    %vm1711 = vcmp.eq.f32.partialorder %v1710, 8.507059e+37
    %v1712 = vand.u32 %v1700, 2147483648
    %v1713 = vor.u32 1.1754944e-38, %v1712
    %v1714 = vsel %vm1711, %v1713, %v1709
    %v1715 = vmul.f32 %v1663, %v1714
    %v1716 = vmul.f32 %v1665, %v1714
    %v1717 = vmul.f32 %v1667, %v1714
    %v1718 = vmul.f32 %v1669, %v1714
    %v1719 = vmul.f32 %v1671, %v1714
    %v1720 = vmul.f32 %v1673, %v1714
    %v1721 = vmul.f32 %v1675, %v1714
    %v1722 = vmul.f32 %v1677, %v1714
    %v1723 = vmul.f32 %v1679, %v1714
    %v1724 = vmul.f32 %v1681, %v1714
    %v1725 = vmul.f32 %v684, %v1715
    %v1726 = vmul.f32 %v685, %v1716
    %v1727 = vmul.f32 %v686, %v1717
    %v1728 = vmul.f32 %v687, %v1718
    %v1729 = vmul.f32 %v688, %v1719
    %v1730 = vmul.f32 %v689, %v1720
    %v1731 = vmul.f32 %v690, %v1721
    %v1732 = vmul.f32 %v691, %v1722
    %v1733 = vmul.f32 %v692, %v1723
    %v1734 = vmul.f32 %v693, %v1724
    %v1735 = vsel %vm901, %v1725, 0.0
    %v1736 = vsel %vm901, %v1726, 0.0
    %v1737 = vadd.f32 %v1735, %v1736
    %v1738 = vsel %vm901, %v1727, 0.0
    %v1739 = vadd.f32 %v1737, %v1738
    %v1740 = vsel %vm901, %v1728, 0.0
    %v1741 = vadd.f32 %v1739, %v1740
    %v1742 = vsel %vm901, %v1729, 0.0
    %v1743 = vadd.f32 %v1741, %v1742
    %v1744 = vsel %vm901, %v1730, 0.0
    %v1745 = vadd.f32 %v1743, %v1744
    %v1746 = vsel %vm901, %v1731, 0.0
    %v1747 = vadd.f32 %v1745, %v1746
    %v1748 = vsel %vm901, %v1732, 0.0
    %v1749 = vadd.f32 %v1747, %v1748
    %v1750 = vsel %vm901, %v1733, 0.0
    %v1751 = vadd.f32 %v1749, %v1750
    %v1752 = vsel %vm901, %v1734, 0.0
    %v1753 = vadd.f32 %v1751, %v1752
    %1755 = vrot.lane.b32.xlu0 %v1753, 32
    %v1756 = vpop.permute.xlu0 %1755
    %1759 = vrot.lane.b32.xlu0 %v1552, 64
    %v1760 = vpop.permute.xlu0 %1759
    %v1762 = vsel %vm81, %v1756, %v1760
    %v1763 = vsel %vm931, %v1762, 0.0
    %v1764 = vsub.f32 %v1762, %v1763
    %1766 = vrot.lane.b32.xlu0 %v1764, 64
    %v1767 = vpop.permute.xlu0 %1766
    %v1769 = vsel %vm938, %v1763, %v1767
    %1770 = vmatpush.msra.mxu0 %v709
    %1771 = vmatpush.msra.mxu0 %v708
    %1772 = vmatpush.msra.mxu0 %v707
    %1773 = vmatpush.msra.mxu0 %v706
    %1774 = vmatpush.msra.mxu0 %v705
    %1775 = vmatpush.msra.mxu0 %v704
    %1776 = vmatpush.msra.mxu0 %v703
    %1777 = vmatpush.msra.mxu0 %v702
    %1778 = vmatpush.msra.mxu0 %v701
    %1779 = vmatpush.msra.mxu0 %v700
    %1780 = vmatpush.msra.mxu0 %v699
    %1781 = vmatpush.msra.mxu0 %v698
    %1782 = vmatpush.msra.mxu0 %v697
    %1783 = vmatpush.msra.mxu0 %v696
    %1784 = vmatpush.msra.mxu0 %v695
    %1785 = vmatpush.msra.mxu0 %v694
    %1786 = vmatmul.f32.gmra.mxu0 %v1769
    %v1787 = vpop.f32.mrf.mxu0
    %v1788 = vadd.f32 0.0, %v1787
    %1789 = vdwg.mxu0
    %s1790 = scalar_lea.vmem %s2, 12
    %v1791 = vld [vmem:[%s1790] sm:$0xf]
    %v1792 = vadd.f32 %v1791, %v1788
    %v1793 = vxor.u32 %v1792, 2147483648
    %v1794 = vmul.f32 %v1793, 1.442695
    %v1795 = vpow.pop %v1794
    %v1796 = vadd.f32 %v1795, 1.0
    %v1797 = vrcp.pop %v1796
    %v1798 = vmul.f32 %v1796, %v1797
    %v1799 = vsub.f32 1.0, %v1798
    %v1800 = vmul.f32 %v1797, %v1799
    %v1801 = vadd.f32 %v1797, %v1800
    %vm1802 = vweird.f32 %v1796
    %vm1803 = vweird.f32 %v1797
    %vm1804 = vmor %vm1802, %vm1803
    %v1805 = vsel %vm1804, %v1797, %v1801
    %v1806 = vand.u32 2147483647, %v1796
    %vm1807 = vcmp.eq.f32.partialorder %v1806, 8.507059e+37
    %v1808 = vand.u32 %v1796, 2147483648
    %v1809 = vor.u32 1.1754944e-38, %v1808
    %v1810 = vsel %vm1807, %v1809, %v1805
    %v1811 = vmul.f32 1.0, %v1810
    %v1812 = vtanh.pop %v1792
    %v1813 = vmul.f32 %v1811, %v1546
    %1815 = vrot.lane.b32.xlu0 %v1812, 64
    %v1816 = vpop.permute.xlu0 %1815
    %v1818 = vmul.f32 %v1811, %v1816
    %1820 = vrot.lane.b32.xlu0 %v1818, 32
    %v1821 = vpop.permute.xlu0 %1820
    %v1823 = vadd.f32 %v1813, %v1821
    %v1824 = vtanh.pop %v1823
    %1826 = vrot.lane.b32.xlu0 %v1824, 64
    %v1827 = vpop.permute.xlu0 %1826
    %v1829 = vmul.f32 %v1811, %v1827
    %v1830 = vmul.f32 %v684, %v1829
    %v1831 = vmul.f32 %v685, %v1829
    %v1832 = vmul.f32 %v686, %v1829
    %v1833 = vmul.f32 %v687, %v1829
    %v1834 = vmul.f32 %v688, %v1829
    %v1835 = vmul.f32 %v689, %v1829
    %v1836 = vmul.f32 %v690, %v1829
    %v1837 = vmul.f32 %v691, %v1829
    %v1838 = vmul.f32 %v692, %v1829
    %v1839 = vmul.f32 %v693, %v1829
    %1850 = vrot.lane.b32.xlu0 %v1830, 32
    %v1851 = vpop.permute.xlu0 %1850
    %1852 = vrot.lane.b32.xlu0 %v1831, 32
    %v1853 = vpop.permute.xlu0 %1852
    %1854 = vrot.lane.b32.xlu0 %v1832, 32
    %v1855 = vpop.permute.xlu0 %1854
    %1856 = vrot.lane.b32.xlu0 %v1833, 32
    %v1857 = vpop.permute.xlu0 %1856
    %1858 = vrot.lane.b32.xlu0 %v1834, 32
    %v1859 = vpop.permute.xlu0 %1858
    %1860 = vrot.lane.b32.xlu0 %v1835, 32
    %v1861 = vpop.permute.xlu0 %1860
    %1862 = vrot.lane.b32.xlu0 %v1836, 32
    %v1863 = vpop.permute.xlu0 %1862
    %1864 = vrot.lane.b32.xlu0 %v1837, 32
    %v1865 = vpop.permute.xlu0 %1864
    %1866 = vrot.lane.b32.xlu0 %v1838, 32
    %v1867 = vpop.permute.xlu0 %1866
    %1868 = vrot.lane.b32.xlu0 %v1839, 32
    %v1869 = vpop.permute.xlu0 %1868
    %v1880 = vsel %vm767, %v1851, 0.0
    %1881 = vadd.xlane.f32.xlu0 %v1880
    %v1882 = vpop.xlane.xlu0 %1881
    %v1883 = vsel %vm767, %v1853, 0.0
    %1884 = vadd.xlane.f32.xlu0 %v1883
    %v1885 = vpop.xlane.xlu0 %1884
    %v1886 = vsel %vm767, %v1855, 0.0
    %1887 = vadd.xlane.f32.xlu0 %v1886
    %v1888 = vpop.xlane.xlu0 %1887
    %v1889 = vsel %vm767, %v1857, 0.0
    %1890 = vadd.xlane.f32.xlu0 %v1889
    %v1891 = vpop.xlane.xlu0 %1890
    %v1892 = vsel %vm767, %v1859, 0.0
    %1893 = vadd.xlane.f32.xlu0 %v1892
    %v1894 = vpop.xlane.xlu0 %1893
    %v1895 = vsel %vm767, %v1861, 0.0
    %1896 = vadd.xlane.f32.xlu0 %v1895
    %v1897 = vpop.xlane.xlu0 %1896
    %v1898 = vsel %vm767, %v1863, 0.0
    %1899 = vadd.xlane.f32.xlu0 %v1898
    %v1900 = vpop.xlane.xlu0 %1899
    %v1901 = vsel %vm767, %v1865, 0.0
    %1902 = vadd.xlane.f32.xlu0 %v1901
    %v1903 = vpop.xlane.xlu0 %1902
    %v1904 = vsel %vm767, %v1867, 0.0
    %1905 = vadd.xlane.f32.xlu0 %v1904
    %v1906 = vpop.xlane.xlu0 %1905
    %v1907 = vsel %vm767, %v1869, 0.0
    %1908 = vadd.xlane.f32.xlu0 %v1907
    %v1909 = vpop.xlane.xlu0 %1908
    %v1910 = vsel %vm798, %v1882, -inf
    %v1911 = vsel %vm798, %v1885, -inf
    %v1912 = vsel %vm798, %v1888, -inf
    %v1913 = vsel %vm798, %v1891, -inf
    %v1914 = vsel %vm798, %v1894, -inf
    %v1915 = vmax.f32 %v1910, %v1914
    %v1916 = vsel %vm798, %v1897, -inf
    %v1917 = vmax.f32 %v1911, %v1916
    %v1918 = vsel %vm798, %v1900, -inf
    %v1919 = vmax.f32 %v1912, %v1918
    %v1920 = vsel %vm798, %v1903, -inf
    %v1921 = vmax.f32 %v1913, %v1920
    %v1922 = vsel %vm798, %v1906, -inf
    %v1923 = vmax.f32 %v1915, %v1922
    %v1924 = vsel %vm798, %v1909, -inf
    %v1925 = vmax.f32 %v1917, %v1924
    %v1926 = vmax.f32 %v1923, %v1925
    %v1927 = vmax.f32 %v1919, %v1921
    %v1928 = vmax.f32 %v1926, %v1927
    %v1929 = vsub.f32 %v1882, %v1928
    %v1930 = vsub.f32 %v1885, %v1928
    %v1931 = vsub.f32 %v1888, %v1928
    %v1932 = vsub.f32 %v1891, %v1928
    %v1933 = vsub.f32 %v1894, %v1928
    %v1934 = vsub.f32 %v1897, %v1928
    %v1935 = vsub.f32 %v1900, %v1928
    %v1936 = vsub.f32 %v1903, %v1928
    %v1937 = vsub.f32 %v1906, %v1928
    %v1938 = vsub.f32 %v1909, %v1928
    %v1939 = vmul.f32 %v1929, 1.442695
    %v1940 = vpow.pop %v1939
    %v1941 = vmul.f32 %v1930, 1.442695
    %v1942 = vpow.pop %v1941
    %v1943 = vmul.f32 %v1931, 1.442695
    %v1944 = vpow.pop %v1943
    %v1945 = vmul.f32 %v1932, 1.442695
    %v1946 = vpow.pop %v1945
    %v1947 = vmul.f32 %v1933, 1.442695
    %v1948 = vpow.pop %v1947
    %v1949 = vmul.f32 %v1934, 1.442695
    %v1950 = vpow.pop %v1949
    %v1951 = vmul.f32 %v1935, 1.442695
    %v1952 = vpow.pop %v1951
    %v1953 = vmul.f32 %v1936, 1.442695
    %v1954 = vpow.pop %v1953
    %v1955 = vmul.f32 %v1937, 1.442695
    %v1956 = vpow.pop %v1955
    %v1957 = vmul.f32 %v1938, 1.442695
    %v1958 = vpow.pop %v1957
    %v1959 = vsel %vm798, %v1940, 0.0
    %v1960 = vsel %vm798, %v1942, 0.0
    %v1961 = vadd.f32 %v1959, %v1960
    %v1962 = vsel %vm798, %v1944, 0.0
    %v1963 = vadd.f32 %v1961, %v1962
    %v1964 = vsel %vm798, %v1946, 0.0
    %v1965 = vadd.f32 %v1963, %v1964
    %v1966 = vsel %vm798, %v1948, 0.0
    %v1967 = vadd.f32 %v1965, %v1966
    %v1968 = vsel %vm798, %v1950, 0.0
    %v1969 = vadd.f32 %v1967, %v1968
    %v1970 = vsel %vm798, %v1952, 0.0
    %v1971 = vadd.f32 %v1969, %v1970
    %v1972 = vsel %vm798, %v1954, 0.0
    %v1973 = vadd.f32 %v1971, %v1972
    %v1974 = vsel %vm798, %v1956, 0.0
    %v1975 = vadd.f32 %v1973, %v1974
    %v1976 = vsel %vm798, %v1958, 0.0
    %v1977 = vadd.f32 %v1975, %v1976
    %v1978 = vrcp.pop %v1977
    %v1979 = vmul.f32 %v1977, %v1978
    %v1980 = vsub.f32 1.0, %v1979
    %v1981 = vmul.f32 %v1978, %v1980
    %v1982 = vadd.f32 %v1978, %v1981
    %vm1983 = vweird.f32 %v1977
    %vm1984 = vweird.f32 %v1978
    %vm1985 = vmor %vm1983, %vm1984
    %v1986 = vsel %vm1985, %v1978, %v1982
    %v1987 = vand.u32 2147483647, %v1977
    %vm1988 = vcmp.eq.f32.partialorder %v1987, 8.507059e+37
    %v1989 = vand.u32 %v1977, 2147483648
    %v1990 = vor.u32 1.1754944e-38, %v1989
    %v1991 = vsel %vm1988, %v1990, %v1986
    %v1992 = vmul.f32 %v1940, %v1991
    %v1993 = vmul.f32 %v1942, %v1991
    %v1994 = vmul.f32 %v1944, %v1991
    %v1995 = vmul.f32 %v1946, %v1991
    %v1996 = vmul.f32 %v1948, %v1991
    %v1997 = vmul.f32 %v1950, %v1991
    %v1998 = vmul.f32 %v1952, %v1991
    %v1999 = vmul.f32 %v1954, %v1991
    %v2000 = vmul.f32 %v1956, %v1991
    %v2001 = vmul.f32 %v1958, %v1991
    %v2002 = vmul.f32 %v684, %v1992
    %v2003 = vmul.f32 %v685, %v1993
    %v2004 = vmul.f32 %v686, %v1994
    %v2005 = vmul.f32 %v687, %v1995
    %v2006 = vmul.f32 %v688, %v1996
    %v2007 = vmul.f32 %v689, %v1997
    %v2008 = vmul.f32 %v690, %v1998
    %v2009 = vmul.f32 %v691, %v1999
    %v2010 = vmul.f32 %v692, %v2000
    %v2011 = vmul.f32 %v693, %v2001
    %v2012 = vsel %vm901, %v2002, 0.0
    %v2013 = vsel %vm901, %v2003, 0.0
    %v2014 = vadd.f32 %v2012, %v2013
    %v2015 = vsel %vm901, %v2004, 0.0
    %v2016 = vadd.f32 %v2014, %v2015
    %v2017 = vsel %vm901, %v2005, 0.0
    %v2018 = vadd.f32 %v2016, %v2017
    %v2019 = vsel %vm901, %v2006, 0.0
    %v2020 = vadd.f32 %v2018, %v2019
    %v2021 = vsel %vm901, %v2007, 0.0
    %v2022 = vadd.f32 %v2020, %v2021
    %v2023 = vsel %vm901, %v2008, 0.0
    %v2024 = vadd.f32 %v2022, %v2023
    %v2025 = vsel %vm901, %v2009, 0.0
    %v2026 = vadd.f32 %v2024, %v2025
    %v2027 = vsel %vm901, %v2010, 0.0
    %v2028 = vadd.f32 %v2026, %v2027
    %v2029 = vsel %vm901, %v2011, 0.0
    %v2030 = vadd.f32 %v2028, %v2029
    %2032 = vrot.lane.b32.xlu0 %v2030, 32
    %v2033 = vpop.permute.xlu0 %2032
    %2036 = vrot.lane.b32.xlu0 %v1829, 64
    %v2037 = vpop.permute.xlu0 %2036
    %v2039 = vsel %vm81, %v2033, %v2037
    %v2040 = vsel %vm931, %v2039, 0.0
    %v2041 = vsub.f32 %v2039, %v2040
    %2043 = vrot.lane.b32.xlu0 %v2041, 64
    %v2044 = vpop.permute.xlu0 %2043
    %v2046 = vsel %vm938, %v2040, %v2044
    %2047 = vmatpush.msra.mxu0 %v709
    %2048 = vmatpush.msra.mxu0 %v708
    %2049 = vmatpush.msra.mxu0 %v707
    %2050 = vmatpush.msra.mxu0 %v706
    %2051 = vmatpush.msra.mxu0 %v705
    %2052 = vmatpush.msra.mxu0 %v704
    %2053 = vmatpush.msra.mxu0 %v703
    %2054 = vmatpush.msra.mxu0 %v702
    %2055 = vmatpush.msra.mxu0 %v701
    %2056 = vmatpush.msra.mxu0 %v700
    %2057 = vmatpush.msra.mxu0 %v699
    %2058 = vmatpush.msra.mxu0 %v698
    %2059 = vmatpush.msra.mxu0 %v697
    %2060 = vmatpush.msra.mxu0 %v696
    %2061 = vmatpush.msra.mxu0 %v695
    %2062 = vmatpush.msra.mxu0 %v694
    %2063 = vmatmul.f32.gmra.mxu0 %v2046
    %v2064 = vpop.f32.mrf.mxu0
    %v2065 = vadd.f32 0.0, %v2064
    %2066 = vdwg.mxu0
    %s2067 = scalar_lea.vmem %s2, 16
    %v2068 = vld [vmem:[%s2067] sm:$0xf]
    %v2069 = vadd.f32 %v2068, %v2065
    %v2070 = vxor.u32 %v2069, 2147483648
    %v2071 = vmul.f32 %v2070, 1.442695
    %v2072 = vpow.pop %v2071
    %v2073 = vadd.f32 %v2072, 1.0
    %v2074 = vrcp.pop %v2073
    %v2075 = vmul.f32 %v2073, %v2074
    %v2076 = vsub.f32 1.0, %v2075
    %v2077 = vmul.f32 %v2074, %v2076
    %v2078 = vadd.f32 %v2074, %v2077
    %vm2079 = vweird.f32 %v2073
    %vm2080 = vweird.f32 %v2074
    %vm2081 = vmor %vm2079, %vm2080
    %v2082 = vsel %vm2081, %v2074, %v2078
    %v2083 = vand.u32 2147483647, %v2073
    %vm2084 = vcmp.eq.f32.partialorder %v2083, 8.507059e+37
    %v2085 = vand.u32 %v2073, 2147483648
    %v2086 = vor.u32 1.1754944e-38, %v2085
    %v2087 = vsel %vm2084, %v2086, %v2082
    %v2088 = vmul.f32 1.0, %v2087
    %v2089 = vtanh.pop %v2069
    %v2090 = vmul.f32 %v2088, %v1823
    %2092 = vrot.lane.b32.xlu0 %v2089, 64
    %v2093 = vpop.permute.xlu0 %2092
    %v2095 = vmul.f32 %v2088, %v2093
    %2097 = vrot.lane.b32.xlu0 %v2095, 32
    %v2098 = vpop.permute.xlu0 %2097
    %v2100 = vadd.f32 %v2090, %v2098
    %v2101 = vtanh.pop %v2100
    %2103 = vrot.lane.b32.xlu0 %v2101, 64
    %v2104 = vpop.permute.xlu0 %2103
    %v2106 = vmul.f32 %v2088, %v2104
    %v2107 = vmul.f32 %v684, %v2106
    %v2108 = vmul.f32 %v685, %v2106
    %v2109 = vmul.f32 %v686, %v2106
    %v2110 = vmul.f32 %v687, %v2106
    %v2111 = vmul.f32 %v688, %v2106
    %v2112 = vmul.f32 %v689, %v2106
    %v2113 = vmul.f32 %v690, %v2106
    %v2114 = vmul.f32 %v691, %v2106
    %v2115 = vmul.f32 %v692, %v2106
    %v2116 = vmul.f32 %v693, %v2106
    %2127 = vrot.lane.b32.xlu0 %v2107, 32
    %v2128 = vpop.permute.xlu0 %2127
    %2129 = vrot.lane.b32.xlu0 %v2108, 32
    %v2130 = vpop.permute.xlu0 %2129
    %2131 = vrot.lane.b32.xlu0 %v2109, 32
    %v2132 = vpop.permute.xlu0 %2131
    %2133 = vrot.lane.b32.xlu0 %v2110, 32
    %v2134 = vpop.permute.xlu0 %2133
    %2135 = vrot.lane.b32.xlu0 %v2111, 32
    %v2136 = vpop.permute.xlu0 %2135
    %2137 = vrot.lane.b32.xlu0 %v2112, 32
    %v2138 = vpop.permute.xlu0 %2137
    %2139 = vrot.lane.b32.xlu0 %v2113, 32
    %v2140 = vpop.permute.xlu0 %2139
    %2141 = vrot.lane.b32.xlu0 %v2114, 32
    %v2142 = vpop.permute.xlu0 %2141
    %2143 = vrot.lane.b32.xlu0 %v2115, 32
    %v2144 = vpop.permute.xlu0 %2143
    %2145 = vrot.lane.b32.xlu0 %v2116, 32
    %v2146 = vpop.permute.xlu0 %2145
    %v2157 = vsel %vm767, %v2128, 0.0
    %2158 = vadd.xlane.f32.xlu0 %v2157
    %v2159 = vpop.xlane.xlu0 %2158
    %v2160 = vsel %vm767, %v2130, 0.0
    %2161 = vadd.xlane.f32.xlu0 %v2160
    %v2162 = vpop.xlane.xlu0 %2161
    %v2163 = vsel %vm767, %v2132, 0.0
    %2164 = vadd.xlane.f32.xlu0 %v2163
    %v2165 = vpop.xlane.xlu0 %2164
    %v2166 = vsel %vm767, %v2134, 0.0
    %2167 = vadd.xlane.f32.xlu0 %v2166
    %v2168 = vpop.xlane.xlu0 %2167
    %v2169 = vsel %vm767, %v2136, 0.0
    %2170 = vadd.xlane.f32.xlu0 %v2169
    %v2171 = vpop.xlane.xlu0 %2170
    %v2172 = vsel %vm767, %v2138, 0.0
    %2173 = vadd.xlane.f32.xlu0 %v2172
    %v2174 = vpop.xlane.xlu0 %2173
    %v2175 = vsel %vm767, %v2140, 0.0
    %2176 = vadd.xlane.f32.xlu0 %v2175
    %v2177 = vpop.xlane.xlu0 %2176
    %v2178 = vsel %vm767, %v2142, 0.0
    %2179 = vadd.xlane.f32.xlu0 %v2178
    %v2180 = vpop.xlane.xlu0 %2179
    %v2181 = vsel %vm767, %v2144, 0.0
    %2182 = vadd.xlane.f32.xlu0 %v2181
    %v2183 = vpop.xlane.xlu0 %2182
    %v2184 = vsel %vm767, %v2146, 0.0
    %2185 = vadd.xlane.f32.xlu0 %v2184
    %v2186 = vpop.xlane.xlu0 %2185
    %v2187 = vsel %vm798, %v2159, -inf
    %v2188 = vsel %vm798, %v2162, -inf
    %v2189 = vsel %vm798, %v2165, -inf
    %v2190 = vsel %vm798, %v2168, -inf
    %v2191 = vsel %vm798, %v2171, -inf
    %v2192 = vmax.f32 %v2187, %v2191
    %v2193 = vsel %vm798, %v2174, -inf
    %v2194 = vmax.f32 %v2188, %v2193
    %v2195 = vsel %vm798, %v2177, -inf
    %v2196 = vmax.f32 %v2189, %v2195
    %v2197 = vsel %vm798, %v2180, -inf
    %v2198 = vmax.f32 %v2190, %v2197
    %v2199 = vsel %vm798, %v2183, -inf
    %v2200 = vmax.f32 %v2192, %v2199
    %v2201 = vsel %vm798, %v2186, -inf
    %v2202 = vmax.f32 %v2194, %v2201
    %v2203 = vmax.f32 %v2200, %v2202
    %v2204 = vmax.f32 %v2196, %v2198
    %v2205 = vmax.f32 %v2203, %v2204
    %v2206 = vsub.f32 %v2159, %v2205
    %v2207 = vsub.f32 %v2162, %v2205
    %v2208 = vsub.f32 %v2165, %v2205
    %v2209 = vsub.f32 %v2168, %v2205
    %v2210 = vsub.f32 %v2171, %v2205
    %v2211 = vsub.f32 %v2174, %v2205
    %v2212 = vsub.f32 %v2177, %v2205
    %v2213 = vsub.f32 %v2180, %v2205
    %v2214 = vsub.f32 %v2183, %v2205
    %v2215 = vsub.f32 %v2186, %v2205
    %v2216 = vmul.f32 %v2206, 1.442695
    %v2217 = vpow.pop %v2216
    %v2218 = vmul.f32 %v2207, 1.442695
    %v2219 = vpow.pop %v2218
    %v2220 = vmul.f32 %v2208, 1.442695
    %v2221 = vpow.pop %v2220
    %v2222 = vmul.f32 %v2209, 1.442695
    %v2223 = vpow.pop %v2222
    %v2224 = vmul.f32 %v2210, 1.442695
    %v2225 = vpow.pop %v2224
    %v2226 = vmul.f32 %v2211, 1.442695
    %v2227 = vpow.pop %v2226
    %v2228 = vmul.f32 %v2212, 1.442695
    %v2229 = vpow.pop %v2228
    %v2230 = vmul.f32 %v2213, 1.442695
    %v2231 = vpow.pop %v2230
    %v2232 = vmul.f32 %v2214, 1.442695
    %v2233 = vpow.pop %v2232
    %v2234 = vmul.f32 %v2215, 1.442695
    %v2235 = vpow.pop %v2234
    %v2236 = vsel %vm798, %v2217, 0.0
    %v2237 = vsel %vm798, %v2219, 0.0
    %v2238 = vadd.f32 %v2236, %v2237
    %v2239 = vsel %vm798, %v2221, 0.0
    %v2240 = vadd.f32 %v2238, %v2239
    %v2241 = vsel %vm798, %v2223, 0.0
    %v2242 = vadd.f32 %v2240, %v2241
    %v2243 = vsel %vm798, %v2225, 0.0
    %v2244 = vadd.f32 %v2242, %v2243
    %v2245 = vsel %vm798, %v2227, 0.0
    %v2246 = vadd.f32 %v2244, %v2245
    %v2247 = vsel %vm798, %v2229, 0.0
    %v2248 = vadd.f32 %v2246, %v2247
    %v2249 = vsel %vm798, %v2231, 0.0
    %v2250 = vadd.f32 %v2248, %v2249
    %v2251 = vsel %vm798, %v2233, 0.0
    %v2252 = vadd.f32 %v2250, %v2251
    %v2253 = vsel %vm798, %v2235, 0.0
    %v2254 = vadd.f32 %v2252, %v2253
    %v2255 = vrcp.pop %v2254
    %v2256 = vmul.f32 %v2254, %v2255
    %v2257 = vsub.f32 1.0, %v2256
    %v2258 = vmul.f32 %v2255, %v2257
    %v2259 = vadd.f32 %v2255, %v2258
    %vm2260 = vweird.f32 %v2254
    %vm2261 = vweird.f32 %v2255
    %vm2262 = vmor %vm2260, %vm2261
    %v2263 = vsel %vm2262, %v2255, %v2259
    %v2264 = vand.u32 2147483647, %v2254
    %vm2265 = vcmp.eq.f32.partialorder %v2264, 8.507059e+37
    %v2266 = vand.u32 %v2254, 2147483648
    %v2267 = vor.u32 1.1754944e-38, %v2266
    %v2268 = vsel %vm2265, %v2267, %v2263
    %v2269 = vmul.f32 %v2217, %v2268
    %v2270 = vmul.f32 %v2219, %v2268
    %v2271 = vmul.f32 %v2221, %v2268
    %v2272 = vmul.f32 %v2223, %v2268
    %v2273 = vmul.f32 %v2225, %v2268
    %v2274 = vmul.f32 %v2227, %v2268
    %v2275 = vmul.f32 %v2229, %v2268
    %v2276 = vmul.f32 %v2231, %v2268
    %v2277 = vmul.f32 %v2233, %v2268
    %v2278 = vmul.f32 %v2235, %v2268
    %v2279 = vmul.f32 %v684, %v2269
    %v2280 = vmul.f32 %v685, %v2270
    %v2281 = vmul.f32 %v686, %v2271
    %v2282 = vmul.f32 %v687, %v2272
    %v2283 = vmul.f32 %v688, %v2273
    %v2284 = vmul.f32 %v689, %v2274
    %v2285 = vmul.f32 %v690, %v2275
    %v2286 = vmul.f32 %v691, %v2276
    %v2287 = vmul.f32 %v692, %v2277
    %v2288 = vmul.f32 %v693, %v2278
    %v2289 = vsel %vm901, %v2279, 0.0
    %v2290 = vsel %vm901, %v2280, 0.0
    %v2291 = vadd.f32 %v2289, %v2290
    %v2292 = vsel %vm901, %v2281, 0.0
    %v2293 = vadd.f32 %v2291, %v2292
    %v2294 = vsel %vm901, %v2282, 0.0
    %v2295 = vadd.f32 %v2293, %v2294
    %v2296 = vsel %vm901, %v2283, 0.0
    %v2297 = vadd.f32 %v2295, %v2296
    %v2298 = vsel %vm901, %v2284, 0.0
    %v2299 = vadd.f32 %v2297, %v2298
    %v2300 = vsel %vm901, %v2285, 0.0
    %v2301 = vadd.f32 %v2299, %v2300
    %v2302 = vsel %vm901, %v2286, 0.0
    %v2303 = vadd.f32 %v2301, %v2302
    %v2304 = vsel %vm901, %v2287, 0.0
    %v2305 = vadd.f32 %v2303, %v2304
    %v2306 = vsel %vm901, %v2288, 0.0
    %v2307 = vadd.f32 %v2305, %v2306
    %2309 = vrot.lane.b32.xlu0 %v2307, 32
    %v2310 = vpop.permute.xlu0 %2309
    %2313 = vrot.lane.b32.xlu0 %v2106, 64
    %v2314 = vpop.permute.xlu0 %2313
    %v2316 = vsel %vm81, %v2310, %v2314
    %v2317 = vsel %vm931, %v2316, 0.0
    %v2318 = vsub.f32 %v2316, %v2317
    %2320 = vrot.lane.b32.xlu0 %v2318, 64
    %v2321 = vpop.permute.xlu0 %2320
    %v2323 = vsel %vm938, %v2317, %v2321
    %2324 = vmatpush.msra.mxu0 %v709
    %2325 = vmatpush.msra.mxu0 %v708
    %2326 = vmatpush.msra.mxu0 %v707
    %2327 = vmatpush.msra.mxu0 %v706
    %2328 = vmatpush.msra.mxu0 %v705
    %2329 = vmatpush.msra.mxu0 %v704
    %2330 = vmatpush.msra.mxu0 %v703
    %2331 = vmatpush.msra.mxu0 %v702
    %2332 = vmatpush.msra.mxu0 %v701
    %2333 = vmatpush.msra.mxu0 %v700
    %2334 = vmatpush.msra.mxu0 %v699
    %2335 = vmatpush.msra.mxu0 %v698
    %2336 = vmatpush.msra.mxu0 %v697
    %2337 = vmatpush.msra.mxu0 %v696
    %2338 = vmatpush.msra.mxu0 %v695
    %2339 = vmatpush.msra.mxu0 %v694
    %2340 = vmatmul.f32.gmra.mxu0 %v2323
    %v2341 = vpop.f32.mrf.mxu0
    %v2342 = vadd.f32 0.0, %v2341
    %2343 = vdwg.mxu0
    %s2344 = scalar_lea.vmem %s2, 20
    %v2345 = vld [vmem:[%s2344] sm:$0xf]
    %v2346 = vadd.f32 %v2345, %v2342
    %v2347 = vxor.u32 %v2346, 2147483648
    %v2348 = vmul.f32 %v2347, 1.442695
    %v2349 = vpow.pop %v2348
    %v2350 = vadd.f32 %v2349, 1.0
    %v2351 = vrcp.pop %v2350
    %v2352 = vmul.f32 %v2350, %v2351
    %v2353 = vsub.f32 1.0, %v2352
    %v2354 = vmul.f32 %v2351, %v2353
    %v2355 = vadd.f32 %v2351, %v2354
    %vm2356 = vweird.f32 %v2350
    %vm2357 = vweird.f32 %v2351
    %vm2358 = vmor %vm2356, %vm2357
    %v2359 = vsel %vm2358, %v2351, %v2355
    %v2360 = vand.u32 2147483647, %v2350
    %vm2361 = vcmp.eq.f32.partialorder %v2360, 8.507059e+37
    %v2362 = vand.u32 %v2350, 2147483648
    %v2363 = vor.u32 1.1754944e-38, %v2362
    %v2364 = vsel %vm2361, %v2363, %v2359
    %v2365 = vmul.f32 1.0, %v2364
    %v2366 = vtanh.pop %v2346
    %v2367 = vmul.f32 %v2365, %v2100
    %2369 = vrot.lane.b32.xlu0 %v2366, 64
    %v2370 = vpop.permute.xlu0 %2369
    %v2372 = vmul.f32 %v2365, %v2370
    %2374 = vrot.lane.b32.xlu0 %v2372, 32
    %v2375 = vpop.permute.xlu0 %2374
    %v2377 = vadd.f32 %v2367, %v2375
    %v2378 = vtanh.pop %v2377
    %2380 = vrot.lane.b32.xlu0 %v2378, 64
    %v2381 = vpop.permute.xlu0 %2380
    %v2383 = vmul.f32 %v2365, %v2381
    %v2384 = vmul.f32 %v684, %v2383
    %v2385 = vmul.f32 %v685, %v2383
    %v2386 = vmul.f32 %v686, %v2383
    %v2387 = vmul.f32 %v687, %v2383
    %v2388 = vmul.f32 %v688, %v2383
    %v2389 = vmul.f32 %v689, %v2383
    %v2390 = vmul.f32 %v690, %v2383
    %v2391 = vmul.f32 %v691, %v2383
    %v2392 = vmul.f32 %v692, %v2383
    %v2393 = vmul.f32 %v693, %v2383
    %2404 = vrot.lane.b32.xlu0 %v2384, 32
    %v2405 = vpop.permute.xlu0 %2404
    %2406 = vrot.lane.b32.xlu0 %v2385, 32
    %v2407 = vpop.permute.xlu0 %2406
    %2408 = vrot.lane.b32.xlu0 %v2386, 32
    %v2409 = vpop.permute.xlu0 %2408
    %2410 = vrot.lane.b32.xlu0 %v2387, 32
    %v2411 = vpop.permute.xlu0 %2410
    %2412 = vrot.lane.b32.xlu0 %v2388, 32
    %v2413 = vpop.permute.xlu0 %2412
    %2414 = vrot.lane.b32.xlu0 %v2389, 32
    %v2415 = vpop.permute.xlu0 %2414
    %2416 = vrot.lane.b32.xlu0 %v2390, 32
    %v2417 = vpop.permute.xlu0 %2416
    %2418 = vrot.lane.b32.xlu0 %v2391, 32
    %v2419 = vpop.permute.xlu0 %2418
    %2420 = vrot.lane.b32.xlu0 %v2392, 32
    %v2421 = vpop.permute.xlu0 %2420
    %2422 = vrot.lane.b32.xlu0 %v2393, 32
    %v2423 = vpop.permute.xlu0 %2422
    %v2434 = vsel %vm767, %v2405, 0.0
    %2435 = vadd.xlane.f32.xlu0 %v2434
    %v2436 = vpop.xlane.xlu0 %2435
    %v2437 = vsel %vm767, %v2407, 0.0
    %2438 = vadd.xlane.f32.xlu0 %v2437
    %v2439 = vpop.xlane.xlu0 %2438
    %v2440 = vsel %vm767, %v2409, 0.0
    %2441 = vadd.xlane.f32.xlu0 %v2440
    %v2442 = vpop.xlane.xlu0 %2441
    %v2443 = vsel %vm767, %v2411, 0.0
    %2444 = vadd.xlane.f32.xlu0 %v2443
    %v2445 = vpop.xlane.xlu0 %2444
    %v2446 = vsel %vm767, %v2413, 0.0
    %2447 = vadd.xlane.f32.xlu0 %v2446
    %v2448 = vpop.xlane.xlu0 %2447
    %v2449 = vsel %vm767, %v2415, 0.0
    %2450 = vadd.xlane.f32.xlu0 %v2449
    %v2451 = vpop.xlane.xlu0 %2450
    %v2452 = vsel %vm767, %v2417, 0.0
    %2453 = vadd.xlane.f32.xlu0 %v2452
    %v2454 = vpop.xlane.xlu0 %2453
    %v2455 = vsel %vm767, %v2419, 0.0
    %2456 = vadd.xlane.f32.xlu0 %v2455
    %v2457 = vpop.xlane.xlu0 %2456
    %v2458 = vsel %vm767, %v2421, 0.0
    %2459 = vadd.xlane.f32.xlu0 %v2458
    %v2460 = vpop.xlane.xlu0 %2459
    %v2461 = vsel %vm767, %v2423, 0.0
    %2462 = vadd.xlane.f32.xlu0 %v2461
    %v2463 = vpop.xlane.xlu0 %2462
    %v2464 = vsel %vm798, %v2436, -inf
    %v2465 = vsel %vm798, %v2439, -inf
    %v2466 = vsel %vm798, %v2442, -inf
    %v2467 = vsel %vm798, %v2445, -inf
    %v2468 = vsel %vm798, %v2448, -inf
    %v2469 = vmax.f32 %v2464, %v2468
    %v2470 = vsel %vm798, %v2451, -inf
    %v2471 = vmax.f32 %v2465, %v2470
    %v2472 = vsel %vm798, %v2454, -inf
    %v2473 = vmax.f32 %v2466, %v2472
    %v2474 = vsel %vm798, %v2457, -inf
    %v2475 = vmax.f32 %v2467, %v2474
    %v2476 = vsel %vm798, %v2460, -inf
    %v2477 = vmax.f32 %v2469, %v2476
    %v2478 = vsel %vm798, %v2463, -inf
    %v2479 = vmax.f32 %v2471, %v2478
    %v2480 = vmax.f32 %v2477, %v2479
    %v2481 = vmax.f32 %v2473, %v2475
    %v2482 = vmax.f32 %v2480, %v2481
    %v2483 = vsub.f32 %v2436, %v2482
    %v2484 = vsub.f32 %v2439, %v2482
    %v2485 = vsub.f32 %v2442, %v2482
    %v2486 = vsub.f32 %v2445, %v2482
    %v2487 = vsub.f32 %v2448, %v2482
    %v2488 = vsub.f32 %v2451, %v2482
    %v2489 = vsub.f32 %v2454, %v2482
    %v2490 = vsub.f32 %v2457, %v2482
    %v2491 = vsub.f32 %v2460, %v2482
    %v2492 = vsub.f32 %v2463, %v2482
    %v2493 = vmul.f32 %v2483, 1.442695
    %v2494 = vpow.pop %v2493
    %v2495 = vmul.f32 %v2484, 1.442695
    %v2496 = vpow.pop %v2495
    %v2497 = vmul.f32 %v2485, 1.442695
    %v2498 = vpow.pop %v2497
    %v2499 = vmul.f32 %v2486, 1.442695
    %v2500 = vpow.pop %v2499
    %v2501 = vmul.f32 %v2487, 1.442695
    %v2502 = vpow.pop %v2501
    %v2503 = vmul.f32 %v2488, 1.442695
    %v2504 = vpow.pop %v2503
    %v2505 = vmul.f32 %v2489, 1.442695
    %v2506 = vpow.pop %v2505
    %v2507 = vmul.f32 %v2490, 1.442695
    %v2508 = vpow.pop %v2507
    %v2509 = vmul.f32 %v2491, 1.442695
    %v2510 = vpow.pop %v2509
    %v2511 = vmul.f32 %v2492, 1.442695
    %v2512 = vpow.pop %v2511
    %v2513 = vsel %vm798, %v2494, 0.0
    %v2514 = vsel %vm798, %v2496, 0.0
    %v2515 = vadd.f32 %v2513, %v2514
    %v2516 = vsel %vm798, %v2498, 0.0
    %v2517 = vadd.f32 %v2515, %v2516
    %v2518 = vsel %vm798, %v2500, 0.0
    %v2519 = vadd.f32 %v2517, %v2518
    %v2520 = vsel %vm798, %v2502, 0.0
    %v2521 = vadd.f32 %v2519, %v2520
    %v2522 = vsel %vm798, %v2504, 0.0
    %v2523 = vadd.f32 %v2521, %v2522
    %v2524 = vsel %vm798, %v2506, 0.0
    %v2525 = vadd.f32 %v2523, %v2524
    %v2526 = vsel %vm798, %v2508, 0.0
    %v2527 = vadd.f32 %v2525, %v2526
    %v2528 = vsel %vm798, %v2510, 0.0
    %v2529 = vadd.f32 %v2527, %v2528
    %v2530 = vsel %vm798, %v2512, 0.0
    %v2531 = vadd.f32 %v2529, %v2530
    %v2532 = vrcp.pop %v2531
    %v2533 = vmul.f32 %v2531, %v2532
    %v2534 = vsub.f32 1.0, %v2533
    %v2535 = vmul.f32 %v2532, %v2534
    %v2536 = vadd.f32 %v2532, %v2535
    %vm2537 = vweird.f32 %v2531
    %vm2538 = vweird.f32 %v2532
    %vm2539 = vmor %vm2537, %vm2538
    %v2540 = vsel %vm2539, %v2532, %v2536
    %v2541 = vand.u32 2147483647, %v2531
    %vm2542 = vcmp.eq.f32.partialorder %v2541, 8.507059e+37
    %v2543 = vand.u32 %v2531, 2147483648
    %v2544 = vor.u32 1.1754944e-38, %v2543
    %v2545 = vsel %vm2542, %v2544, %v2540
    %v2546 = vmul.f32 %v2494, %v2545
    %v2547 = vmul.f32 %v2496, %v2545
    %v2548 = vmul.f32 %v2498, %v2545
    %v2549 = vmul.f32 %v2500, %v2545
    %v2550 = vmul.f32 %v2502, %v2545
    %v2551 = vmul.f32 %v2504, %v2545
    %v2552 = vmul.f32 %v2506, %v2545
    %v2553 = vmul.f32 %v2508, %v2545
    %v2554 = vmul.f32 %v2510, %v2545
    %v2555 = vmul.f32 %v2512, %v2545
    %v2556 = vmul.f32 %v684, %v2546
    %v2557 = vmul.f32 %v685, %v2547
    %v2558 = vmul.f32 %v686, %v2548
    %v2559 = vmul.f32 %v687, %v2549
    %v2560 = vmul.f32 %v688, %v2550
    %v2561 = vmul.f32 %v689, %v2551
    %v2562 = vmul.f32 %v690, %v2552
    %v2563 = vmul.f32 %v691, %v2553
    %v2564 = vmul.f32 %v692, %v2554
    %v2565 = vmul.f32 %v693, %v2555
    %v2566 = vsel %vm901, %v2556, 0.0
    %v2567 = vsel %vm901, %v2557, 0.0
    %v2568 = vadd.f32 %v2566, %v2567
    %v2569 = vsel %vm901, %v2558, 0.0
    %v2570 = vadd.f32 %v2568, %v2569
    %v2571 = vsel %vm901, %v2559, 0.0
    %v2572 = vadd.f32 %v2570, %v2571
    %v2573 = vsel %vm901, %v2560, 0.0
    %v2574 = vadd.f32 %v2572, %v2573
    %v2575 = vsel %vm901, %v2561, 0.0
    %v2576 = vadd.f32 %v2574, %v2575
    %v2577 = vsel %vm901, %v2562, 0.0
    %v2578 = vadd.f32 %v2576, %v2577
    %v2579 = vsel %vm901, %v2563, 0.0
    %v2580 = vadd.f32 %v2578, %v2579
    %v2581 = vsel %vm901, %v2564, 0.0
    %v2582 = vadd.f32 %v2580, %v2581
    %v2583 = vsel %vm901, %v2565, 0.0
    %v2584 = vadd.f32 %v2582, %v2583
    %2586 = vrot.lane.b32.xlu0 %v2584, 32
    %v2587 = vpop.permute.xlu0 %2586
    %2590 = vrot.lane.b32.xlu0 %v2383, 64
    %v2591 = vpop.permute.xlu0 %2590
    %v2593 = vsel %vm81, %v2587, %v2591
    %v2594 = vsel %vm931, %v2593, 0.0
    %v2595 = vsub.f32 %v2593, %v2594
    %2597 = vrot.lane.b32.xlu0 %v2595, 64
    %v2598 = vpop.permute.xlu0 %2597
    %v2600 = vsel %vm938, %v2594, %v2598
    %2601 = vmatpush.msra.mxu0 %v709
    %2602 = vmatpush.msra.mxu0 %v708
    %2603 = vmatpush.msra.mxu0 %v707
    %2604 = vmatpush.msra.mxu0 %v706
    %2605 = vmatpush.msra.mxu0 %v705
    %2606 = vmatpush.msra.mxu0 %v704
    %2607 = vmatpush.msra.mxu0 %v703
    %2608 = vmatpush.msra.mxu0 %v702
    %2609 = vmatpush.msra.mxu0 %v701
    %2610 = vmatpush.msra.mxu0 %v700
    %2611 = vmatpush.msra.mxu0 %v699
    %2612 = vmatpush.msra.mxu0 %v698
    %2613 = vmatpush.msra.mxu0 %v697
    %2614 = vmatpush.msra.mxu0 %v696
    %2615 = vmatpush.msra.mxu0 %v695
    %2616 = vmatpush.msra.mxu0 %v694
    %2617 = vmatmul.f32.gmra.mxu0 %v2600
    %v2618 = vpop.f32.mrf.mxu0
    %v2619 = vadd.f32 0.0, %v2618
    %2620 = vdwg.mxu0
    %s2621 = scalar_lea.vmem %s2, 24
    %v2622 = vld [vmem:[%s2621] sm:$0xf]
    %v2623 = vadd.f32 %v2622, %v2619
    %v2624 = vxor.u32 %v2623, 2147483648
    %v2625 = vmul.f32 %v2624, 1.442695
    %v2626 = vpow.pop %v2625
    %v2627 = vadd.f32 %v2626, 1.0
    %v2628 = vrcp.pop %v2627
    %v2629 = vmul.f32 %v2627, %v2628
    %v2630 = vsub.f32 1.0, %v2629
    %v2631 = vmul.f32 %v2628, %v2630
    %v2632 = vadd.f32 %v2628, %v2631
    %vm2633 = vweird.f32 %v2627
    %vm2634 = vweird.f32 %v2628
    %vm2635 = vmor %vm2633, %vm2634
    %v2636 = vsel %vm2635, %v2628, %v2632
    %v2637 = vand.u32 2147483647, %v2627
    %vm2638 = vcmp.eq.f32.partialorder %v2637, 8.507059e+37
    %v2639 = vand.u32 %v2627, 2147483648
    %v2640 = vor.u32 1.1754944e-38, %v2639
    %v2641 = vsel %vm2638, %v2640, %v2636
    %v2642 = vmul.f32 1.0, %v2641
    %v2643 = vtanh.pop %v2623
    %v2644 = vmul.f32 %v2642, %v2377
    %2646 = vrot.lane.b32.xlu0 %v2643, 64
    %v2647 = vpop.permute.xlu0 %2646
    %v2649 = vmul.f32 %v2642, %v2647
    %2651 = vrot.lane.b32.xlu0 %v2649, 32
    %v2652 = vpop.permute.xlu0 %2651
    %v2654 = vadd.f32 %v2644, %v2652
    %v2655 = vtanh.pop %v2654
    %2657 = vrot.lane.b32.xlu0 %v2655, 64
    %v2658 = vpop.permute.xlu0 %2657
    %v2660 = vmul.f32 %v2642, %v2658
    %v2661 = vmul.f32 %v684, %v2660
    %v2662 = vmul.f32 %v685, %v2660
    %v2663 = vmul.f32 %v686, %v2660
    %v2664 = vmul.f32 %v687, %v2660
    %v2665 = vmul.f32 %v688, %v2660
    %v2666 = vmul.f32 %v689, %v2660
    %v2667 = vmul.f32 %v690, %v2660
    %v2668 = vmul.f32 %v691, %v2660
    %v2669 = vmul.f32 %v692, %v2660
    %v2670 = vmul.f32 %v693, %v2660
    %2681 = vrot.lane.b32.xlu0 %v2661, 32
    %v2682 = vpop.permute.xlu0 %2681
    %2683 = vrot.lane.b32.xlu0 %v2662, 32
    %v2684 = vpop.permute.xlu0 %2683
    %2685 = vrot.lane.b32.xlu0 %v2663, 32
    %v2686 = vpop.permute.xlu0 %2685
    %2687 = vrot.lane.b32.xlu0 %v2664, 32
    %v2688 = vpop.permute.xlu0 %2687
    %2689 = vrot.lane.b32.xlu0 %v2665, 32
    %v2690 = vpop.permute.xlu0 %2689
    %2691 = vrot.lane.b32.xlu0 %v2666, 32
    %v2692 = vpop.permute.xlu0 %2691
    %2693 = vrot.lane.b32.xlu0 %v2667, 32
    %v2694 = vpop.permute.xlu0 %2693
    %2695 = vrot.lane.b32.xlu0 %v2668, 32
    %v2696 = vpop.permute.xlu0 %2695
    %2697 = vrot.lane.b32.xlu0 %v2669, 32
    %v2698 = vpop.permute.xlu0 %2697
    %2699 = vrot.lane.b32.xlu0 %v2670, 32
    %v2700 = vpop.permute.xlu0 %2699
    %v2711 = vsel %vm767, %v2682, 0.0
    %2712 = vadd.xlane.f32.xlu0 %v2711
    %v2713 = vpop.xlane.xlu0 %2712
    %v2714 = vsel %vm767, %v2684, 0.0
    %2715 = vadd.xlane.f32.xlu0 %v2714
    %v2716 = vpop.xlane.xlu0 %2715
    %v2717 = vsel %vm767, %v2686, 0.0
    %2718 = vadd.xlane.f32.xlu0 %v2717
    %v2719 = vpop.xlane.xlu0 %2718
    %v2720 = vsel %vm767, %v2688, 0.0
    %2721 = vadd.xlane.f32.xlu0 %v2720
    %v2722 = vpop.xlane.xlu0 %2721
    %v2723 = vsel %vm767, %v2690, 0.0
    %2724 = vadd.xlane.f32.xlu0 %v2723
    %v2725 = vpop.xlane.xlu0 %2724
    %v2726 = vsel %vm767, %v2692, 0.0
    %2727 = vadd.xlane.f32.xlu0 %v2726
    %v2728 = vpop.xlane.xlu0 %2727
    %v2729 = vsel %vm767, %v2694, 0.0
    %2730 = vadd.xlane.f32.xlu0 %v2729
    %v2731 = vpop.xlane.xlu0 %2730
    %v2732 = vsel %vm767, %v2696, 0.0
    %2733 = vadd.xlane.f32.xlu0 %v2732
    %v2734 = vpop.xlane.xlu0 %2733
    %v2735 = vsel %vm767, %v2698, 0.0
    %2736 = vadd.xlane.f32.xlu0 %v2735
    %v2737 = vpop.xlane.xlu0 %2736
    %v2738 = vsel %vm767, %v2700, 0.0
    %2739 = vadd.xlane.f32.xlu0 %v2738
    %v2740 = vpop.xlane.xlu0 %2739
    %v2741 = vsel %vm798, %v2713, -inf
    %v2742 = vsel %vm798, %v2716, -inf
    %v2743 = vsel %vm798, %v2719, -inf
    %v2744 = vsel %vm798, %v2722, -inf
    %v2745 = vsel %vm798, %v2725, -inf
    %v2746 = vmax.f32 %v2741, %v2745
    %v2747 = vsel %vm798, %v2728, -inf
    %v2748 = vmax.f32 %v2742, %v2747
    %v2749 = vsel %vm798, %v2731, -inf
    %v2750 = vmax.f32 %v2743, %v2749
    %v2751 = vsel %vm798, %v2734, -inf
    %v2752 = vmax.f32 %v2744, %v2751
    %v2753 = vsel %vm798, %v2737, -inf
    %v2754 = vmax.f32 %v2746, %v2753
    %v2755 = vsel %vm798, %v2740, -inf
    %v2756 = vmax.f32 %v2748, %v2755
    %v2757 = vmax.f32 %v2754, %v2756
    %v2758 = vmax.f32 %v2750, %v2752
    %v2759 = vmax.f32 %v2757, %v2758
    %v2760 = vsub.f32 %v2713, %v2759
    %v2761 = vsub.f32 %v2716, %v2759
    %v2762 = vsub.f32 %v2719, %v2759
    %v2763 = vsub.f32 %v2722, %v2759
    %v2764 = vsub.f32 %v2725, %v2759
    %v2765 = vsub.f32 %v2728, %v2759
    %v2766 = vsub.f32 %v2731, %v2759
    %v2767 = vsub.f32 %v2734, %v2759
    %v2768 = vsub.f32 %v2737, %v2759
    %v2769 = vsub.f32 %v2740, %v2759
    %v2770 = vmul.f32 %v2760, 1.442695
    %v2771 = vpow.pop %v2770
    %v2772 = vmul.f32 %v2761, 1.442695
    %v2773 = vpow.pop %v2772
    %v2774 = vmul.f32 %v2762, 1.442695
    %v2775 = vpow.pop %v2774
    %v2776 = vmul.f32 %v2763, 1.442695
    %v2777 = vpow.pop %v2776
    %v2778 = vmul.f32 %v2764, 1.442695
    %v2779 = vpow.pop %v2778
    %v2780 = vmul.f32 %v2765, 1.442695
    %v2781 = vpow.pop %v2780
    %v2782 = vmul.f32 %v2766, 1.442695
    %v2783 = vpow.pop %v2782
    %v2784 = vmul.f32 %v2767, 1.442695
    %v2785 = vpow.pop %v2784
    %v2786 = vmul.f32 %v2768, 1.442695
    %v2787 = vpow.pop %v2786
    %v2788 = vmul.f32 %v2769, 1.442695
    %v2789 = vpow.pop %v2788
    %v2790 = vsel %vm798, %v2771, 0.0
    %v2791 = vsel %vm798, %v2773, 0.0
    %v2792 = vadd.f32 %v2790, %v2791
    %v2793 = vsel %vm798, %v2775, 0.0
    %v2794 = vadd.f32 %v2792, %v2793
    %v2795 = vsel %vm798, %v2777, 0.0
    %v2796 = vadd.f32 %v2794, %v2795
    %v2797 = vsel %vm798, %v2779, 0.0
    %v2798 = vadd.f32 %v2796, %v2797
    %v2799 = vsel %vm798, %v2781, 0.0
    %v2800 = vadd.f32 %v2798, %v2799
    %v2801 = vsel %vm798, %v2783, 0.0
    %v2802 = vadd.f32 %v2800, %v2801
    %v2803 = vsel %vm798, %v2785, 0.0
    %v2804 = vadd.f32 %v2802, %v2803
    %v2805 = vsel %vm798, %v2787, 0.0
    %v2806 = vadd.f32 %v2804, %v2805
    %v2807 = vsel %vm798, %v2789, 0.0
    %v2808 = vadd.f32 %v2806, %v2807
    %v2809 = vrcp.pop %v2808
    %v2810 = vmul.f32 %v2808, %v2809
    %v2811 = vsub.f32 1.0, %v2810
    %v2812 = vmul.f32 %v2809, %v2811
    %v2813 = vadd.f32 %v2809, %v2812
    %vm2814 = vweird.f32 %v2808
    %vm2815 = vweird.f32 %v2809
    %vm2816 = vmor %vm2814, %vm2815
    %v2817 = vsel %vm2816, %v2809, %v2813
    %v2818 = vand.u32 2147483647, %v2808
    %vm2819 = vcmp.eq.f32.partialorder %v2818, 8.507059e+37
    %v2820 = vand.u32 %v2808, 2147483648
    %v2821 = vor.u32 1.1754944e-38, %v2820
    %v2822 = vsel %vm2819, %v2821, %v2817
    %v2823 = vmul.f32 %v2771, %v2822
    %v2824 = vmul.f32 %v2773, %v2822
    %v2825 = vmul.f32 %v2775, %v2822
    %v2826 = vmul.f32 %v2777, %v2822
    %v2827 = vmul.f32 %v2779, %v2822
    %v2828 = vmul.f32 %v2781, %v2822
    %v2829 = vmul.f32 %v2783, %v2822
    %v2830 = vmul.f32 %v2785, %v2822
    %v2831 = vmul.f32 %v2787, %v2822
    %v2832 = vmul.f32 %v2789, %v2822
    %v2833 = vmul.f32 %v684, %v2823
    %v2834 = vmul.f32 %v685, %v2824
    %v2835 = vmul.f32 %v686, %v2825
    %v2836 = vmul.f32 %v687, %v2826
    %v2837 = vmul.f32 %v688, %v2827
    %v2838 = vmul.f32 %v689, %v2828
    %v2839 = vmul.f32 %v690, %v2829
    %v2840 = vmul.f32 %v691, %v2830
    %v2841 = vmul.f32 %v692, %v2831
    %v2842 = vmul.f32 %v693, %v2832
    %v2843 = vsel %vm901, %v2833, 0.0
    %v2844 = vsel %vm901, %v2834, 0.0
    %v2845 = vadd.f32 %v2843, %v2844
    %v2846 = vsel %vm901, %v2835, 0.0
    %v2847 = vadd.f32 %v2845, %v2846
    %v2848 = vsel %vm901, %v2836, 0.0
    %v2849 = vadd.f32 %v2847, %v2848
    %v2850 = vsel %vm901, %v2837, 0.0
    %v2851 = vadd.f32 %v2849, %v2850
    %v2852 = vsel %vm901, %v2838, 0.0
    %v2853 = vadd.f32 %v2851, %v2852
    %v2854 = vsel %vm901, %v2839, 0.0
    %v2855 = vadd.f32 %v2853, %v2854
    %v2856 = vsel %vm901, %v2840, 0.0
    %v2857 = vadd.f32 %v2855, %v2856
    %v2858 = vsel %vm901, %v2841, 0.0
    %v2859 = vadd.f32 %v2857, %v2858
    %v2860 = vsel %vm901, %v2842, 0.0
    %v2861 = vadd.f32 %v2859, %v2860
    %2863 = vrot.lane.b32.xlu0 %v2861, 32
    %v2864 = vpop.permute.xlu0 %2863
    %2867 = vrot.lane.b32.xlu0 %v2660, 64
    %v2868 = vpop.permute.xlu0 %2867
    %v2870 = vsel %vm81, %v2864, %v2868
    %v2871 = vsel %vm931, %v2870, 0.0
    %v2872 = vsub.f32 %v2870, %v2871
    %2874 = vrot.lane.b32.xlu0 %v2872, 64
    %v2875 = vpop.permute.xlu0 %2874
    %v2877 = vsel %vm938, %v2871, %v2875
    %2878 = vmatpush.msra.mxu0 %v709
    %2879 = vmatpush.msra.mxu0 %v708
    %2880 = vmatpush.msra.mxu0 %v707
    %2881 = vmatpush.msra.mxu0 %v706
    %2882 = vmatpush.msra.mxu0 %v705
    %2883 = vmatpush.msra.mxu0 %v704
    %2884 = vmatpush.msra.mxu0 %v703
    %2885 = vmatpush.msra.mxu0 %v702
    %2886 = vmatpush.msra.mxu0 %v701
    %2887 = vmatpush.msra.mxu0 %v700
    %2888 = vmatpush.msra.mxu0 %v699
    %2889 = vmatpush.msra.mxu0 %v698
    %2890 = vmatpush.msra.mxu0 %v697
    %2891 = vmatpush.msra.mxu0 %v696
    %2892 = vmatpush.msra.mxu0 %v695
    %2893 = vmatpush.msra.mxu0 %v694
    %2894 = vmatmul.f32.gmra.mxu0 %v2877
    %v2895 = vpop.f32.mrf.mxu0
    %v2896 = vadd.f32 0.0, %v2895
    %2897 = vdwg.mxu0
    %s2898 = scalar_lea.vmem %s2, 28
    %v2899 = vld [vmem:[%s2898] sm:$0xf]
    %v2900 = vadd.f32 %v2899, %v2896
    %v2901 = vxor.u32 %v2900, 2147483648
    %v2902 = vmul.f32 %v2901, 1.442695
    %v2903 = vpow.pop %v2902
    %v2904 = vadd.f32 %v2903, 1.0
    %v2905 = vrcp.pop %v2904
    %v2906 = vmul.f32 %v2904, %v2905
    %v2907 = vsub.f32 1.0, %v2906
    %v2908 = vmul.f32 %v2905, %v2907
    %v2909 = vadd.f32 %v2905, %v2908
    %vm2910 = vweird.f32 %v2904
    %vm2911 = vweird.f32 %v2905
    %vm2912 = vmor %vm2910, %vm2911
    %v2913 = vsel %vm2912, %v2905, %v2909
    %v2914 = vand.u32 2147483647, %v2904
    %vm2915 = vcmp.eq.f32.partialorder %v2914, 8.507059e+37
    %v2916 = vand.u32 %v2904, 2147483648
    %v2917 = vor.u32 1.1754944e-38, %v2916
    %v2918 = vsel %vm2915, %v2917, %v2913
    %v2919 = vmul.f32 1.0, %v2918
    %v2920 = vtanh.pop %v2900
    %v2921 = vmul.f32 %v2919, %v2654
    %2923 = vrot.lane.b32.xlu0 %v2920, 64
    %v2924 = vpop.permute.xlu0 %2923
    %v2926 = vmul.f32 %v2919, %v2924
    %2928 = vrot.lane.b32.xlu0 %v2926, 32
    %v2929 = vpop.permute.xlu0 %2928
    %v2931 = vadd.f32 %v2921, %v2929
    %v2932 = vtanh.pop %v2931
    %2934 = vrot.lane.b32.xlu0 %v2932, 64
    %v2935 = vpop.permute.xlu0 %2934
    %v2937 = vmul.f32 %v2919, %v2935
    %v2938 = vrot.slane %v1275, 6
    %v2940 = vrot.slane %v1552, 4
    %v2942 = vrot.slane %v1829, 2
    %v2944 = vrot.slane %v2383, 6
    %v2946 = vrot.slane %v2660, 4
    %v2949 = vrot.slane %v2937, 2
    %v2951 = vsel %vm683, %v998, %v2938
    %v2952 = vsel %vm798, %v2951, %v2940
    %vm2953 = vcmask 1045504
    %v2954 = vsel %vm2953, %v2952, %v2942
    %v2955 = vsel %vm683, %v2106, %v2944
    %v2956 = vsel %vm798, %v2955, %v2946
    %v2957 = vsel %vm2953, %v2956, %v2949
    %v2958 = vrot.slane %v2106, 4
    %v2960 = vrot.slane %v998, 4
    %v2962 = vsel %vm683, %v2949, %v2660
    %v2963 = vsel %vm798, %v2962, %v2944
    %v2964 = vsel %vm2953, %v2963, %v2958
    %v2965 = vsel %vm683, %v2942, %v1552
    %v2966 = vsel %vm798, %v2965, %v2938
    %v2967 = vsel %vm2953, %v2966, %v2960
    %2970 = vrot.lane.b32.xlu0 %v2954, 32
    %v2971 = vpop.permute.xlu0 %2970
    %2972 = vrot.lane.b32.xlu0 %v2957, 32
    %v2973 = vpop.permute.xlu0 %2972
    %2978 = vrot.lane.b32.xlu0 %v2964, 64
    %v2979 = vpop.permute.xlu0 %2978
    %2980 = vrot.lane.b32.xlu0 %v2967, 64
    %v2981 = vpop.permute.xlu0 %2980
    %v2984 = vsel %vm81, %v2971, %v2979
    %v2985 = vsel %vm81, %v2973, %v2981
    %v2986 = vld [vmem:[%s4] sm:$0xff]
    %v2987 = vld [vmem:[%s4 + $0x8] sm:$0xff]
    %v2988 = vld [vmem:[%s4 + $0x10] sm:$0xff]
    %v2989 = vld [vmem:[%s4 + $0x18] sm:$0xff]
    %v2990 = vld [vmem:[%s4 + $0x20] sm:$0xff]
    %v2991 = vld [vmem:[%s4 + $0x28] sm:$0xff]
    %v2992 = vld [vmem:[%s4 + $0x30] sm:$0xff]
    %v2993 = vld [vmem:[%s4 + $0x38] sm:$0xff]
    %v2994 = vld [vmem:[%s5] sm:$0x1]
    %v2996 = vperm.slane %v2994, 0
    %v2999 = vsel %vm938, %v2984, 0
    %v3002 = vsel %vm938, %v2985, 0
    %3004 = vmatpush.msra.mxu0 0.0
    %3005 = vmatpush.msra.mxu0 0.0
    %3006 = vmatpush.msra.mxu0 0.0
    %3007 = vmatpush.msra.mxu0 0.0
    %3008 = vmatpush.msra.mxu0 0.0
    %3009 = vmatpush.msra.mxu0 0.0
    %3010 = vmatpush.msra.mxu0 0.0
    %3011 = vmatpush.msra.mxu0 0.0
    %3012 = vmatpush.msra.mxu0 %v2993
    %3013 = vmatpush.msra.mxu0 %v2992
    %3014 = vmatpush.msra.mxu0 %v2991
    %3015 = vmatpush.msra.mxu0 %v2990
    %3016 = vmatpush.msra.mxu0 %v2989
    %3017 = vmatpush.msra.mxu0 %v2988
    %3018 = vmatpush.msra.mxu0 %v2987
    %3019 = vmatpush.msra.mxu0 %v2986
    %3020 = vmatmul.f32.gmra.mxu0 %v2999
    %v3021 = vpop.f32.mrf.mxu0
    %v3022 = vadd.f32 %v2996, %v3021
    %3023 = vmatmul.f32.gmra.mxu0 %v3002
    %v3024 = vpop.f32.mrf.mxu0
    %v3025 = vadd.f32 %v2996, %v3024
    %3026 = vdwg.mxu0
    %3027 = vst.msk [vmem:[#allocation3] sm:$0xff] %vm81, %v3022
    %3028 = vst.msk [vmem:[#allocation3 + $0x8] sm:$0xff] %vm81, %v3025
    %v3029 = vadd.f32 %v998, 0.0
    %v3030 = vadd.f32 %v3029, %v1275
    %v3031 = vadd.f32 %v3030, %v1552
    %v3032 = vadd.f32 %v3031, %v1829
    %v3033 = vadd.f32 %v3032, %v2106
    %v3034 = vadd.f32 %v3033, %v2383
    %v3035 = vadd.f32 %v3034, %v2660
    %v3036 = vadd.f32 %v3035, %v2937
    %v3037 = vadd.f32 %v2937, 0.0
    %v3038 = vadd.f32 %v3037, %v2660
    %v3039 = vadd.f32 %v3038, %v2383
    %v3040 = vadd.f32 %v3039, %v2106
    %v3041 = vadd.f32 %v3040, %v1829
    %v3042 = vadd.f32 %v3041, %v1552
    %v3043 = vadd.f32 %v3042, %v1275
    %v3044 = vadd.f32 %v3043, %v998
    %3046 = vrot.lane.b32.xlu0 %v3036, 32
    %v3047 = vpop.permute.xlu0 %3046
    %v3050 = vrot.slane %v3044, 2
    %3051 = vrot.lane.b32.xlu0 %v3050, 64
    %v3052 = vpop.permute.xlu0 %3051
    %v3054 = vsel %vm81, %v3047, %v3052
    %v3055 = vmul.f32 %v3054, 0.125
    %v3056 = vld [vmem:[%s6] sm:$0x1]
    %v3058 = vperm.slane %v3056, 0
    %v3060 = vmul.f32 %v3055, %v3058
    %vm3061 = vcmask 517120
    %v3062 = vsel %vm3061, %v3060, 0.0
    %3063 = vadd.xlane.f32.xlu0 %v3062
    %v3064 = vpop.xlane.xlu0 %3063
    %v3065 = vld [vmem:[#allocation2] sm:$0x1]
    %v3067 = vperm.slane %v3065, 0
    %v3069 = vadd.f32 %v3064, %v3067
    %vm3070 = vcmask 1024
    %3071 = vst.msk [vmem:[%s9] sm:$0x3] %vm3070, %v3069
    // Predicated region
    $region34: #{verification_bilstm_forward.1} parent=1 // pred_check
      _
    $region35: #{verification_bilstm_forward.1} parent=1 // pred_check_branch
      %3073 = sbr.rel (0) target = $region37
    $region36: #{verification_bilstm_forward.1} parent=1 // pred_region
      %3075 = vsyncadd [#allocation4], 0
      %s3076 = sshll.u32 [#allocation3], 4
      %s3077 = int_to_ptr.vmem [resolvable:$true] %s3076
      %s3078 = sshll.u32 %s8, 4
      %s3079 = int_to_ptr.hbm [resolvable:$true] %s3078
      %3084 = dma.vmem_to_hbm [thread:$0]  %s3077, 256, %s3079, [#allocation4], 128, 128, 8
    $region37: #{verification_bilstm_forward.1} parent=1 // pred_fallthru
      _
    // Predicated region
    $region38: #{verification_bilstm_forward.1} parent=1 // pred_check
      _
    $region39: #{verification_bilstm_forward.1} parent=1 // pred_check_branch
      %3086 = sbr.rel (0) target = $region41
    $region40: #{verification_bilstm_forward.1} parent=1 // pred_region
      _
    $region41: #{verification_bilstm_forward.1} parent=1 // pred_fallthru
      _
    // Predicated region
    $region42: #{verification_bilstm_forward.1} parent=1 // pred_check
      _
    $region43: #{verification_bilstm_forward.1} parent=1 // pred_check_branch
      %3088 = sbr.rel (0) target = $region45
    $region44: #{verification_bilstm_forward.1} parent=1 // pred_region
      %3090 = dma.done [#allocation4], 256
    $region45: #{verification_bilstm_forward.1} parent=1 // pred_fallthru
      _
    // Predicated region
    $region46: #{verification_bilstm_forward.1} parent=1 // pred_check
      _
    $region47: #{verification_bilstm_forward.1} parent=1 // pred_check_branch
      %3092 = sbr.rel (0) target = $region49
    $region48: #{verification_bilstm_forward.1} parent=1 // pred_region
      _
    $region49: #{verification_bilstm_forward.1} parent=1 // pred_fallthru
      _
    %3093 = vsyncpa [#allocation4], 1

</llo_original>
